<compile_context>
chip_gen: v7x
topology: tpu7x:2x2x1
jax: 0.10.0
libtpu: 0.0.40
codegen_flags: <defaults>
</compile_context>

<pallas_src>
import functools

import jax
import jax.numpy as jnp
from jax.experimental import pallas as pl
from jax.experimental.pallas import tpu as pltpu

_MXU_DTYPE = jnp.bfloat16          # MXU input dtype; accumulation is always f32.
_ROW_TILE_ELTWISE = 1024           # memory-bound elementwise / stats kernels
_ROW_TILE_MATMUL = 512             # plain linear layers
_ECC_POINT_TILE = 256              # point rows per ECC tile (dense pool is tn x tn*k)
_ECC_EDGE_BUDGET = 2048            # cap on edge rows per ECC tile
_BN_EPS = 1e-5


def _round_up(n, m):
    return ((n + m - 1) // m) * m


def _pad_rows(x, rows):
    if x.shape[0] == rows:
        return x
    pad = [(0, rows - x.shape[0])] + [(0, 0)] * (x.ndim - 1)
    return jnp.pad(x, pad)


_VMEM_LIMIT_CACHE = None


def _vmem_limit_bytes():
    """Generation-aware scoped-VMEM limit (48 MiB on 64 MiB v7x, 96 MiB on 128 MiB parts)."""
    global _VMEM_LIMIT_CACHE
    if _VMEM_LIMIT_CACHE is None:
        cap = None
        try:
            info = pltpu.get_tpu_info()
            cap = getattr(info, "vmem_capacity_bytes", None)
        except Exception:
            cap = None
        if cap is None:
            cap = 64 * 1024 * 1024                     # conservative: v7x-sized VMEM
        _VMEM_LIMIT_CACHE = int(min(96 * 1024 * 1024,
                                    max(32 * 1024 * 1024, (cap * 3) // 4)))
    return _VMEM_LIMIT_CACHE


def _params(semantics):
    return pltpu.CompilerParams(dimension_semantics=semantics,
                                vmem_limit_bytes=_vmem_limit_bytes())


# -------------------- in-kernel masked per-tile BN statistics -----------------------

def _tile_stats(y, n_true, tn):
    """Masked per-tile [sum; sumsq; 0...] block (8, C) so the out block is (8,128)-legal."""
    base = pl.program_id(0) * tn
    rows = jax.lax.broadcasted_iota(jnp.int32, (tn, 1), 0) + base
    mask = rows < n_true                              # mask padded rows out of the stats
    ym = jnp.where(mask, y, 0.0)
    s = jnp.sum(ym, axis=0, keepdims=True)
    sq = jnp.sum(ym * ym, axis=0, keepdims=True)
    pad = jnp.zeros((6, y.shape[1]), jnp.float32)
    return jnp.concatenate([s, sq, pad], axis=0)


def _finish_stats(stat_out, c):
    st = stat_out.reshape(-1, 8, c)
    s = jnp.sum(st[:, 0, :], axis=0, keepdims=True)
    sq = jnp.sum(st[:, 1, :], axis=0, keepdims=True)
    return s, sq


# ------------------------ Linear (+ fused BN-in / ReLU / stats) ----------------------

def _linear_kernel(x_ref, w_ref, b_ref, sc_ref, sh_ref, o_ref, *stat_refs,
                   in_relu, out_relu, want_stats, n_true, tn):
    x = x_ref[...] * sc_ref[...] + sh_ref[...]        # consumer-fused BN scale/shift (f32)
    if in_relu:
        x = jnp.maximum(x, 0.0)
    y = jnp.dot(x.astype(_MXU_DTYPE), w_ref[...],
                preferred_element_type=jnp.float32) + b_ref[...]
    if out_relu:
        y = jnp.maximum(y, 0.0)
    o_ref[...] = y
    if want_stats:
        stat_refs[0][...] = _tile_stats(y, n_true, tn)


def linear(x, w_bf16, b, in_scale=None, in_shift=None, in_relu=False, out_relu=False,
           want_stats=False, block_rows=_ROW_TILE_MATMUL):
    n, cin = x.shape
    cout = w_bf16.shape[1]
    tn = min(block_rows, _round_up(n, 16))
    n_pad = _round_up(n, tn)
    xp = _pad_rows(x, n_pad)
    if in_scale is None:
        in_scale = jnp.ones((1, cin), jnp.float32)
    if in_shift is None:
        in_shift = jnp.zeros((1, cin), jnp.float32)
    num_tiles = n_pad // tn

    out_shape = [jax.ShapeDtypeStruct((n_pad, cout), jnp.float32)]
    out_specs = [pl.BlockSpec((tn, cout), lambda i: (i, 0))]
    if want_stats:
        out_shape.append(jax.ShapeDtypeStruct((num_tiles * 8, cout), jnp.float32))
        out_specs.append(pl.BlockSpec((8, cout), lambda i: (i, 0)))

    res = pl.pallas_call(
        functools.partial(_linear_kernel, in_relu=in_relu, out_relu=out_relu,
                          want_stats=want_stats, n_true=n, tn=tn),
        grid=(num_tiles,),
        in_specs=[pl.BlockSpec((tn, cin), lambda i: (i, 0)),
                  pl.BlockSpec(w_bf16.shape, lambda i: (0, 0)),   # VMEM-resident weights
                  pl.BlockSpec(b.shape, lambda i: (0, 0)),
                  pl.BlockSpec((1, cin), lambda i: (0, 0)),
                  pl.BlockSpec((1, cin), lambda i: (0, 0))],
        out_specs=out_specs,
        out_shape=out_shape,
        compiler_params=_params(("parallel",)),
    )(xp, w_bf16, b, in_scale, in_shift)

    y = res[0]
    y = y if n_pad == n else y[:n]
    if want_stats:
        s, sq = _finish_stats(res[1], cout)
        return y, (s, sq, n)
    return y, None


# ---------------- Standalone fallbacks (only for configs without a producer) ---------

def _bn_stats_kernel(x_ref, st_ref, *, n_true, tn):
    st_ref[...] = _tile_stats(x_ref[...], n_true, tn)


def bn_stats(x, block_rows=_ROW_TILE_ELTWISE):
    """Per-tile partial sums with a parallel grid axis; tiny reduction finished in XLA."""
    n, c = x.shape
    tn = min(block_rows, _round_up(n, 16))
    n_pad = _round_up(n, tn)
    xp = _pad_rows(x, n_pad)
    num_tiles = n_pad // tn
    st = pl.pallas_call(
        functools.partial(_bn_stats_kernel, n_true=n, tn=tn),
        grid=(num_tiles,),
        in_specs=[pl.BlockSpec((tn, c), lambda i: (i, 0))],
        out_specs=pl.BlockSpec((8, c), lambda i: (i, 0)),
        out_shape=jax.ShapeDtypeStruct((num_tiles * 8, c), jnp.float32),
        compiler_params=_params(("parallel",)),
    )(xp)
    s, sq = _finish_stats(st, c)
    return s, sq, n


def _scale_shift_kernel(x_ref, sc_ref, sh_ref, o_ref, *, relu):
    y = x_ref[...] * sc_ref[...] + sh_ref[...]
    if relu:
        y = jnp.maximum(y, 0.0)
    o_ref[...] = y


def _scale_shift(x, scale, shift, relu, block_rows=_ROW_TILE_ELTWISE):
    n, c = x.shape
    if (n * c) % 128 == 0 and 128 % c == 0:
        # Lane-dense path: (n*c/128, 128) view -> every store is a full unmasked vst.
        rep = 128 // c
        xr = x.reshape(n * c // 128, 128)
        scr = jnp.tile(scale, (1, rep))
        shr = jnp.tile(shift, (1, rep))
    else:
        xr, scr, shr = x, scale, shift
    rows, cols = xr.shape
    tr = min(block_rows, _round_up(rows, 16))
    rows_pad = _round_up(rows, tr)
    xp = _pad_rows(xr, rows_pad)
    out = pl.pallas_call(
        functools.partial(_scale_shift_kernel, relu=relu),
        grid=(rows_pad // tr,),
        in_specs=[pl.BlockSpec((tr, cols), lambda i: (i, 0)),
                  pl.BlockSpec((1, cols), lambda i: (0, 0)),
                  pl.BlockSpec((1, cols), lambda i: (0, 0))],
        out_specs=pl.BlockSpec((tr, cols), lambda i: (i, 0)),
        out_shape=jax.ShapeDtypeStruct((rows_pad, cols), jnp.float32),
        compiler_params=_params(("parallel",)),
    )(xp, scr, shr)
    out = out if rows_pad == rows else out[:rows]
    return out.reshape(n, c)


def _apply_transform(x, pending):
    c = x.shape[1]
    scale = pending['scale'] if pending['scale'] is not None else jnp.ones((1, c), jnp.float32)
    shift = pending['shift'] if pending['shift'] is not None else jnp.zeros((1, c), jnp.float32)
    return _scale_shift(x, scale, shift, relu=pending['relu'])


# --------------------------- Fused ECC graph convolution ----------------------------

def _ecc_conv_kernel(ef_ref, xn_ref, pool_ref, sc_ref, sh_ref, *refs,
                     num_hidden, cin, cout, in_relu, out_relu, want_stats, n_true, tn):
    hidden_refs = refs[:2 * num_hidden]
    wbig_ref = refs[2 * num_hidden]                   # (cin*h_last + cin, cout), bf16, /k folded
    o_ref = refs[2 * num_hidden + 1]
    stat_refs = refs[2 * num_hidden + 2:]

    # fnet hidden MLP on this tile's edge rows (bf16 MXU, f32 accumulation + bias + ReLU).
    h = ef_ref[...]                                   # bf16
    for l in range(num_hidden):
        w = hidden_refs[2 * l][...]                   # bf16
        b = hidden_refs[2 * l + 1][...]               # f32
        h = jnp.dot(h, w, preferred_element_type=jnp.float32) + b
        h = jnp.maximum(h, 0.0)
        if l + 1 < num_hidden:
            h = h.astype(_MXU_DTYPE)
    # h: (tk, h_last) f32

    # Consumer-fused BN scale/shift (+ReLU) on the gathered neighbor features (f32 VPU).
    xn = xn_ref[...].astype(jnp.float32) * sc_ref[...] + sh_ref[...]
    if in_relu:
        xn = jnp.maximum(xn, 0.0)

    # Edge-conditioned filtering as ONE MXU dot: Z = [x0*h | ... | x_{cin-1}*h | xn],
    # W_big = [W_0; ...; W_{cin-1}; b_rows] (pre-divided by K on the host).
    pieces = [xn[:, c:c + 1] * h for c in range(cin)]
    z = jnp.concatenate(pieces + [xn], axis=1).astype(_MXU_DTYPE)   # (tk, cin*h_last + cin)
    edge = jnp.dot(z, wbig_ref[...], preferred_element_type=jnp.float32)   # (tk, cout)

    # Neighbor mean: binary 0/1 pool (bf16, exact) x bf16 edge values, f32 accumulation.
    y = jnp.dot(pool_ref[...], edge.astype(_MXU_DTYPE),
                preferred_element_type=jnp.float32)                 # (tn, cout)
    if out_relu:
        y = jnp.maximum(y, 0.0)
    o_ref[...] = y
    if want_stats:
        stat_refs[0][...] = _tile_stats(y, n_true, tn)


def ecc_conv(x, nbr_idx, edge_feats, fnet_hidden, w_big, cin, cout,
             in_scale=None, in_shift=None, in_relu=False, out_relu=False,
             want_stats=False, block_points=_ECC_POINT_TILE):
    n, k, f = edge_feats.shape
    tn = min(block_points, _round_up(n, 16))
    edge_cap = max(16, (_ECC_EDGE_BUDGET // k) // 16 * 16)
    tn = max(16, min(tn, edge_cap))
    n_pad = _round_up(n, tn)
    tk = tn * k

    # XLA glue: neighbor gather + row padding (bf16 stream halves the duplicated bytes).
    # TODO(synk): scalar-prefetch nbr_idx + in-kernel DMA gather to remove this HBM round trip.
    idx = _pad_rows(nbr_idx, n_pad)
    ef = _pad_rows(edge_feats, n_pad).reshape(n_pad * k, f).astype(_MXU_DTYPE)
    xn = x.astype(_MXU_DTYPE)[idx.reshape(-1)]                       # (n_pad*k, cin)

    # Binary edge->point pooling matrix (1/k already folded into w_big), VMEM-resident.
    pool01 = (jnp.arange(tk, dtype=jnp.int32)[None, :] // k ==
              jnp.arange(tn, dtype=jnp.int32)[:, None]).astype(_MXU_DTYPE)
    wbig_bf16 = (w_big / k).astype(_MXU_DTYPE)

    if in_scale is None:
        in_scale = jnp.ones((1, cin), jnp.float32)
    if in_shift is None:
        in_shift = jnp.zeros((1, cin), jnp.float32)

    num_hidden = len(fnet_hidden)
    weight_inputs, weight_specs = [], []
    for (w, b) in fnet_hidden:
        weight_inputs += [w, b]
        weight_specs += [pl.BlockSpec(w.shape, lambda i: (0, 0)),
                         pl.BlockSpec(b.shape, lambda i: (0, 0))]
    weight_inputs.append(wbig_bf16)
    weight_specs.append(pl.BlockSpec(wbig_bf16.shape, lambda i: (0, 0)))

    num_tiles = n_pad // tn
    out_shape = [jax.ShapeDtypeStruct((n_pad, cout), jnp.float32)]
    out_specs = [pl.BlockSpec((tn, cout), lambda i: (i, 0))]
    if want_stats:
        out_shape.append(jax.ShapeDtypeStruct((num_tiles * 8, cout), jnp.float32))
        out_specs.append(pl.BlockSpec((8, cout), lambda i: (i, 0)))

    res = pl.pallas_call(
        functools.partial(_ecc_conv_kernel, num_hidden=num_hidden, cin=cin, cout=cout,
                          in_relu=in_relu, out_relu=out_relu, want_stats=want_stats,
                          n_true=n, tn=tn),
        grid=(num_tiles,),
        in_specs=[pl.BlockSpec((tk, f), lambda i: (i, 0)),
                  pl.BlockSpec((tk, cin), lambda i: (i, 0)),
                  pl.BlockSpec((tn, tk), lambda i: (0, 0)),
                  pl.BlockSpec((1, cin), lambda i: (0, 0)),
                  pl.BlockSpec((1, cin), lambda i: (0, 0))] + weight_specs,
        out_specs=out_specs,
        out_shape=out_shape,
        compiler_params=_params(("parallel",)),
    )(ef, xn, pool01, in_scale, in_shift, *weight_inputs)

    y = res[0]
    y = y if n_pad == n else y[:n]
    if want_stats:
        s, sq = _finish_stats(res[1], cout)
        return y, (s, sq, n)
    return y, None


# --------------------------------- Network glue -------------------------------------

def _init_linear(key, cin, cout, bias=True):
    kw, kb = jax.random.split(key)
    scale = 1.0 / jnp.sqrt(jnp.float32(cin))
    w = jax.random.uniform(kw, (cin, cout), jnp.float32, -scale, scale)
    if bias:
        b = jax.random.uniform(kb, (1, cout), jnp.float32, -scale, scale)
    else:
        b = jnp.zeros((1, cout), jnp.float32)
    return w, b


class CloudNetworkPallas:
    """Pallas re-implementation of CloudNetwork's forward pass (training-mode BN stats,
    eval-mode dropout).  BN / ReLU are fused into the producing / consuming kernels."""

    def __init__(self, config, nfeat, fnet_widths, key, fnet_llbias=True):
        # TODO(synk): fnet_orthoinit (orthogonal init) not reproduced; PyTorch-default
        #             uniform fan-in init is used for every Linear.
        self.layers = []
        self.pyramid_conf = []
        keys = iter(jax.random.split(key, 256))

        for tok in config.split(','):
            conf = tok.strip().split('_')
            if conf[0] == 'f':
                cout = int(conf[1])
                w, b = _init_linear(next(keys), nfeat, cout)
                self.layers.append(('f', (w.astype(_MXU_DTYPE), b)))
                nfeat = cout
            elif conf[0] == 'b':
                gamma = jnp.ones((1, nfeat), jnp.float32)
                beta = jnp.zeros((1, nfeat), jnp.float32)
                self.layers.append(('b', (gamma, beta)))
            elif conf[0] == 'r':
                self.layers.append(('r', None))
            elif conf[0] == 'd':
                self.layers.append(('d', float(conf[1])))
            elif conf[0] == 'i':
                res, rad = float(conf[1]), float(conf[2])
                assert len(self.pyramid_conf) == 0 or self.pyramid_conf[-1][0] == res
                self.pyramid_conf.append((res, rad))
            elif conf[0] == 'c':
                cout = int(conf[1])
                assert len(self.pyramid_conf) > 0, 'Convolution needs defined graph'
                hidden = []
                for kk in range(len(fnet_widths) - 1):
                    w, b = _init_linear(next(keys), fnet_widths[kk], fnet_widths[kk + 1])
                    hidden.append((w.astype(_MXU_DTYPE), b))
                w_last, b_last = _init_linear(next(keys), fnet_widths[-1], nfeat * cout,
                                              bias=fnet_llbias)
                hl = fnet_widths[-1]
                # W_big rows: [W_0; ...; W_{cin-1}; b_rows]  (W_c maps h -> theta[c, :]).
                w_main = w_last.reshape(hl, nfeat, cout).transpose(1, 0, 2).reshape(nfeat * hl, cout)
                b_rows = b_last.reshape(nfeat, cout)
                w_big = jnp.concatenate([w_main, b_rows], axis=0)     # f32; /k + bf16 at call
                self.layers.append(('c', {'hidden': hidden, 'w_big': w_big,
                                          'cin': nfeat, 'cout': cout, 'graph': None}))
                nfeat = cout
            elif conf[0] in ('m', 'a'):
                # TODO(synk): ecc.GraphMax/AvgPoolModule needs graph-coarsening maps from the
                #             ecc package; no standalone Pallas equivalent implemented here.
                raise NotImplementedError('Graph pooling not implemented')
            else:
                raise NotImplementedError('Unknown module: ' + conf[0])
        self.nfeat_out = nfeat

    def set_info(self, gc_infos):
        """gc_infos: list of (nbr_idx [N,K] int32, edge_feats [N,K,F]) per 'c' layer."""
        i = 0
        for kind, p in self.layers:
            if kind == 'c':
                p['graph'] = gc_infos[i]
                i += 1

    def __call__(self, x):
        layers = self.layers
        nl = len(layers)
        pending = None   # scale/shift/relu deferred to the next compute kernel's input
        stats = None     # (sum, sumsq, count) of the current activation, if available
        i = 0

        def peek(j):
            while j < nl and layers[j][0] == 'd':
                j += 1
            return j

        while i < nl:
            kind, p = layers[i]
            if kind == 'd':
                # TODO(synk): train-mode nn.Dropout (PyTorch RNG) not reproducible;
                #             applied as eval-mode identity.
                i += 1
                continue
            if kind == 'r':
                if pending is None:
                    pending = {'scale': None, 'shift': None, 'relu': True}
                else:
                    pending['relu'] = True
                stats = None
                i += 1
                continue
            if kind == 'b':
                gamma, beta = p
                if pending is not None:                      # fallback: materialize first
                    x = _apply_transform(x, pending)
                    pending, stats = None, None
                if stats is None:                            # fallback: standalone stats
                    stats = bn_stats(x)
                s, sq, cnt = stats
                mean = s / cnt
                # NOTE: biased variance via E[x^2]-E[x]^2 in f32 (training-mode BN).
                var = sq / cnt - mean * mean
                scale = gamma * jax.lax.rsqrt(var + _BN_EPS)
                shift = beta - mean * scale
                pending = {'scale': scale, 'shift': shift, 'relu': False}
                stats = None
                i += 1
                continue

            # Compute layer ('f' / 'c'): fuse pending input transform; lookahead for an
            # output ReLU and a following BatchNorm (emit stats from the producer).
            j = peek(i + 1)
            out_relu = False
            last_consumed = None
            if j < nl and layers[j][0] == 'r':
                out_relu = True
                last_consumed = j
                j = peek(j + 1)
            want_stats = j < nl and layers[j][0] == 'b'

            in_scale = pending['scale'] if pending else None
            in_shift = pending['shift'] if pending else None
            in_relu = pending['relu'] if pending else False
            if kind == 'f':
                w, b = p
                x, stats = linear(x, w, b, in_scale=in_scale, in_shift=in_shift,
                                  in_relu=in_relu, out_relu=out_relu, want_stats=want_stats)
            else:
                nbr_idx, edge_feats = p['graph']
                x, stats = ecc_conv(x, nbr_idx, edge_feats, p['hidden'], p['w_big'],
                                    p['cin'], p['cout'], in_scale=in_scale,
                                    in_shift=in_shift, in_relu=in_relu,
                                    out_relu=out_relu, want_stats=want_stats)
            pending = None
            i = (last_consumed + 1) if last_consumed is not None else (i + 1)

        if pending is not None:
            x = _apply_transform(x, pending)
        return x


# ------------------------------ pure-JAX reference -----------------------------------

def _reference_forward(net, x):
    """f32 reference of the same forward semantics (BN batch stats, dropout identity)."""
    h = x
    for kind, p in net.layers:
        if kind == 'f':
            w, b = p
            h = h @ w.astype(jnp.float32) + b
        elif kind == 'b':
            gamma, beta = p
            mean = jnp.mean(h, axis=0, keepdims=True)
            var = jnp.mean((h - mean) ** 2, axis=0, keepdims=True)
            h = gamma * (h - mean) / jnp.sqrt(var + _BN_EPS) + beta
        elif kind == 'r':
            h = jnp.maximum(h, 0.0)
        elif kind == 'd':
            pass
        elif kind == 'c':
            nbr, ef = p['graph']
            cin, cout = p['cin'], p['cout']
            n, k, f = ef.shape
            e = ef.reshape(n * k, f)
            for (w, b) in p['hidden']:
                e = jnp.maximum(e @ w.astype(jnp.float32) + b, 0.0)
            hl = e.shape[1]
            w_big = p['w_big']
            theta_w = w_big[:cin * hl].reshape(cin, hl, cout)
            theta_b = w_big[cin * hl:]
            xn = h[nbr.reshape(-1)]
            out_e = jnp.zeros((n * k, cout), jnp.float32)
            for c in range(cin):
                out_e = out_e + xn[:, c:c + 1] * (e @ theta_w[c] + theta_b[c])
            h = out_e.reshape(n, k, cout).mean(axis=1)
    return h


# ---------------------------------- main ---------------------------------------------

if __name__ == "__main__":
    key = jax.random.PRNGKey(0)
    k_param, k_x, k_e1, k_e2, k_n1, k_n2, k_z = jax.random.split(key, 7)

    N, K = 64, 4                 # points, neighbors per point
    NFEAT_IN = 8                 # input point feature channels
    FNET_WIDTHS = [6, 16, 32]    # edge-attr dim followed by fnet hidden widths
    CONFIG = "i_0.05_0.1, c_16, b, r, c_16, b, r, d_0.3, f_10"

    net = CloudNetworkPallas(CONFIG, NFEAT_IN, FNET_WIDTHS, k_param, fnet_llbias=True)

    x = jax.random.normal(k_x, (N, NFEAT_IN), jnp.float32)
    graph1 = (jax.random.randint(k_n1, (N, K), 0, N, dtype=jnp.int32),
              jax.random.normal(k_e1, (N, K, FNET_WIDTHS[0]), jnp.float32))
    graph2 = (jax.random.randint(k_n2, (N, K), 0, N, dtype=jnp.int32),
              jax.random.normal(k_e2, (N, K, FNET_WIDTHS[0]), jnp.float32))
    net.set_info([graph1, graph2])

    out = jax.block_until_ready(net(x))
    assert out.shape == (N, 10) and out.dtype == jnp.float32

    # Correctness vs. pure-JAX f32 reference (bf16-MXU level tolerance).
    ref = _reference_forward(net, x)
    err = float(jnp.max(jnp.abs(out - ref)))
    assert err < 1e-1, f"max abs error vs reference: {err}"

    # Exercise the standalone fallback kernels (not hit by this config) once.
    z = jax.random.normal(k_z, (70, 16), jnp.float32)
    s, sq, cnt = bn_stats(z)
    assert cnt == 70
    assert float(jnp.max(jnp.abs(s - jnp.sum(z, axis=0, keepdims=True)))) < 1e-3
    y = _scale_shift(z, 2.0 * jnp.ones((1, 16), jnp.float32),
                     jnp.ones((1, 16), jnp.float32), relu=True)
    assert float(jnp.max(jnp.abs(y - jnp.maximum(2.0 * z + 1.0, 0.0)))) < 1e-5
    jax.block_until_ready(y)

    print("KERNEL_OK")
</pallas_src>

<mosaic_0001>
module attributes {stable_mosaic.version = 11 : i64} {
  func.func @_ecc_conv_kernel(%arg0: i32, %arg1: memref<256x6xbf16, #tpu.memory_space<vmem>>, %arg2: memref<256x8xbf16, #tpu.memory_space<vmem>>, %arg3: memref<64x256xbf16, #tpu.memory_space<vmem>>, %arg4: memref<1x8xf32, #tpu.memory_space<vmem>>, %arg5: memref<1x8xf32, #tpu.memory_space<vmem>>, %arg6: memref<6x16xbf16, #tpu.memory_space<vmem>>, %arg7: memref<1x16xf32, #tpu.memory_space<vmem>>, %arg8: memref<16x32xbf16, #tpu.memory_space<vmem>>, %arg9: memref<1x32xf32, #tpu.memory_space<vmem>>, %arg10: memref<264x16xbf16, #tpu.memory_space<vmem>>, %arg11: memref<64x16xf32, #tpu.memory_space<vmem>>, %arg12: memref<8x16xf32, #tpu.memory_space<vmem>>) attributes {dimension_semantics = [#tpu.dimension_semantics<parallel>], iteration_bounds = array<i64: 1>, scalar_prefetch = 0 : i64, scratch_operands = 0 : i64, tpu.core_type = #tpu.core_type<tc>, window_params = [{transform_indices = @transform_0, window_bounds = array<i64: 256, 6>}, {transform_indices = @transform_1, window_bounds = array<i64: 256, 8>}, {pipeline_mode = #tpu.pipeline_mode<synchronous>, transform_indices = @transform_2, window_bounds = array<i64: 64, 256>}, {pipeline_mode = #tpu.pipeline_mode<synchronous>, transform_indices = @transform_3, window_bounds = array<i64: 1, 8>}, {pipeline_mode = #tpu.pipeline_mode<synchronous>, transform_indices = @transform_4, window_bounds = array<i64: 1, 8>}, {pipeline_mode = #tpu.pipeline_mode<synchronous>, transform_indices = @transform_5, window_bounds = array<i64: 6, 16>}, {pipeline_mode = #tpu.pipeline_mode<synchronous>, transform_indices = @transform_6, window_bounds = array<i64: 1, 16>}, {pipeline_mode = #tpu.pipeline_mode<synchronous>, transform_indices = @transform_7, window_bounds = array<i64: 16, 32>}, {pipeline_mode = #tpu.pipeline_mode<synchronous>, transform_indices = @transform_8, window_bounds = array<i64: 1, 32>}, {pipeline_mode = #tpu.pipeline_mode<synchronous>, transform_indices = @transform_9, window_bounds = array<i64: 264, 16>}, {transform_indices = @transform_10, window_bounds = array<i64: 64, 16>}, {transform_indices = @transform_11, window_bounds = array<i64: 8, 16>}]} {
    %c0 = arith.constant 0 : index
    %c0_0 = arith.constant 0 : index
    %0 = vector.load %arg1[%c0, %c0_0] : memref<256x6xbf16, #tpu.memory_space<vmem>>, vector<256x6xbf16>
    %c0_1 = arith.constant 0 : index
    %c0_2 = arith.constant 0 : index
    %1 = vector.load %arg6[%c0_1, %c0_2] : memref<6x16xbf16, #tpu.memory_space<vmem>>, vector<6x16xbf16>
    %c0_3 = arith.constant 0 : index
    %c0_4 = arith.constant 0 : index
    %2 = vector.load %arg7[%c0_3, %c0_4] : memref<1x16xf32, #tpu.memory_space<vmem>>, vector<1x16xf32>
    %cst = arith.constant dense<0.000000e+00> : vector<256x16xf32>
    %3 = tpu.matmul %0, %1, %cst {dimension_numbers = #tpu.dot_dimension_numbers<[1], [0], [0], [1], [0, 0, 1, 1], [], []>} : vector<256x6xbf16>, vector<6x16xbf16>, vector<256x16xf32> -> vector<256x16xf32>
    %4 = vector.broadcast %2 : vector<1x16xf32> to vector<256x16xf32>
    %5 = arith.addf %3, %4 : vector<256x16xf32>
    %cst_5 = arith.constant 0.000000e+00 : f32
    %6 = vector.broadcast %cst_5 : f32 to vector<256x16xf32>
    %7 = arith.maximumf %5, %6 : vector<256x16xf32>
    %8 = arith.truncf %7 : vector<256x16xf32> to vector<256x16xbf16>
    %c0_6 = arith.constant 0 : index
    %c0_7 = arith.constant 0 : index
    %9 = vector.load %arg8[%c0_6, %c0_7] : memref<16x32xbf16, #tpu.memory_space<vmem>>, vector<16x32xbf16>
    %c0_8 = arith.constant 0 : index
    %c0_9 = arith.constant 0 : index
    %10 = vector.load %arg9[%c0_8, %c0_9] : memref<1x32xf32, #tpu.memory_space<vmem>>, vector<1x32xf32>
    %cst_10 = arith.constant dense<0.000000e+00> : vector<256x32xf32>
    %11 = tpu.matmul %8, %9, %cst_10 {dimension_numbers = #tpu.dot_dimension_numbers<[1], [0], [0], [1], [0, 0, 1, 1], [], []>} : vector<256x16xbf16>, vector<16x32xbf16>, vector<256x32xf32> -> vector<256x32xf32>
    %12 = vector.broadcast %10 : vector<1x32xf32> to vector<256x32xf32>
    %13 = arith.addf %11, %12 : vector<256x32xf32>
    %cst_11 = arith.constant 0.000000e+00 : f32
    %14 = vector.broadcast %cst_11 : f32 to vector<256x32xf32>
    %15 = arith.maximumf %13, %14 : vector<256x32xf32>
    %c0_12 = arith.constant 0 : index
    %c0_13 = arith.constant 0 : index
    %16 = vector.load %arg2[%c0_12, %c0_13] : memref<256x8xbf16, #tpu.memory_space<vmem>>, vector<256x8xbf16>
    %17 = arith.extf %16 : vector<256x8xbf16> to vector<256x8xf32>
    %c0_14 = arith.constant 0 : index
    %c0_15 = arith.constant 0 : index
    %18 = vector.load %arg4[%c0_14, %c0_15] : memref<1x8xf32, #tpu.memory_space<vmem>>, vector<1x8xf32>
    %19 = vector.broadcast %18 : vector<1x8xf32> to vector<256x8xf32>
    %20 = arith.mulf %17, %19 : vector<256x8xf32>
    %c0_16 = arith.constant 0 : index
    %c0_17 = arith.constant 0 : index
    %21 = vector.load %arg5[%c0_16, %c0_17] : memref<1x8xf32, #tpu.memory_space<vmem>>, vector<1x8xf32>
    %22 = vector.broadcast %21 : vector<1x8xf32> to vector<256x8xf32>
    %23 = arith.addf %20, %22 : vector<256x8xf32>
    %24 = vector.extract_strided_slice %23 {offsets = [0, 0], sizes = [256, 1], strides = [1, 1]} : vector<256x8xf32> to vector<256x1xf32>
    %25 = vector.broadcast %24 : vector<256x1xf32> to vector<256x32xf32>
    %26 = arith.mulf %25, %15 : vector<256x32xf32>
    %27 = vector.extract_strided_slice %23 {offsets = [0, 1], sizes = [256, 1], strides = [1, 1]} : vector<256x8xf32> to vector<256x1xf32>
    %28 = vector.broadcast %27 : vector<256x1xf32> to vector<256x32xf32>
    %29 = arith.mulf %28, %15 : vector<256x32xf32>
    %30 = vector.extract_strided_slice %23 {offsets = [0, 2], sizes = [256, 1], strides = [1, 1]} : vector<256x8xf32> to vector<256x1xf32>
    %31 = vector.broadcast %30 : vector<256x1xf32> to vector<256x32xf32>
    %32 = arith.mulf %31, %15 : vector<256x32xf32>
    %33 = vector.extract_strided_slice %23 {offsets = [0, 3], sizes = [256, 1], strides = [1, 1]} : vector<256x8xf32> to vector<256x1xf32>
    %34 = vector.broadcast %33 : vector<256x1xf32> to vector<256x32xf32>
    %35 = arith.mulf %34, %15 : vector<256x32xf32>
    %36 = vector.extract_strided_slice %23 {offsets = [0, 4], sizes = [256, 1], strides = [1, 1]} : vector<256x8xf32> to vector<256x1xf32>
    %37 = vector.broadcast %36 : vector<256x1xf32> to vector<256x32xf32>
    %38 = arith.mulf %37, %15 : vector<256x32xf32>
    %39 = vector.extract_strided_slice %23 {offsets = [0, 5], sizes = [256, 1], strides = [1, 1]} : vector<256x8xf32> to vector<256x1xf32>
    %40 = vector.broadcast %39 : vector<256x1xf32> to vector<256x32xf32>
    %41 = arith.mulf %40, %15 : vector<256x32xf32>
    %42 = vector.extract_strided_slice %23 {offsets = [0, 6], sizes = [256, 1], strides = [1, 1]} : vector<256x8xf32> to vector<256x1xf32>
    %43 = vector.broadcast %42 : vector<256x1xf32> to vector<256x32xf32>
    %44 = arith.mulf %43, %15 : vector<256x32xf32>
    %45 = vector.extract_strided_slice %23 {offsets = [0, 7], sizes = [256, 1], strides = [1, 1]} : vector<256x8xf32> to vector<256x1xf32>
    %46 = vector.broadcast %45 : vector<256x1xf32> to vector<256x32xf32>
    %47 = arith.mulf %46, %15 : vector<256x32xf32>
    %48 = tpu.concatenate %26, %29, %32, %35, %38, %41, %44, %47, %23 in 1 : vector<256x32xf32>, vector<256x32xf32>, vector<256x32xf32>, vector<256x32xf32>, vector<256x32xf32>, vector<256x32xf32>, vector<256x32xf32>, vector<256x32xf32>, vector<256x8xf32> -> vector<256x264xf32>
    %49 = arith.truncf %48 : vector<256x264xf32> to vector<256x264xbf16>
    %c0_18 = arith.constant 0 : index
    %c0_19 = arith.constant 0 : index
    %50 = vector.load %arg10[%c0_18, %c0_19] : memref<264x16xbf16, #tpu.memory_space<vmem>>, vector<264x16xbf16>
    %cst_20 = arith.constant dense<0.000000e+00> : vector<256x16xf32>
    %51 = tpu.matmul %49, %50, %cst_20 {dimension_numbers = #tpu.dot_dimension_numbers<[1], [0], [0], [1], [0, 0, 1, 1], [], []>} : vector<256x264xbf16>, vector<264x16xbf16>, vector<256x16xf32> -> vector<256x16xf32>
    %c0_21 = arith.constant 0 : index
    %c0_22 = arith.constant 0 : index
    %52 = vector.load %arg3[%c0_21, %c0_22] : memref<64x256xbf16, #tpu.memory_space<vmem>>, vector<64x256xbf16>
    %53 = arith.truncf %51 : vector<256x16xf32> to vector<256x16xbf16>
    %cst_23 = arith.constant dense<0.000000e+00> : vector<64x16xf32>
    %54 = tpu.matmul %52, %53, %cst_23 {dimension_numbers = #tpu.dot_dimension_numbers<[1], [0], [0], [1], [0, 0, 1, 1], [], []>} : vector<64x256xbf16>, vector<256x16xbf16>, vector<64x16xf32> -> vector<64x16xf32>
    %c0_24 = arith.constant 0 : index
    %c0_25 = arith.constant 0 : index
    %55 = vector.load %arg11[%c0_24, %c0_25] : memref<64x16xf32, #tpu.memory_space<vmem>>, vector<64x16xf32>
    tpu.vector_store %arg11[%c0_24, %c0_25], %54 {strides = array<i32>} : memref<64x16xf32, #tpu.memory_space<vmem>>, vector<64x16xf32>,
    %c64_i32 = arith.constant 64 : i32
    %56 = arith.muli %arg0, %c64_i32 : i32
    %57 = tpu.iota {dimensions = array<i32: 0>} : vector<64x1xi32>
    %58 = vector.broadcast %56 : i32 to vector<64x1xi32>
    %59 = arith.addi %57, %58 : vector<64x1xi32>
    %c64_i32_26 = arith.constant 64 : i32
    %60 = vector.broadcast %c64_i32_26 : i32 to vector<64x1xi32>
    %61 = arith.cmpi slt, %59, %60 : vector<64x1xi32>
    %cst_27 = arith.constant 0.000000e+00 : f32
    %62 = vector.shape_cast %61 : vector<64x1xi1> to vector<64x1xi1>
    %63 = vector.broadcast %62 : vector<64x1xi1> to vector<64x16xi1>
    %64 = vector.broadcast %cst_27 : f32 to vector<64x16xf32>
    %65 = arith.select %63, %54, %64 : vector<64x16xi1>, vector<64x16xf32>
    %cst_28 = arith.constant dense<0.000000e+00> : vector<16xf32>
    %66 = vector.multi_reduction <add>, %65, %cst_28 [0] : vector<64x16xf32> to vector<16xf32>
    %67 = vector.shape_cast %66 : vector<16xf32> to vector<1x16xf32>
    %68 = arith.mulf %65, %65 : vector<64x16xf32>
    %cst_29 = arith.constant dense<0.000000e+00> : vector<16xf32>
    %69 = vector.multi_reduction <add>, %68, %cst_29 [0] : vector<64x16xf32> to vector<16xf32>
    %70 = vector.shape_cast %69 : vector<16xf32> to vector<1x16xf32>
    %cst_30 = arith.constant 0.000000e+00 : f32
    %71 = vector.broadcast %cst_30 : f32 to vector<6x16xf32>
    %72 = tpu.concatenate %67, %70, %71 in 0 : vector<1x16xf32>, vector<1x16xf32>, vector<6x16xf32> -> vector<8x16xf32>
    %c0_31 = arith.constant 0 : index
    %c0_32 = arith.constant 0 : index
    %73 = vector.load %arg12[%c0_31, %c0_32] : memref<8x16xf32, #tpu.memory_space<vmem>>, vector<8x16xf32>
    tpu.vector_store %arg12[%c0_31, %c0_32], %72 {strides = array<i32>} : memref<8x16xf32, #tpu.memory_space<vmem>>, vector<8x16xf32>,
    return
  }
  func.func @transform_0(%arg0: i32) -> (i32, i32) {
    %c0_i32 = arith.constant 0 : i32
    %c0_i32_0 = arith.constant 0 : i32
    return %arg0, %c0_i32 : i32, i32
  }
  func.func @transform_1(%arg0: i32) -> (i32, i32) {
    %c0_i32 = arith.constant 0 : i32
    %c0_i32_0 = arith.constant 0 : i32
    return %arg0, %c0_i32 : i32, i32
  }
  func.func @transform_2(%arg0: i32) -> (i32, i32) {
    %c0_i32 = arith.constant 0 : i32
    %c0_i32_0 = arith.constant 0 : i32
    %c0_i32_1 = arith.constant 0 : i32
    return %c0_i32, %c0_i32_0 : i32, i32
  }
  func.func @transform_3(%arg0: i32) -> (i32, i32) {
    %c0_i32 = arith.constant 0 : i32
    %c0_i32_0 = arith.constant 0 : i32
    %c0_i32_1 = arith.constant 0 : i32
    return %c0_i32, %c0_i32_0 : i32, i32
  }
  func.func @transform_4(%arg0: i32) -> (i32, i32) {
    %c0_i32 = arith.constant 0 : i32
    %c0_i32_0 = arith.constant 0 : i32
    %c0_i32_1 = arith.constant 0 : i32
    return %c0_i32, %c0_i32_0 : i32, i32
  }
  func.func @transform_5(%arg0: i32) -> (i32, i32) {
    %c0_i32 = arith.constant 0 : i32
    %c0_i32_0 = arith.constant 0 : i32
    %c0_i32_1 = arith.constant 0 : i32
    return %c0_i32, %c0_i32_0 : i32, i32
  }
  func.func @transform_6(%arg0: i32) -> (i32, i32) {
    %c0_i32 = arith.constant 0 : i32
    %c0_i32_0 = arith.constant 0 : i32
    %c0_i32_1 = arith.constant 0 : i32
    return %c0_i32, %c0_i32_0 : i32, i32
  }
  func.func @transform_7(%arg0: i32) -> (i32, i32) {
    %c0_i32 = arith.constant 0 : i32
    %c0_i32_0 = arith.constant 0 : i32
    %c0_i32_1 = arith.constant 0 : i32
    return %c0_i32, %c0_i32_0 : i32, i32
  }
  func.func @transform_8(%arg0: i32) -> (i32, i32) {
    %c0_i32 = arith.constant 0 : i32
    %c0_i32_0 = arith.constant 0 : i32
    %c0_i32_1 = arith.constant 0 : i32
    return %c0_i32, %c0_i32_0 : i32, i32
  }
  func.func @transform_9(%arg0: i32) -> (i32, i32) {
    %c0_i32 = arith.constant 0 : i32
    %c0_i32_0 = arith.constant 0 : i32
    %c0_i32_1 = arith.constant 0 : i32
    return %c0_i32, %c0_i32_0 : i32, i32
  }
  func.func @transform_10(%arg0: i32) -> (i32, i32) {
    %c0_i32 = arith.constant 0 : i32
    %c0_i32_0 = arith.constant 0 : i32
    return %arg0, %c0_i32 : i32, i32
  }
  func.func @transform_11(%arg0: i32) -> (i32, i32) {
    %c0_i32 = arith.constant 0 : i32
    %c0_i32_0 = arith.constant 0 : i32
    return %arg0, %c0_i32 : i32, i32
  }
}

</mosaic_0001>

<llo_original>
// kernel: tpu_custom_call.1
$region0: #{tpu_custom_call.1}
  #allocation0 [shape = 'u32[]', space=smem, size = 0x4, offset = 0x4, fixed_abs, tag = 'smem constant byte address 0x4 - core index']
  #allocation1 [shape = 'u32[144,128]{1,0:T(1,128)}', space=vmem, size = 0x12000, scoped, tag = 'internal scratch']
  %s0 = inlined_call_operand.vmem [shape: bf16[256,6], index: 0, kind: input, shape index: {}]
  %s1 = inlined_call_operand.vmem [shape: bf16[256,8], index: 1, kind: input, shape index: {}]
  %s2 = inlined_call_operand.vmem [shape: bf16[64,256], index: 2, kind: input, shape index: {}]
  %s3 = inlined_call_operand.vmem [shape: f32[1,8], index: 3, kind: input, shape index: {}]
  %s4 = inlined_call_operand.vmem [shape: f32[1,8], index: 4, kind: input, shape index: {}]
  %s5 = inlined_call_operand.vmem [shape: bf16[6,16], index: 5, kind: input, shape index: {}]
  %s6 = inlined_call_operand.vmem [shape: f32[1,16], index: 6, kind: input, shape index: {}]
  %s7 = inlined_call_operand.vmem [shape: bf16[16,32], index: 7, kind: input, shape index: {}]
  %s8 = inlined_call_operand.vmem [shape: f32[1,32], index: 8, kind: input, shape index: {}]
  %s9 = inlined_call_operand.vmem [shape: bf16[264,16], index: 9, kind: input, shape index: {}]
  %s10 = inlined_call_operand.vmem [shape: f32[64,16], index: 10, kind: output, shape index: {0}]
  %s11 = inlined_call_operand.hbm [shape: f32[8,16], index: 11, kind: output, shape index: {1}]
  %12 = xla_tuple %s10, %s11
  %s13 = sld [smem:[#allocation0]]
  $region58: #{tpu_custom_call.1} parent=0
    _
  %s15 = ssub.s32 1, %s13
  %s16 = scalar_select 0, %s15, %s13
  $region1: #{tpu_custom_call.1} parent=0
    #allocation2 [shape = 'u8[4096]{0}', space=vmem, size = 0x1000, scoped, tag = 'output window, operand 1, single buffered']
    #allocation3 [shape = 's32[1]{0}', space=sflag, size = 0x4, scoped, tag = 'scoped memory for tpu_custom_call.1']
    %17 = vsyncpa [#allocation3], 0
    // Predicated region
    $region2: #{tpu_custom_call.1} parent=1 // pred_check
      _
    $region3: #{tpu_custom_call.1} parent=1 // pred_check_branch
      %19 = sbr.rel (0) target = $region5
    $region4: #{tpu_custom_call.1} parent=1 // pred_region
      _
    $region5: #{tpu_custom_call.1} parent=1 // pred_fallthru
      _
    // Predicated region
    $region6: #{tpu_custom_call.1} parent=1 // pred_check
      _
    $region7: #{tpu_custom_call.1} parent=1 // pred_check_branch
      %21 = sbr.rel (0) target = $region9
    $region8: #{tpu_custom_call.1} parent=1 // pred_region
      _
    $region9: #{tpu_custom_call.1} parent=1 // pred_fallthru
      _
    // Predicated region
    $region10: #{tpu_custom_call.1} parent=1 // pred_check
      _
    $region11: #{tpu_custom_call.1} parent=1 // pred_check_branch
      %23 = sbr.rel (0) target = $region13
    $region12: #{tpu_custom_call.1} parent=1 // pred_region
      _
    $region13: #{tpu_custom_call.1} parent=1 // pred_fallthru
      _
    // Predicated region
    $region14: #{tpu_custom_call.1} parent=1 // pred_check
      _
    $region15: #{tpu_custom_call.1} parent=1 // pred_check_branch
      %25 = sbr.rel (0) target = $region17
    $region16: #{tpu_custom_call.1} parent=1 // pred_region
      _
    $region17: #{tpu_custom_call.1} parent=1 // pred_fallthru
      _
    // Predicated region
    $region18: #{tpu_custom_call.1} parent=1 // pred_check
      _
    $region19: #{tpu_custom_call.1} parent=1 // pred_check_branch
      %27 = sbr.rel (0) target = $region21
    $region20: #{tpu_custom_call.1} parent=1 // pred_region
      _
    $region21: #{tpu_custom_call.1} parent=1 // pred_fallthru
      _
    // Predicated region
    $region22: #{tpu_custom_call.1} parent=1 // pred_check
      _
    $region23: #{tpu_custom_call.1} parent=1 // pred_check_branch
      %29 = sbr.rel (0) target = $region25
    $region24: #{tpu_custom_call.1} parent=1 // pred_region
      _
    $region25: #{tpu_custom_call.1} parent=1 // pred_fallthru
      _
    // Predicated region
    $region26: #{tpu_custom_call.1} parent=1 // pred_check
      _
    $region27: #{tpu_custom_call.1} parent=1 // pred_check_branch
      %31 = sbr.rel (0) target = $region29
    $region28: #{tpu_custom_call.1} parent=1 // pred_region
      _
    $region29: #{tpu_custom_call.1} parent=1 // pred_fallthru
      _
    // Predicated region
    $region30: #{tpu_custom_call.1} parent=1 // pred_check
      _
    $region31: #{tpu_custom_call.1} parent=1 // pred_check_branch
      %33 = sbr.rel (0) target = $region33
    $region32: #{tpu_custom_call.1} parent=1 // pred_region
      _
    $region33: #{tpu_custom_call.1} parent=1 // pred_fallthru
      _
    // Predicated region
    $region34: #{tpu_custom_call.1} parent=1 // pred_check
      _
    $region35: #{tpu_custom_call.1} parent=1 // pred_check_branch
      %35 = sbr.rel (0) target = $region37
    $region36: #{tpu_custom_call.1} parent=1 // pred_region
      _
    $region37: #{tpu_custom_call.1} parent=1 // pred_fallthru
      _
    // Predicated region
    $region38: #{tpu_custom_call.1} parent=1 // pred_check
      _
    $region39: #{tpu_custom_call.1} parent=1 // pred_check_branch
      %37 = sbr.rel (0) target = $region41
    $region40: #{tpu_custom_call.1} parent=1 // pred_region
      _
    $region41: #{tpu_custom_call.1} parent=1 // pred_fallthru
      _
    %v39 = vld [vmem:[%s0] sm:$0xf]
    %v40 = vld [vmem:[%s0 + $0x4] sm:$0xf]
    %v41 = vld [vmem:[%s0 + $0x8] sm:$0xf]
    %v42 = vld [vmem:[%s0 + $0xc] sm:$0xf]
    %v43 = vld [vmem:[%s0 + $0x10] sm:$0xf]
    %v44 = vld [vmem:[%s0 + $0x14] sm:$0xf]
    %v45 = vld [vmem:[%s0 + $0x18] sm:$0xf]
    %v46 = vld [vmem:[%s0 + $0x1c] sm:$0xf]
    %v47 = vld [vmem:[%s0 + $0x20] sm:$0xf]
    %v48 = vld [vmem:[%s0 + $0x24] sm:$0xf]
    %v49 = vld [vmem:[%s0 + $0x28] sm:$0xf]
    %v50 = vld [vmem:[%s0 + $0x2c] sm:$0xf]
    %v51 = vld [vmem:[%s0 + $0x30] sm:$0xf]
    %v52 = vld [vmem:[%s0 + $0x34] sm:$0xf]
    %v53 = vld [vmem:[%s0 + $0x38] sm:$0xf]
    %v54 = vld [vmem:[%s0 + $0x3c] sm:$0xf]
    %v55 = vld [vmem:[%s0 + $0x40] sm:$0xf]
    %v56 = vld [vmem:[%s0 + $0x44] sm:$0xf]
    %v57 = vld [vmem:[%s0 + $0x48] sm:$0xf]
    %v58 = vld [vmem:[%s0 + $0x4c] sm:$0xf]
    %v59 = vld [vmem:[%s0 + $0x50] sm:$0xf]
    %v60 = vld [vmem:[%s0 + $0x54] sm:$0xf]
    %v61 = vld [vmem:[%s0 + $0x58] sm:$0xf]
    %v62 = vld [vmem:[%s0 + $0x5c] sm:$0xf]
    %v63 = vld [vmem:[%s0 + $0x60] sm:$0xf]
    %v64 = vld [vmem:[%s0 + $0x64] sm:$0xf]
    %v65 = vld [vmem:[%s0 + $0x68] sm:$0xf]
    %v66 = vld [vmem:[%s0 + $0x6c] sm:$0xf]
    %v67 = vld [vmem:[%s0 + $0x70] sm:$0xf]
    %v68 = vld [vmem:[%s0 + $0x74] sm:$0xf]
    %v69 = vld [vmem:[%s0 + $0x78] sm:$0xf]
    %v70 = vld [vmem:[%s0 + $0x7c] sm:$0xf]
    %v71 = vld [vmem:[%s5] sm:$0x7]
    %v72 = vld [vmem:[%s6] sm:$0x1]
    %v74 = vlaneseq
    %v75 = vshrl.u32 %v74, 7
    %v76 = vsub.s32 0, %v75
    %v77 = vrot.slane %v72, %v76
    %v111 = vunpack.c.l.b16 %v39
    %v112 = vunpack.c.l.b16 %v40
    %v113 = vunpack.c.l.b16 %v41
    %v114 = vunpack.c.l.b16 %v42
    %v115 = vunpack.c.l.b16 %v43
    %v116 = vunpack.c.l.b16 %v44
    %v117 = vunpack.c.l.b16 %v45
    %v118 = vunpack.c.l.b16 %v46
    %v119 = vunpack.c.l.b16 %v47
    %v120 = vunpack.c.l.b16 %v48
    %v121 = vunpack.c.l.b16 %v49
    %v122 = vunpack.c.l.b16 %v50
    %v123 = vunpack.c.l.b16 %v51
    %v124 = vunpack.c.l.b16 %v52
    %v125 = vunpack.c.l.b16 %v53
    %v126 = vunpack.c.l.b16 %v54
    %v127 = vunpack.c.l.b16 %v55
    %v128 = vunpack.c.l.b16 %v56
    %v129 = vunpack.c.l.b16 %v57
    %v130 = vunpack.c.l.b16 %v58
    %v131 = vunpack.c.l.b16 %v59
    %v132 = vunpack.c.l.b16 %v60
    %v133 = vunpack.c.l.b16 %v61
    %v134 = vunpack.c.l.b16 %v62
    %v135 = vunpack.c.l.b16 %v63
    %v136 = vunpack.c.l.b16 %v64
    %v137 = vunpack.c.l.b16 %v65
    %v138 = vunpack.c.l.b16 %v66
    %v139 = vunpack.c.l.b16 %v67
    %v140 = vunpack.c.l.b16 %v68
    %v141 = vunpack.c.l.b16 %v69
    %v142 = vunpack.c.l.b16 %v70
    %v143 = vpack.c.b16 %v112, %v111
    %v144 = vpack.c.b16 %v114, %v113
    %v145 = vpack.c.b16 %v116, %v115
    %v146 = vpack.c.b16 %v118, %v117
    %v147 = vpack.c.b16 %v120, %v119
    %v148 = vpack.c.b16 %v122, %v121
    %v149 = vpack.c.b16 %v124, %v123
    %v150 = vpack.c.b16 %v126, %v125
    %v151 = vpack.c.b16 %v128, %v127
    %v152 = vpack.c.b16 %v130, %v129
    %v153 = vpack.c.b16 %v132, %v131
    %v154 = vpack.c.b16 %v134, %v133
    %v155 = vpack.c.b16 %v136, %v135
    %v156 = vpack.c.b16 %v138, %v137
    %v157 = vpack.c.b16 %v140, %v139
    %v158 = vpack.c.b16 %v142, %v141
    %vm159 = vcmask 48128
    %v161 = vsel %vm159, %v143, 0
    %v164 = vsel %vm159, %v144, 0
    %v167 = vsel %vm159, %v145, 0
    %v170 = vsel %vm159, %v146, 0
    %v173 = vsel %vm159, %v147, 0
    %v176 = vsel %vm159, %v148, 0
    %v179 = vsel %vm159, %v149, 0
    %v182 = vsel %vm159, %v150, 0
    %v185 = vsel %vm159, %v151, 0
    %v188 = vsel %vm159, %v152, 0
    %v191 = vsel %vm159, %v153, 0
    %v194 = vsel %vm159, %v154, 0
    %v197 = vsel %vm159, %v155, 0
    %v200 = vsel %vm159, %v156, 0
    %v203 = vsel %vm159, %v157, 0
    %v206 = vsel %vm159, %v158, 0
    %vm208 = vcmask 1042432
    %v210 = vsel %vm208, %v71, 0
    %212 = vmatprep.subr.bf16.mxu0 0
    %213 = vmatpush1.bf16.msra.mxu0 %v210
    %214 = vmatprep.subr.bf16.mxu0 0
    %215 = vmatpush1.bf16.msra.mxu0 0
    %216 = vmatprep.subr.bf16.mxu0 0
    %217 = vmatpush1.bf16.msra.mxu0 0
    %218 = vmatprep.subr.bf16.mxu0 0
    %219 = vmatpush1.bf16.msra.mxu0 0
    %220 = vmatprep.subr.bf16.mxu0 0
    %221 = vmatpush1.bf16.msra.mxu0 0
    %222 = vmatprep.subr.bf16.mxu0 0
    %223 = vmatpush1.bf16.msra.mxu0 0
    %224 = vmatprep.subr.bf16.mxu0 0
    %225 = vmatpush1.bf16.msra.mxu0 0
    %226 = vmatprep.subr.bf16.mxu0 0
    %227 = vmatpush1.bf16.msra.mxu0 0
    %228 = vmatprep.subr.bf16.mxu0 0
    %229 = vmatpush1.bf16.msra.mxu0 0
    %230 = vmatprep.subr.bf16.mxu0 0
    %231 = vmatpush1.bf16.msra.mxu0 0
    %232 = vmatprep.subr.bf16.mxu0 0
    %233 = vmatpush1.bf16.msra.mxu0 0
    %234 = vmatprep.subr.bf16.mxu0 0
    %235 = vmatpush1.bf16.msra.mxu0 0
    %236 = vmatprep.subr.bf16.mxu0 0
    %237 = vmatpush1.bf16.msra.mxu0 0
    %238 = vmatprep.subr.bf16.mxu0 0
    %239 = vmatpush1.bf16.msra.mxu0 0
    %240 = vmatprep.subr.bf16.mxu0 0
    %241 = vmatpush1.bf16.msra.mxu0 0
    %242 = vmatprep.subr.bf16.mxu0 0
    %243 = vmatpush1.bf16.msra.mxu0 0
    %244 = vmatprep.mubr.bf16.mxu0 0
    %245 = vmatmul.mubr.bf16.gmra.mrb[0].mxu0 %v161
    %v246 = vpop.f32.mrb[0].mxu0
    %v247 = vadd.f32 %v77, %v246
    %v248 = vpop.f32.mrb[0].mxu0
    %v249 = vpop.f32.mrb[0].mxu0
    %v250 = vadd.f32 %v77, %v249
    %v251 = vpop.f32.mrb[0].mxu0
    %252 = vmatprep.mubr.bf16.mxu0 0
    %253 = vmatmul.mubr.bf16.gmra.mrb[0].mxu0 %v164
    %v254 = vpop.f32.mrb[0].mxu0
    %v255 = vadd.f32 %v77, %v254
    %v256 = vpop.f32.mrb[0].mxu0
    %v257 = vpop.f32.mrb[0].mxu0
    %v258 = vadd.f32 %v77, %v257
    %v259 = vpop.f32.mrb[0].mxu0
    %260 = vmatprep.mubr.bf16.mxu0 0
    %261 = vmatmul.mubr.bf16.gmra.mrb[0].mxu0 %v167
    %v262 = vpop.f32.mrb[0].mxu0
    %v263 = vadd.f32 %v77, %v262
    %v264 = vpop.f32.mrb[0].mxu0
    %v265 = vpop.f32.mrb[0].mxu0
    %v266 = vadd.f32 %v77, %v265
    %v267 = vpop.f32.mrb[0].mxu0
    %268 = vmatprep.mubr.bf16.mxu0 0
    %269 = vmatmul.mubr.bf16.gmra.mrb[0].mxu0 %v170
    %v270 = vpop.f32.mrb[0].mxu0
    %v271 = vadd.f32 %v77, %v270
    %v272 = vpop.f32.mrb[0].mxu0
    %v273 = vpop.f32.mrb[0].mxu0
    %v274 = vadd.f32 %v77, %v273
    %v275 = vpop.f32.mrb[0].mxu0
    %276 = vmatprep.mubr.bf16.mxu0 0
    %277 = vmatmul.mubr.bf16.gmra.mrb[0].mxu0 %v173
    %v278 = vpop.f32.mrb[0].mxu0
    %v279 = vadd.f32 %v77, %v278
    %v280 = vpop.f32.mrb[0].mxu0
    %v281 = vpop.f32.mrb[0].mxu0
    %v282 = vadd.f32 %v77, %v281
    %v283 = vpop.f32.mrb[0].mxu0
    %284 = vmatprep.mubr.bf16.mxu0 0
    %285 = vmatmul.mubr.bf16.gmra.mrb[0].mxu0 %v176
    %v286 = vpop.f32.mrb[0].mxu0
    %v287 = vadd.f32 %v77, %v286
    %v288 = vpop.f32.mrb[0].mxu0
    %v289 = vpop.f32.mrb[0].mxu0
    %v290 = vadd.f32 %v77, %v289
    %v291 = vpop.f32.mrb[0].mxu0
    %292 = vmatprep.mubr.bf16.mxu0 0
    %293 = vmatmul.mubr.bf16.gmra.mrb[0].mxu0 %v179
    %v294 = vpop.f32.mrb[0].mxu0
    %v295 = vadd.f32 %v77, %v294
    %v296 = vpop.f32.mrb[0].mxu0
    %v297 = vpop.f32.mrb[0].mxu0
    %v298 = vadd.f32 %v77, %v297
    %v299 = vpop.f32.mrb[0].mxu0
    %300 = vmatprep.mubr.bf16.mxu0 0
    %301 = vmatmul.mubr.bf16.gmra.mrb[0].mxu0 %v182
    %v302 = vpop.f32.mrb[0].mxu0
    %v303 = vadd.f32 %v77, %v302
    %v304 = vpop.f32.mrb[0].mxu0
    %v305 = vpop.f32.mrb[0].mxu0
    %v306 = vadd.f32 %v77, %v305
    %v307 = vpop.f32.mrb[0].mxu0
    %308 = vmatprep.mubr.bf16.mxu0 0
    %309 = vmatmul.mubr.bf16.gmra.mrb[0].mxu0 %v185
    %v310 = vpop.f32.mrb[0].mxu0
    %v311 = vadd.f32 %v77, %v310
    %v312 = vpop.f32.mrb[0].mxu0
    %v313 = vpop.f32.mrb[0].mxu0
    %v314 = vadd.f32 %v77, %v313
    %v315 = vpop.f32.mrb[0].mxu0
    %316 = vmatprep.mubr.bf16.mxu0 0
    %317 = vmatmul.mubr.bf16.gmra.mrb[0].mxu0 %v188
    %v318 = vpop.f32.mrb[0].mxu0
    %v319 = vadd.f32 %v77, %v318
    %v320 = vpop.f32.mrb[0].mxu0
    %v321 = vpop.f32.mrb[0].mxu0
    %v322 = vadd.f32 %v77, %v321
    %v323 = vpop.f32.mrb[0].mxu0
    %324 = vmatprep.mubr.bf16.mxu0 0
    %325 = vmatmul.mubr.bf16.gmra.mrb[0].mxu0 %v191
    %v326 = vpop.f32.mrb[0].mxu0
    %v327 = vadd.f32 %v77, %v326
    %v328 = vpop.f32.mrb[0].mxu0
    %v329 = vpop.f32.mrb[0].mxu0
    %v330 = vadd.f32 %v77, %v329
    %v331 = vpop.f32.mrb[0].mxu0
    %332 = vmatprep.mubr.bf16.mxu0 0
    %333 = vmatmul.mubr.bf16.gmra.mrb[0].mxu0 %v194
    %v334 = vpop.f32.mrb[0].mxu0
    %v335 = vadd.f32 %v77, %v334
    %v336 = vpop.f32.mrb[0].mxu0
    %v337 = vpop.f32.mrb[0].mxu0
    %v338 = vadd.f32 %v77, %v337
    %v339 = vpop.f32.mrb[0].mxu0
    %340 = vmatprep.mubr.bf16.mxu0 0
    %341 = vmatmul.mubr.bf16.gmra.mrb[0].mxu0 %v197
    %v342 = vpop.f32.mrb[0].mxu0
    %v343 = vadd.f32 %v77, %v342
    %v344 = vpop.f32.mrb[0].mxu0
    %v345 = vpop.f32.mrb[0].mxu0
    %v346 = vadd.f32 %v77, %v345
    %v347 = vpop.f32.mrb[0].mxu0
    %348 = vmatprep.mubr.bf16.mxu0 0
    %349 = vmatmul.mubr.bf16.gmra.mrb[0].mxu0 %v200
    %v350 = vpop.f32.mrb[0].mxu0
    %v351 = vadd.f32 %v77, %v350
    %v352 = vpop.f32.mrb[0].mxu0
    %v353 = vpop.f32.mrb[0].mxu0
    %v354 = vadd.f32 %v77, %v353
    %v355 = vpop.f32.mrb[0].mxu0
    %356 = vmatprep.mubr.bf16.mxu0 0
    %357 = vmatmul.mubr.bf16.gmra.mrb[0].mxu0 %v203
    %v358 = vpop.f32.mrb[0].mxu0
    %v359 = vadd.f32 %v77, %v358
    %v360 = vpop.f32.mrb[0].mxu0
    %v361 = vpop.f32.mrb[0].mxu0
    %v362 = vadd.f32 %v77, %v361
    %v363 = vpop.f32.mrb[0].mxu0
    %364 = vmatprep.mubr.bf16.mxu0 0
    %365 = vmatmul.mubr.bf16.gmra.mrb[0].mxu0 %v206
    %v366 = vpop.f32.mrb[0].mxu0
    %v367 = vadd.f32 %v77, %v366
    %v368 = vpop.f32.mrb[0].mxu0
    %v369 = vpop.f32.mrb[0].mxu0
    %v370 = vadd.f32 %v77, %v369
    %v371 = vpop.f32.mrb[0].mxu0
    %372 = vdwg.mxu0
    %v373 = vmax.f32 %v247, 0.0
    %v374 = vmax.f32 %v250, 0.0
    %v375 = vmax.f32 %v255, 0.0
    %v376 = vmax.f32 %v258, 0.0
    %v377 = vmax.f32 %v263, 0.0
    %v378 = vmax.f32 %v266, 0.0
    %v379 = vmax.f32 %v271, 0.0
    %v380 = vmax.f32 %v274, 0.0
    %v381 = vmax.f32 %v279, 0.0
    %v382 = vmax.f32 %v282, 0.0
    %v383 = vmax.f32 %v287, 0.0
    %v384 = vmax.f32 %v290, 0.0
    %v385 = vmax.f32 %v295, 0.0
    %v386 = vmax.f32 %v298, 0.0
    %v387 = vmax.f32 %v303, 0.0
    %v388 = vmax.f32 %v306, 0.0
    %v389 = vmax.f32 %v311, 0.0
    %v390 = vmax.f32 %v314, 0.0
    %v391 = vmax.f32 %v319, 0.0
    %v392 = vmax.f32 %v322, 0.0
    %v393 = vmax.f32 %v327, 0.0
    %v394 = vmax.f32 %v330, 0.0
    %v395 = vmax.f32 %v335, 0.0
    %v396 = vmax.f32 %v338, 0.0
    %v397 = vmax.f32 %v343, 0.0
    %v398 = vmax.f32 %v346, 0.0
    %v399 = vmax.f32 %v351, 0.0
    %v400 = vmax.f32 %v354, 0.0
    %v401 = vmax.f32 %v359, 0.0
    %v402 = vmax.f32 %v362, 0.0
    %v403 = vmax.f32 %v367, 0.0
    %v404 = vmax.f32 %v370, 0.0
    %v405 = vpack.c.bf16 %v374, %v373
    %v406 = vpack.c.bf16 %v376, %v375
    %v407 = vpack.c.bf16 %v378, %v377
    %v408 = vpack.c.bf16 %v380, %v379
    %v409 = vpack.c.bf16 %v382, %v381
    %v410 = vpack.c.bf16 %v384, %v383
    %v411 = vpack.c.bf16 %v386, %v385
    %v412 = vpack.c.bf16 %v388, %v387
    %v413 = vpack.c.bf16 %v390, %v389
    %v414 = vpack.c.bf16 %v392, %v391
    %v415 = vpack.c.bf16 %v394, %v393
    %v416 = vpack.c.bf16 %v396, %v395
    %v417 = vpack.c.bf16 %v398, %v397
    %v418 = vpack.c.bf16 %v400, %v399
    %v419 = vpack.c.bf16 %v402, %v401
    %v420 = vpack.c.bf16 %v404, %v403
    %v421 = vld [vmem:[%s7] sm:$0xf]
    %v422 = vld [vmem:[%s7 + $0x4] sm:$0xf]
    %v423 = vld [vmem:[%s8] sm:$0x1]
    %v425 = vlaneseq
    %v426 = vshrl.u32 %v425, 7
    %v427 = vsub.s32 0, %v426
    %v428 = vrot.slane %v423, %v427
    %v432 = vunpack.c.l.b16 %v421
    %v433 = vunpack.c.l.b16 %v422
    %v434 = vpack.c.b16 %v433, %v432
    %vm436 = vcmask 130048
    %v438 = vsel %vm436, %v405, 0
    %v441 = vsel %vm436, %v406, 0
    %v444 = vsel %vm436, %v407, 0
    %v447 = vsel %vm436, %v408, 0
    %v450 = vsel %vm436, %v409, 0
    %v453 = vsel %vm436, %v410, 0
    %v456 = vsel %vm436, %v411, 0
    %v459 = vsel %vm436, %v412, 0
    %v462 = vsel %vm436, %v413, 0
    %v465 = vsel %vm436, %v414, 0
    %v468 = vsel %vm436, %v415, 0
    %v471 = vsel %vm436, %v416, 0
    %v474 = vsel %vm436, %v417, 0
    %v477 = vsel %vm436, %v418, 0
    %v480 = vsel %vm436, %v419, 0
    %v483 = vsel %vm436, %v420, 0
    %485 = vmatprep.subr.bf16.mxu0 0
    %486 = vmatpush1.bf16.msra.mxu0 %v434
    %487 = vmatprep.subr.bf16.mxu0 0
    %488 = vmatpush1.bf16.msra.mxu0 0
    %489 = vmatprep.subr.bf16.mxu0 0
    %490 = vmatpush1.bf16.msra.mxu0 0
    %491 = vmatprep.subr.bf16.mxu0 0
    %492 = vmatpush1.bf16.msra.mxu0 0
    %493 = vmatprep.subr.bf16.mxu0 0
    %494 = vmatpush1.bf16.msra.mxu0 0
    %495 = vmatprep.subr.bf16.mxu0 0
    %496 = vmatpush1.bf16.msra.mxu0 0
    %497 = vmatprep.subr.bf16.mxu0 0
    %498 = vmatpush1.bf16.msra.mxu0 0
    %499 = vmatprep.subr.bf16.mxu0 0
    %500 = vmatpush1.bf16.msra.mxu0 0
    %501 = vmatprep.subr.bf16.mxu0 0
    %502 = vmatpush1.bf16.msra.mxu0 0
    %503 = vmatprep.subr.bf16.mxu0 0
    %504 = vmatpush1.bf16.msra.mxu0 0
    %505 = vmatprep.subr.bf16.mxu0 0
    %506 = vmatpush1.bf16.msra.mxu0 0
    %507 = vmatprep.subr.bf16.mxu0 0
    %508 = vmatpush1.bf16.msra.mxu0 0
    %509 = vmatprep.subr.bf16.mxu0 0
    %510 = vmatpush1.bf16.msra.mxu0 0
    %511 = vmatprep.subr.bf16.mxu0 0
    %512 = vmatpush1.bf16.msra.mxu0 0
    %513 = vmatprep.subr.bf16.mxu0 0
    %514 = vmatpush1.bf16.msra.mxu0 0
    %515 = vmatprep.subr.bf16.mxu0 0
    %516 = vmatpush1.bf16.msra.mxu0 0
    %517 = vmatprep.mubr.bf16.mxu0 0
    %518 = vmatmul.mubr.bf16.gmra.mrb[0].mxu0 %v438
    %v519 = vpop.f32.mrb[0].mxu0
    %v520 = vadd.f32 %v428, %v519
    %v521 = vpop.f32.mrb[0].mxu0
    %v522 = vpop.f32.mrb[0].mxu0
    %v523 = vadd.f32 %v428, %v522
    %v524 = vpop.f32.mrb[0].mxu0
    %525 = vmatprep.mubr.bf16.mxu0 0
    %526 = vmatmul.mubr.bf16.gmra.mrb[0].mxu0 %v441
    %v527 = vpop.f32.mrb[0].mxu0
    %v528 = vadd.f32 %v428, %v527
    %v529 = vpop.f32.mrb[0].mxu0
    %v530 = vpop.f32.mrb[0].mxu0
    %v531 = vadd.f32 %v428, %v530
    %v532 = vpop.f32.mrb[0].mxu0
    %533 = vmatprep.mubr.bf16.mxu0 0
    %534 = vmatmul.mubr.bf16.gmra.mrb[0].mxu0 %v444
    %v535 = vpop.f32.mrb[0].mxu0
    %v536 = vadd.f32 %v428, %v535
    %v537 = vpop.f32.mrb[0].mxu0
    %v538 = vpop.f32.mrb[0].mxu0
    %v539 = vadd.f32 %v428, %v538
    %v540 = vpop.f32.mrb[0].mxu0
    %541 = vmatprep.mubr.bf16.mxu0 0
    %542 = vmatmul.mubr.bf16.gmra.mrb[0].mxu0 %v447
    %v543 = vpop.f32.mrb[0].mxu0
    %v544 = vadd.f32 %v428, %v543
    %v545 = vpop.f32.mrb[0].mxu0
    %v546 = vpop.f32.mrb[0].mxu0
    %v547 = vadd.f32 %v428, %v546
    %v548 = vpop.f32.mrb[0].mxu0
    %549 = vmatprep.mubr.bf16.mxu0 0
    %550 = vmatmul.mubr.bf16.gmra.mrb[0].mxu0 %v450
    %v551 = vpop.f32.mrb[0].mxu0
    %v552 = vadd.f32 %v428, %v551
    %v553 = vpop.f32.mrb[0].mxu0
    %v554 = vpop.f32.mrb[0].mxu0
    %v555 = vadd.f32 %v428, %v554
    %v556 = vpop.f32.mrb[0].mxu0
    %557 = vmatprep.mubr.bf16.mxu0 0
    %558 = vmatmul.mubr.bf16.gmra.mrb[0].mxu0 %v453
    %v559 = vpop.f32.mrb[0].mxu0
    %v560 = vadd.f32 %v428, %v559
    %v561 = vpop.f32.mrb[0].mxu0
    %v562 = vpop.f32.mrb[0].mxu0
    %v563 = vadd.f32 %v428, %v562
    %v564 = vpop.f32.mrb[0].mxu0
    %565 = vmatprep.mubr.bf16.mxu0 0
    %566 = vmatmul.mubr.bf16.gmra.mrb[0].mxu0 %v456
    %v567 = vpop.f32.mrb[0].mxu0
    %v568 = vadd.f32 %v428, %v567
    %v569 = vpop.f32.mrb[0].mxu0
    %v570 = vpop.f32.mrb[0].mxu0
    %v571 = vadd.f32 %v428, %v570
    %v572 = vpop.f32.mrb[0].mxu0
    %573 = vmatprep.mubr.bf16.mxu0 0
    %574 = vmatmul.mubr.bf16.gmra.mrb[0].mxu0 %v459
    %v575 = vpop.f32.mrb[0].mxu0
    %v576 = vadd.f32 %v428, %v575
    %v577 = vpop.f32.mrb[0].mxu0
    %v578 = vpop.f32.mrb[0].mxu0
    %v579 = vadd.f32 %v428, %v578
    %v580 = vpop.f32.mrb[0].mxu0
    %581 = vmatprep.mubr.bf16.mxu0 0
    %582 = vmatmul.mubr.bf16.gmra.mrb[0].mxu0 %v462
    %v583 = vpop.f32.mrb[0].mxu0
    %v584 = vadd.f32 %v428, %v583
    %v585 = vpop.f32.mrb[0].mxu0
    %v586 = vpop.f32.mrb[0].mxu0
    %v587 = vadd.f32 %v428, %v586
    %v588 = vpop.f32.mrb[0].mxu0
    %589 = vmatprep.mubr.bf16.mxu0 0
    %590 = vmatmul.mubr.bf16.gmra.mrb[0].mxu0 %v465
    %v591 = vpop.f32.mrb[0].mxu0
    %v592 = vadd.f32 %v428, %v591
    %v593 = vpop.f32.mrb[0].mxu0
    %v594 = vpop.f32.mrb[0].mxu0
    %v595 = vadd.f32 %v428, %v594
    %v596 = vpop.f32.mrb[0].mxu0
    %597 = vmatprep.mubr.bf16.mxu0 0
    %598 = vmatmul.mubr.bf16.gmra.mrb[0].mxu0 %v468
    %v599 = vpop.f32.mrb[0].mxu0
    %v600 = vadd.f32 %v428, %v599
    %v601 = vpop.f32.mrb[0].mxu0
    %v602 = vpop.f32.mrb[0].mxu0
    %v603 = vadd.f32 %v428, %v602
    %v604 = vpop.f32.mrb[0].mxu0
    %605 = vmatprep.mubr.bf16.mxu0 0
    %606 = vmatmul.mubr.bf16.gmra.mrb[0].mxu0 %v471
    %v607 = vpop.f32.mrb[0].mxu0
    %v608 = vadd.f32 %v428, %v607
    %v609 = vpop.f32.mrb[0].mxu0
    %v610 = vpop.f32.mrb[0].mxu0
    %v611 = vadd.f32 %v428, %v610
    %v612 = vpop.f32.mrb[0].mxu0
    %613 = vmatprep.mubr.bf16.mxu0 0
    %614 = vmatmul.mubr.bf16.gmra.mrb[0].mxu0 %v474
    %v615 = vpop.f32.mrb[0].mxu0
    %v616 = vadd.f32 %v428, %v615
    %v617 = vpop.f32.mrb[0].mxu0
    %v618 = vpop.f32.mrb[0].mxu0
    %v619 = vadd.f32 %v428, %v618
    %v620 = vpop.f32.mrb[0].mxu0
    %621 = vmatprep.mubr.bf16.mxu0 0
    %622 = vmatmul.mubr.bf16.gmra.mrb[0].mxu0 %v477
    %v623 = vpop.f32.mrb[0].mxu0
    %v624 = vadd.f32 %v428, %v623
    %v625 = vpop.f32.mrb[0].mxu0
    %v626 = vpop.f32.mrb[0].mxu0
    %v627 = vadd.f32 %v428, %v626
    %v628 = vpop.f32.mrb[0].mxu0
    %629 = vmatprep.mubr.bf16.mxu0 0
    %630 = vmatmul.mubr.bf16.gmra.mrb[0].mxu0 %v480
    %v631 = vpop.f32.mrb[0].mxu0
    %v632 = vadd.f32 %v428, %v631
    %v633 = vpop.f32.mrb[0].mxu0
    %v634 = vpop.f32.mrb[0].mxu0
    %v635 = vadd.f32 %v428, %v634
    %v636 = vpop.f32.mrb[0].mxu0
    %637 = vmatprep.mubr.bf16.mxu0 0
    %638 = vmatmul.mubr.bf16.gmra.mrb[0].mxu0 %v483
    %v639 = vpop.f32.mrb[0].mxu0
    %v640 = vadd.f32 %v428, %v639
    %v641 = vpop.f32.mrb[0].mxu0
    %v642 = vpop.f32.mrb[0].mxu0
    %v643 = vadd.f32 %v428, %v642
    %v644 = vpop.f32.mrb[0].mxu0
    %645 = vdwg.mxu0
    %v646 = vmax.f32 %v520, 0.0
    %v647 = vmax.f32 %v523, 0.0
    %v648 = vmax.f32 %v528, 0.0
    %v649 = vmax.f32 %v531, 0.0
    %v650 = vmax.f32 %v536, 0.0
    %v651 = vmax.f32 %v539, 0.0
    %v652 = vmax.f32 %v544, 0.0
    %v653 = vmax.f32 %v547, 0.0
    %v654 = vmax.f32 %v552, 0.0
    %v655 = vmax.f32 %v555, 0.0
    %v656 = vmax.f32 %v560, 0.0
    %v657 = vmax.f32 %v563, 0.0
    %v658 = vmax.f32 %v568, 0.0
    %v659 = vmax.f32 %v571, 0.0
    %v660 = vmax.f32 %v576, 0.0
    %v661 = vmax.f32 %v579, 0.0
    %v662 = vmax.f32 %v584, 0.0
    %v663 = vmax.f32 %v587, 0.0
    %v664 = vmax.f32 %v592, 0.0
    %v665 = vmax.f32 %v595, 0.0
    %v666 = vmax.f32 %v600, 0.0
    %v667 = vmax.f32 %v603, 0.0
    %v668 = vmax.f32 %v608, 0.0
    %v669 = vmax.f32 %v611, 0.0
    %v670 = vmax.f32 %v616, 0.0
    %v671 = vmax.f32 %v619, 0.0
    %v672 = vmax.f32 %v624, 0.0
    %v673 = vmax.f32 %v627, 0.0
    %v674 = vmax.f32 %v632, 0.0
    %v675 = vmax.f32 %v635, 0.0
    %v676 = vmax.f32 %v640, 0.0
    %v677 = vmax.f32 %v643, 0.0
    %v678 = vld [vmem:[%s1] sm:$0xf]
    %v679 = vld [vmem:[%s1 + $0x4] sm:$0xf]
    %v680 = vld [vmem:[%s1 + $0x8] sm:$0xf]
    %v681 = vld [vmem:[%s1 + $0xc] sm:$0xf]
    %v682 = vld [vmem:[%s1 + $0x10] sm:$0xf]
    %v683 = vld [vmem:[%s1 + $0x14] sm:$0xf]
    %v684 = vld [vmem:[%s1 + $0x18] sm:$0xf]
    %v685 = vld [vmem:[%s1 + $0x1c] sm:$0xf]
    %v686 = vld [vmem:[%s1 + $0x20] sm:$0xf]
    %v687 = vld [vmem:[%s1 + $0x24] sm:$0xf]
    %v688 = vld [vmem:[%s1 + $0x28] sm:$0xf]
    %v689 = vld [vmem:[%s1 + $0x2c] sm:$0xf]
    %v690 = vld [vmem:[%s1 + $0x30] sm:$0xf]
    %v691 = vld [vmem:[%s1 + $0x34] sm:$0xf]
    %v692 = vld [vmem:[%s1 + $0x38] sm:$0xf]
    %v693 = vld [vmem:[%s1 + $0x3c] sm:$0xf]
    %v694 = vld [vmem:[%s1 + $0x40] sm:$0xf]
    %v695 = vld [vmem:[%s1 + $0x44] sm:$0xf]
    %v696 = vld [vmem:[%s1 + $0x48] sm:$0xf]
    %v697 = vld [vmem:[%s1 + $0x4c] sm:$0xf]
    %v698 = vld [vmem:[%s1 + $0x50] sm:$0xf]
    %v699 = vld [vmem:[%s1 + $0x54] sm:$0xf]
    %v700 = vld [vmem:[%s1 + $0x58] sm:$0xf]
    %v701 = vld [vmem:[%s1 + $0x5c] sm:$0xf]
    %v702 = vld [vmem:[%s1 + $0x60] sm:$0xf]
    %v703 = vld [vmem:[%s1 + $0x64] sm:$0xf]
    %v704 = vld [vmem:[%s1 + $0x68] sm:$0xf]
    %v705 = vld [vmem:[%s1 + $0x6c] sm:$0xf]
    %v706 = vld [vmem:[%s1 + $0x70] sm:$0xf]
    %v707 = vld [vmem:[%s1 + $0x74] sm:$0xf]
    %v708 = vld [vmem:[%s1 + $0x78] sm:$0xf]
    %v709 = vld [vmem:[%s1 + $0x7c] sm:$0xf]
    %v710 = vunpack.c.l.bf16 %v678
    %v711 = vunpack.c.l.bf16 %v679
    %v712 = vunpack.c.l.bf16 %v680
    %v713 = vunpack.c.l.bf16 %v681
    %v714 = vunpack.c.l.bf16 %v682
    %v715 = vunpack.c.l.bf16 %v683
    %v716 = vunpack.c.l.bf16 %v684
    %v717 = vunpack.c.l.bf16 %v685
    %v718 = vunpack.c.l.bf16 %v686
    %v719 = vunpack.c.l.bf16 %v687
    %v720 = vunpack.c.l.bf16 %v688
    %v721 = vunpack.c.l.bf16 %v689
    %v722 = vunpack.c.l.bf16 %v690
    %v723 = vunpack.c.l.bf16 %v691
    %v724 = vunpack.c.l.bf16 %v692
    %v725 = vunpack.c.l.bf16 %v693
    %v726 = vunpack.c.l.bf16 %v694
    %v727 = vunpack.c.l.bf16 %v695
    %v728 = vunpack.c.l.bf16 %v696
    %v729 = vunpack.c.l.bf16 %v697
    %v730 = vunpack.c.l.bf16 %v698
    %v731 = vunpack.c.l.bf16 %v699
    %v732 = vunpack.c.l.bf16 %v700
    %v733 = vunpack.c.l.bf16 %v701
    %v734 = vunpack.c.l.bf16 %v702
    %v735 = vunpack.c.l.bf16 %v703
    %v736 = vunpack.c.l.bf16 %v704
    %v737 = vunpack.c.l.bf16 %v705
    %v738 = vunpack.c.l.bf16 %v706
    %v739 = vunpack.c.l.bf16 %v707
    %v740 = vunpack.c.l.bf16 %v708
    %v741 = vunpack.c.l.bf16 %v709
    %v742 = vld [vmem:[%s3] sm:$0x1]
    %v744 = vlaneseq
    %v745 = vshrl.u32 %v744, 7
    %v746 = vsub.s32 0, %v745
    %v747 = vrot.slane %v742, %v746
    %v749 = vmul.f32 %v710, %v747
    %v750 = vmul.f32 %v711, %v747
    %v751 = vmul.f32 %v712, %v747
    %v752 = vmul.f32 %v713, %v747
    %v753 = vmul.f32 %v714, %v747
    %v754 = vmul.f32 %v715, %v747
    %v755 = vmul.f32 %v716, %v747
    %v756 = vmul.f32 %v717, %v747
    %v757 = vmul.f32 %v718, %v747
    %v758 = vmul.f32 %v719, %v747
    %v759 = vmul.f32 %v720, %v747
    %v760 = vmul.f32 %v721, %v747
    %v761 = vmul.f32 %v722, %v747
    %v762 = vmul.f32 %v723, %v747
    %v763 = vmul.f32 %v724, %v747
    %v764 = vmul.f32 %v725, %v747
    %v765 = vmul.f32 %v726, %v747
    %v766 = vmul.f32 %v727, %v747
    %v767 = vmul.f32 %v728, %v747
    %v768 = vmul.f32 %v729, %v747
    %v769 = vmul.f32 %v730, %v747
    %v770 = vmul.f32 %v731, %v747
    %v771 = vmul.f32 %v732, %v747
    %v772 = vmul.f32 %v733, %v747
    %v773 = vmul.f32 %v734, %v747
    %v774 = vmul.f32 %v735, %v747
    %v775 = vmul.f32 %v736, %v747
    %v776 = vmul.f32 %v737, %v747
    %v777 = vmul.f32 %v738, %v747
    %v778 = vmul.f32 %v739, %v747
    %v779 = vmul.f32 %v740, %v747
    %v780 = vmul.f32 %v741, %v747
    %v781 = vld [vmem:[%s4] sm:$0x1]
    %v783 = vlaneseq
    %v784 = vshrl.u32 %v783, 7
    %v785 = vsub.s32 0, %v784
    %v786 = vrot.slane %v781, %v785
    %v788 = vadd.f32 %v749, %v786
    %v789 = vadd.f32 %v750, %v786
    %v790 = vadd.f32 %v751, %v786
    %v791 = vadd.f32 %v752, %v786
    %v792 = vadd.f32 %v753, %v786
    %v793 = vadd.f32 %v754, %v786
    %v794 = vadd.f32 %v755, %v786
    %v795 = vadd.f32 %v756, %v786
    %v796 = vadd.f32 %v757, %v786
    %v797 = vadd.f32 %v758, %v786
    %v798 = vadd.f32 %v759, %v786
    %v799 = vadd.f32 %v760, %v786
    %v800 = vadd.f32 %v761, %v786
    %v801 = vadd.f32 %v762, %v786
    %v802 = vadd.f32 %v763, %v786
    %v803 = vadd.f32 %v764, %v786
    %v804 = vadd.f32 %v765, %v786
    %v805 = vadd.f32 %v766, %v786
    %v806 = vadd.f32 %v767, %v786
    %v807 = vadd.f32 %v768, %v786
    %v808 = vadd.f32 %v769, %v786
    %v809 = vadd.f32 %v770, %v786
    %v810 = vadd.f32 %v771, %v786
    %v811 = vadd.f32 %v772, %v786
    %v812 = vadd.f32 %v773, %v786
    %v813 = vadd.f32 %v774, %v786
    %v814 = vadd.f32 %v775, %v786
    %v815 = vadd.f32 %v776, %v786
    %v816 = vadd.f32 %v777, %v786
    %v817 = vadd.f32 %v778, %v786
    %v818 = vadd.f32 %v779, %v786
    %v819 = vadd.f32 %v780, %v786
    %821 = vset.pattern.permute.xlu0 0
    %822 = vperm.xlu0 %821, %v788
    %v823 = vpop.permute.xlu0 %822
    %826 = vset.pattern.permute.xlu0 0
    %827 = vperm.xlu0 %826, %v789
    %v828 = vpop.permute.xlu0 %827
    %831 = vset.pattern.permute.xlu0 0
    %832 = vperm.xlu0 %831, %v790
    %v833 = vpop.permute.xlu0 %832
    %836 = vset.pattern.permute.xlu0 0
    %837 = vperm.xlu0 %836, %v791
    %v838 = vpop.permute.xlu0 %837
    %841 = vset.pattern.permute.xlu0 0
    %842 = vperm.xlu0 %841, %v792
    %v843 = vpop.permute.xlu0 %842
    %846 = vset.pattern.permute.xlu0 0
    %847 = vperm.xlu0 %846, %v793
    %v848 = vpop.permute.xlu0 %847
    %851 = vset.pattern.permute.xlu0 0
    %852 = vperm.xlu0 %851, %v794
    %v853 = vpop.permute.xlu0 %852
    %856 = vset.pattern.permute.xlu0 0
    %857 = vperm.xlu0 %856, %v795
    %v858 = vpop.permute.xlu0 %857
    %861 = vset.pattern.permute.xlu0 0
    %862 = vperm.xlu0 %861, %v796
    %v863 = vpop.permute.xlu0 %862
    %866 = vset.pattern.permute.xlu0 0
    %867 = vperm.xlu0 %866, %v797
    %v868 = vpop.permute.xlu0 %867
    %871 = vset.pattern.permute.xlu0 0
    %872 = vperm.xlu0 %871, %v798
    %v873 = vpop.permute.xlu0 %872
    %876 = vset.pattern.permute.xlu0 0
    %877 = vperm.xlu0 %876, %v799
    %v878 = vpop.permute.xlu0 %877
    %881 = vset.pattern.permute.xlu0 0
    %882 = vperm.xlu0 %881, %v800
    %v883 = vpop.permute.xlu0 %882
    %886 = vset.pattern.permute.xlu0 0
    %887 = vperm.xlu0 %886, %v801
    %v888 = vpop.permute.xlu0 %887
    %891 = vset.pattern.permute.xlu0 0
    %892 = vperm.xlu0 %891, %v802
    %v893 = vpop.permute.xlu0 %892
    %896 = vset.pattern.permute.xlu0 0
    %897 = vperm.xlu0 %896, %v803
    %v898 = vpop.permute.xlu0 %897
    %901 = vset.pattern.permute.xlu0 0
    %902 = vperm.xlu0 %901, %v804
    %v903 = vpop.permute.xlu0 %902
    %906 = vset.pattern.permute.xlu0 0
    %907 = vperm.xlu0 %906, %v805
    %v908 = vpop.permute.xlu0 %907
    %911 = vset.pattern.permute.xlu0 0
    %912 = vperm.xlu0 %911, %v806
    %v913 = vpop.permute.xlu0 %912
    %916 = vset.pattern.permute.xlu0 0
    %917 = vperm.xlu0 %916, %v807
    %v918 = vpop.permute.xlu0 %917
    %921 = vset.pattern.permute.xlu0 0
    %922 = vperm.xlu0 %921, %v808
    %v923 = vpop.permute.xlu0 %922
    %926 = vset.pattern.permute.xlu0 0
    %927 = vperm.xlu0 %926, %v809
    %v928 = vpop.permute.xlu0 %927
    %931 = vset.pattern.permute.xlu0 0
    %932 = vperm.xlu0 %931, %v810
    %v933 = vpop.permute.xlu0 %932
    %936 = vset.pattern.permute.xlu0 0
    %937 = vperm.xlu0 %936, %v811
    %v938 = vpop.permute.xlu0 %937
    %941 = vset.pattern.permute.xlu0 0
    %942 = vperm.xlu0 %941, %v812
    %v943 = vpop.permute.xlu0 %942
    %946 = vset.pattern.permute.xlu0 0
    %947 = vperm.xlu0 %946, %v813
    %v948 = vpop.permute.xlu0 %947
    %951 = vset.pattern.permute.xlu0 0
    %952 = vperm.xlu0 %951, %v814
    %v953 = vpop.permute.xlu0 %952
    %956 = vset.pattern.permute.xlu0 0
    %957 = vperm.xlu0 %956, %v815
    %v958 = vpop.permute.xlu0 %957
    %961 = vset.pattern.permute.xlu0 0
    %962 = vperm.xlu0 %961, %v816
    %v963 = vpop.permute.xlu0 %962
    %966 = vset.pattern.permute.xlu0 0
    %967 = vperm.xlu0 %966, %v817
    %v968 = vpop.permute.xlu0 %967
    %971 = vset.pattern.permute.xlu0 0
    %972 = vperm.xlu0 %971, %v818
    %v973 = vpop.permute.xlu0 %972
    %976 = vset.pattern.permute.xlu0 0
    %977 = vperm.xlu0 %976, %v819
    %v978 = vpop.permute.xlu0 %977
    %v980 = vmul.f32 %v823, %v646
    %v981 = vmul.f32 %v828, %v647
    %v982 = vmul.f32 %v833, %v648
    %v983 = vmul.f32 %v838, %v649
    %v984 = vmul.f32 %v843, %v650
    %v985 = vmul.f32 %v848, %v651
    %v986 = vmul.f32 %v853, %v652
    %v987 = vmul.f32 %v858, %v653
    %v988 = vmul.f32 %v863, %v654
    %v989 = vmul.f32 %v868, %v655
    %v990 = vmul.f32 %v873, %v656
    %v991 = vmul.f32 %v878, %v657
    %v992 = vmul.f32 %v883, %v658
    %v993 = vmul.f32 %v888, %v659
    %v994 = vmul.f32 %v893, %v660
    %v995 = vmul.f32 %v898, %v661
    %v996 = vmul.f32 %v903, %v662
    %v997 = vmul.f32 %v908, %v663
    %v998 = vmul.f32 %v913, %v664
    %v999 = vmul.f32 %v918, %v665
    %v1000 = vmul.f32 %v923, %v666
    %v1001 = vmul.f32 %v928, %v667
    %v1002 = vmul.f32 %v933, %v668
    %v1003 = vmul.f32 %v938, %v669
    %v1004 = vmul.f32 %v943, %v670
    %v1005 = vmul.f32 %v948, %v671
    %v1006 = vmul.f32 %v953, %v672
    %v1007 = vmul.f32 %v958, %v673
    %v1008 = vmul.f32 %v963, %v674
    %v1009 = vmul.f32 %v968, %v675
    %v1010 = vmul.f32 %v973, %v676
    %v1011 = vmul.f32 %v978, %v677
    %1012 = vset.pattern.permute.xlu0 1
    %1013 = vperm.xlu0 %1012, %v788
    %v1014 = vpop.permute.xlu0 %1013
    %1016 = vset.pattern.permute.xlu0 1
    %1017 = vperm.xlu0 %1016, %v789
    %v1018 = vpop.permute.xlu0 %1017
    %1020 = vset.pattern.permute.xlu0 1
    %1021 = vperm.xlu0 %1020, %v790
    %v1022 = vpop.permute.xlu0 %1021
    %1024 = vset.pattern.permute.xlu0 1
    %1025 = vperm.xlu0 %1024, %v791
    %v1026 = vpop.permute.xlu0 %1025
    %1028 = vset.pattern.permute.xlu0 1
    %1029 = vperm.xlu0 %1028, %v792
    %v1030 = vpop.permute.xlu0 %1029
    %1032 = vset.pattern.permute.xlu0 1
    %1033 = vperm.xlu0 %1032, %v793
    %v1034 = vpop.permute.xlu0 %1033
    %1036 = vset.pattern.permute.xlu0 1
    %1037 = vperm.xlu0 %1036, %v794
    %v1038 = vpop.permute.xlu0 %1037
    %1040 = vset.pattern.permute.xlu0 1
    %1041 = vperm.xlu0 %1040, %v795
    %v1042 = vpop.permute.xlu0 %1041
    %1044 = vset.pattern.permute.xlu0 1
    %1045 = vperm.xlu0 %1044, %v796
    %v1046 = vpop.permute.xlu0 %1045
    %1048 = vset.pattern.permute.xlu0 1
    %1049 = vperm.xlu0 %1048, %v797
    %v1050 = vpop.permute.xlu0 %1049
    %1052 = vset.pattern.permute.xlu0 1
    %1053 = vperm.xlu0 %1052, %v798
    %v1054 = vpop.permute.xlu0 %1053
    %1056 = vset.pattern.permute.xlu0 1
    %1057 = vperm.xlu0 %1056, %v799
    %v1058 = vpop.permute.xlu0 %1057
    %1060 = vset.pattern.permute.xlu0 1
    %1061 = vperm.xlu0 %1060, %v800
    %v1062 = vpop.permute.xlu0 %1061
    %1064 = vset.pattern.permute.xlu0 1
    %1065 = vperm.xlu0 %1064, %v801
    %v1066 = vpop.permute.xlu0 %1065
    %1068 = vset.pattern.permute.xlu0 1
    %1069 = vperm.xlu0 %1068, %v802
    %v1070 = vpop.permute.xlu0 %1069
    %1072 = vset.pattern.permute.xlu0 1
    %1073 = vperm.xlu0 %1072, %v803
    %v1074 = vpop.permute.xlu0 %1073
    %1076 = vset.pattern.permute.xlu0 1
    %1077 = vperm.xlu0 %1076, %v804
    %v1078 = vpop.permute.xlu0 %1077
    %1080 = vset.pattern.permute.xlu0 1
    %1081 = vperm.xlu0 %1080, %v805
    %v1082 = vpop.permute.xlu0 %1081
    %1084 = vset.pattern.permute.xlu0 1
    %1085 = vperm.xlu0 %1084, %v806
    %v1086 = vpop.permute.xlu0 %1085
    %1088 = vset.pattern.permute.xlu0 1
    %1089 = vperm.xlu0 %1088, %v807
    %v1090 = vpop.permute.xlu0 %1089
    %1092 = vset.pattern.permute.xlu0 1
    %1093 = vperm.xlu0 %1092, %v808
    %v1094 = vpop.permute.xlu0 %1093
    %1096 = vset.pattern.permute.xlu0 1
    %1097 = vperm.xlu0 %1096, %v809
    %v1098 = vpop.permute.xlu0 %1097
    %1100 = vset.pattern.permute.xlu0 1
    %1101 = vperm.xlu0 %1100, %v810
    %v1102 = vpop.permute.xlu0 %1101
    %1104 = vset.pattern.permute.xlu0 1
    %1105 = vperm.xlu0 %1104, %v811
    %v1106 = vpop.permute.xlu0 %1105
    %1108 = vset.pattern.permute.xlu0 1
    %1109 = vperm.xlu0 %1108, %v812
    %v1110 = vpop.permute.xlu0 %1109
    %1112 = vset.pattern.permute.xlu0 1
    %1113 = vperm.xlu0 %1112, %v813
    %v1114 = vpop.permute.xlu0 %1113
    %1116 = vset.pattern.permute.xlu0 1
    %1117 = vperm.xlu0 %1116, %v814
    %v1118 = vpop.permute.xlu0 %1117
    %1120 = vset.pattern.permute.xlu0 1
    %1121 = vperm.xlu0 %1120, %v815
    %v1122 = vpop.permute.xlu0 %1121
    %1124 = vset.pattern.permute.xlu0 1
    %1125 = vperm.xlu0 %1124, %v816
    %v1126 = vpop.permute.xlu0 %1125
    %1128 = vset.pattern.permute.xlu0 1
    %1129 = vperm.xlu0 %1128, %v817
    %v1130 = vpop.permute.xlu0 %1129
    %1132 = vset.pattern.permute.xlu0 1
    %1133 = vperm.xlu0 %1132, %v818
    %v1134 = vpop.permute.xlu0 %1133
    %1136 = vset.pattern.permute.xlu0 1
    %1137 = vperm.xlu0 %1136, %v819
    %v1138 = vpop.permute.xlu0 %1137
    %v1140 = vmul.f32 %v1014, %v646
    %v1141 = vmul.f32 %v1018, %v647
    %v1142 = vmul.f32 %v1022, %v648
    %v1143 = vmul.f32 %v1026, %v649
    %v1144 = vmul.f32 %v1030, %v650
    %v1145 = vmul.f32 %v1034, %v651
    %v1146 = vmul.f32 %v1038, %v652
    %v1147 = vmul.f32 %v1042, %v653
    %v1148 = vmul.f32 %v1046, %v654
    %v1149 = vmul.f32 %v1050, %v655
    %v1150 = vmul.f32 %v1054, %v656
    %v1151 = vmul.f32 %v1058, %v657
    %v1152 = vmul.f32 %v1062, %v658
    %v1153 = vmul.f32 %v1066, %v659
    %v1154 = vmul.f32 %v1070, %v660
    %v1155 = vmul.f32 %v1074, %v661
    %v1156 = vmul.f32 %v1078, %v662
    %v1157 = vmul.f32 %v1082, %v663
    %v1158 = vmul.f32 %v1086, %v664
    %v1159 = vmul.f32 %v1090, %v665
    %v1160 = vmul.f32 %v1094, %v666
    %v1161 = vmul.f32 %v1098, %v667
    %v1162 = vmul.f32 %v1102, %v668
    %v1163 = vmul.f32 %v1106, %v669
    %v1164 = vmul.f32 %v1110, %v670
    %v1165 = vmul.f32 %v1114, %v671
    %v1166 = vmul.f32 %v1118, %v672
    %v1167 = vmul.f32 %v1122, %v673
    %v1168 = vmul.f32 %v1126, %v674
    %v1169 = vmul.f32 %v1130, %v675
    %v1170 = vmul.f32 %v1134, %v676
    %v1171 = vmul.f32 %v1138, %v677
    %1172 = vset.pattern.permute.xlu0 2
    %1173 = vperm.xlu0 %1172, %v788
    %v1174 = vpop.permute.xlu0 %1173
    %1176 = vset.pattern.permute.xlu0 2
    %1177 = vperm.xlu0 %1176, %v789
    %v1178 = vpop.permute.xlu0 %1177
    %1180 = vset.pattern.permute.xlu0 2
    %1181 = vperm.xlu0 %1180, %v790
    %v1182 = vpop.permute.xlu0 %1181
    %1184 = vset.pattern.permute.xlu0 2
    %1185 = vperm.xlu0 %1184, %v791
    %v1186 = vpop.permute.xlu0 %1185
    %1188 = vset.pattern.permute.xlu0 2
    %1189 = vperm.xlu0 %1188, %v792
    %v1190 = vpop.permute.xlu0 %1189
    %1192 = vset.pattern.permute.xlu0 2
    %1193 = vperm.xlu0 %1192, %v793
    %v1194 = vpop.permute.xlu0 %1193
    %1196 = vset.pattern.permute.xlu0 2
    %1197 = vperm.xlu0 %1196, %v794
    %v1198 = vpop.permute.xlu0 %1197
    %1200 = vset.pattern.permute.xlu0 2
    %1201 = vperm.xlu0 %1200, %v795
    %v1202 = vpop.permute.xlu0 %1201
    %1204 = vset.pattern.permute.xlu0 2
    %1205 = vperm.xlu0 %1204, %v796
    %v1206 = vpop.permute.xlu0 %1205
    %1208 = vset.pattern.permute.xlu0 2
    %1209 = vperm.xlu0 %1208, %v797
    %v1210 = vpop.permute.xlu0 %1209
    %1212 = vset.pattern.permute.xlu0 2
    %1213 = vperm.xlu0 %1212, %v798
    %v1214 = vpop.permute.xlu0 %1213
    %1216 = vset.pattern.permute.xlu0 2
    %1217 = vperm.xlu0 %1216, %v799
    %v1218 = vpop.permute.xlu0 %1217
    %1220 = vset.pattern.permute.xlu0 2
    %1221 = vperm.xlu0 %1220, %v800
    %v1222 = vpop.permute.xlu0 %1221
    %1224 = vset.pattern.permute.xlu0 2
    %1225 = vperm.xlu0 %1224, %v801
    %v1226 = vpop.permute.xlu0 %1225
    %1228 = vset.pattern.permute.xlu0 2
    %1229 = vperm.xlu0 %1228, %v802
    %v1230 = vpop.permute.xlu0 %1229
    %1232 = vset.pattern.permute.xlu0 2
    %1233 = vperm.xlu0 %1232, %v803
    %v1234 = vpop.permute.xlu0 %1233
    %1236 = vset.pattern.permute.xlu0 2
    %1237 = vperm.xlu0 %1236, %v804
    %v1238 = vpop.permute.xlu0 %1237
    %1240 = vset.pattern.permute.xlu0 2
    %1241 = vperm.xlu0 %1240, %v805
    %v1242 = vpop.permute.xlu0 %1241
    %1244 = vset.pattern.permute.xlu0 2
    %1245 = vperm.xlu0 %1244, %v806
    %v1246 = vpop.permute.xlu0 %1245
    %1248 = vset.pattern.permute.xlu0 2
    %1249 = vperm.xlu0 %1248, %v807
    %v1250 = vpop.permute.xlu0 %1249
    %1252 = vset.pattern.permute.xlu0 2
    %1253 = vperm.xlu0 %1252, %v808
    %v1254 = vpop.permute.xlu0 %1253
    %1256 = vset.pattern.permute.xlu0 2
    %1257 = vperm.xlu0 %1256, %v809
    %v1258 = vpop.permute.xlu0 %1257
    %1260 = vset.pattern.permute.xlu0 2
    %1261 = vperm.xlu0 %1260, %v810
    %v1262 = vpop.permute.xlu0 %1261
    %1264 = vset.pattern.permute.xlu0 2
    %1265 = vperm.xlu0 %1264, %v811
    %v1266 = vpop.permute.xlu0 %1265
    %1268 = vset.pattern.permute.xlu0 2
    %1269 = vperm.xlu0 %1268, %v812
    %v1270 = vpop.permute.xlu0 %1269
    %1272 = vset.pattern.permute.xlu0 2
    %1273 = vperm.xlu0 %1272, %v813
    %v1274 = vpop.permute.xlu0 %1273
    %1276 = vset.pattern.permute.xlu0 2
    %1277 = vperm.xlu0 %1276, %v814
    %v1278 = vpop.permute.xlu0 %1277
    %1280 = vset.pattern.permute.xlu0 2
    %1281 = vperm.xlu0 %1280, %v815
    %v1282 = vpop.permute.xlu0 %1281
    %1284 = vset.pattern.permute.xlu0 2
    %1285 = vperm.xlu0 %1284, %v816
    %v1286 = vpop.permute.xlu0 %1285
    %1288 = vset.pattern.permute.xlu0 2
    %1289 = vperm.xlu0 %1288, %v817
    %v1290 = vpop.permute.xlu0 %1289
    %1292 = vset.pattern.permute.xlu0 2
    %1293 = vperm.xlu0 %1292, %v818
    %v1294 = vpop.permute.xlu0 %1293
    %1296 = vset.pattern.permute.xlu0 2
    %1297 = vperm.xlu0 %1296, %v819
    %v1298 = vpop.permute.xlu0 %1297
    %v1300 = vmul.f32 %v1174, %v646
    %v1301 = vmul.f32 %v1178, %v647
    %v1302 = vmul.f32 %v1182, %v648
    %v1303 = vmul.f32 %v1186, %v649
    %v1304 = vmul.f32 %v1190, %v650
    %v1305 = vmul.f32 %v1194, %v651
    %v1306 = vmul.f32 %v1198, %v652
    %v1307 = vmul.f32 %v1202, %v653
    %v1308 = vmul.f32 %v1206, %v654
    %v1309 = vmul.f32 %v1210, %v655
    %v1310 = vmul.f32 %v1214, %v656
    %v1311 = vmul.f32 %v1218, %v657
    %v1312 = vmul.f32 %v1222, %v658
    %v1313 = vmul.f32 %v1226, %v659
    %v1314 = vmul.f32 %v1230, %v660
    %v1315 = vmul.f32 %v1234, %v661
    %v1316 = vmul.f32 %v1238, %v662
    %v1317 = vmul.f32 %v1242, %v663
    %v1318 = vmul.f32 %v1246, %v664
    %v1319 = vmul.f32 %v1250, %v665
    %v1320 = vmul.f32 %v1254, %v666
    %v1321 = vmul.f32 %v1258, %v667
    %v1322 = vmul.f32 %v1262, %v668
    %v1323 = vmul.f32 %v1266, %v669
    %v1324 = vmul.f32 %v1270, %v670
    %v1325 = vmul.f32 %v1274, %v671
    %v1326 = vmul.f32 %v1278, %v672
    %v1327 = vmul.f32 %v1282, %v673
    %v1328 = vmul.f32 %v1286, %v674
    %v1329 = vmul.f32 %v1290, %v675
    %v1330 = vmul.f32 %v1294, %v676
    %v1331 = vmul.f32 %v1298, %v677
    %1332 = vset.pattern.permute.xlu0 3
    %1333 = vperm.xlu0 %1332, %v788
    %v1334 = vpop.permute.xlu0 %1333
    %1336 = vset.pattern.permute.xlu0 3
    %1337 = vperm.xlu0 %1336, %v789
    %v1338 = vpop.permute.xlu0 %1337
    %1340 = vset.pattern.permute.xlu0 3
    %1341 = vperm.xlu0 %1340, %v790
    %v1342 = vpop.permute.xlu0 %1341
    %1344 = vset.pattern.permute.xlu0 3
    %1345 = vperm.xlu0 %1344, %v791
    %v1346 = vpop.permute.xlu0 %1345
    %1348 = vset.pattern.permute.xlu0 3
    %1349 = vperm.xlu0 %1348, %v792
    %v1350 = vpop.permute.xlu0 %1349
    %1352 = vset.pattern.permute.xlu0 3
    %1353 = vperm.xlu0 %1352, %v793
    %v1354 = vpop.permute.xlu0 %1353
    %1356 = vset.pattern.permute.xlu0 3
    %1357 = vperm.xlu0 %1356, %v794
    %v1358 = vpop.permute.xlu0 %1357
    %1360 = vset.pattern.permute.xlu0 3
    %1361 = vperm.xlu0 %1360, %v795
    %v1362 = vpop.permute.xlu0 %1361
    %1364 = vset.pattern.permute.xlu0 3
    %1365 = vperm.xlu0 %1364, %v796
    %v1366 = vpop.permute.xlu0 %1365
    %1368 = vset.pattern.permute.xlu0 3
    %1369 = vperm.xlu0 %1368, %v797
    %v1370 = vpop.permute.xlu0 %1369
    %1372 = vset.pattern.permute.xlu0 3
    %1373 = vperm.xlu0 %1372, %v798
    %v1374 = vpop.permute.xlu0 %1373
    %1376 = vset.pattern.permute.xlu0 3
    %1377 = vperm.xlu0 %1376, %v799
    %v1378 = vpop.permute.xlu0 %1377
    %1380 = vset.pattern.permute.xlu0 3
    %1381 = vperm.xlu0 %1380, %v800
    %v1382 = vpop.permute.xlu0 %1381
    %1384 = vset.pattern.permute.xlu0 3
    %1385 = vperm.xlu0 %1384, %v801
    %v1386 = vpop.permute.xlu0 %1385
    %1388 = vset.pattern.permute.xlu0 3
    %1389 = vperm.xlu0 %1388, %v802
    %v1390 = vpop.permute.xlu0 %1389
    %1392 = vset.pattern.permute.xlu0 3
    %1393 = vperm.xlu0 %1392, %v803
    %v1394 = vpop.permute.xlu0 %1393
    %1396 = vset.pattern.permute.xlu0 3
    %1397 = vperm.xlu0 %1396, %v804
    %v1398 = vpop.permute.xlu0 %1397
    %1400 = vset.pattern.permute.xlu0 3
    %1401 = vperm.xlu0 %1400, %v805
    %v1402 = vpop.permute.xlu0 %1401
    %1404 = vset.pattern.permute.xlu0 3
    %1405 = vperm.xlu0 %1404, %v806
    %v1406 = vpop.permute.xlu0 %1405
    %1408 = vset.pattern.permute.xlu0 3
    %1409 = vperm.xlu0 %1408, %v807
    %v1410 = vpop.permute.xlu0 %1409
    %1412 = vset.pattern.permute.xlu0 3
    %1413 = vperm.xlu0 %1412, %v808
    %v1414 = vpop.permute.xlu0 %1413
    %1416 = vset.pattern.permute.xlu0 3
    %1417 = vperm.xlu0 %1416, %v809
    %v1418 = vpop.permute.xlu0 %1417
    %1420 = vset.pattern.permute.xlu0 3
    %1421 = vperm.xlu0 %1420, %v810
    %v1422 = vpop.permute.xlu0 %1421
    %1424 = vset.pattern.permute.xlu0 3
    %1425 = vperm.xlu0 %1424, %v811
    %v1426 = vpop.permute.xlu0 %1425
    %1428 = vset.pattern.permute.xlu0 3
    %1429 = vperm.xlu0 %1428, %v812
    %v1430 = vpop.permute.xlu0 %1429
    %1432 = vset.pattern.permute.xlu0 3
    %1433 = vperm.xlu0 %1432, %v813
    %v1434 = vpop.permute.xlu0 %1433
    %1436 = vset.pattern.permute.xlu0 3
    %1437 = vperm.xlu0 %1436, %v814
    %v1438 = vpop.permute.xlu0 %1437
    %1440 = vset.pattern.permute.xlu0 3
    %1441 = vperm.xlu0 %1440, %v815
    %v1442 = vpop.permute.xlu0 %1441
    %1444 = vset.pattern.permute.xlu0 3
    %1445 = vperm.xlu0 %1444, %v816
    %v1446 = vpop.permute.xlu0 %1445
    %1448 = vset.pattern.permute.xlu0 3
    %1449 = vperm.xlu0 %1448, %v817
    %v1450 = vpop.permute.xlu0 %1449
    %1452 = vset.pattern.permute.xlu0 3
    %1453 = vperm.xlu0 %1452, %v818
    %v1454 = vpop.permute.xlu0 %1453
    %1456 = vset.pattern.permute.xlu0 3
    %1457 = vperm.xlu0 %1456, %v819
    %v1458 = vpop.permute.xlu0 %1457
    %v1460 = vmul.f32 %v1334, %v646
    %v1461 = vmul.f32 %v1338, %v647
    %v1462 = vmul.f32 %v1342, %v648
    %v1463 = vmul.f32 %v1346, %v649
    %v1464 = vmul.f32 %v1350, %v650
    %v1465 = vmul.f32 %v1354, %v651
    %v1466 = vmul.f32 %v1358, %v652
    %v1467 = vmul.f32 %v1362, %v653
    %v1468 = vmul.f32 %v1366, %v654
    %v1469 = vmul.f32 %v1370, %v655
    %v1470 = vmul.f32 %v1374, %v656
    %v1471 = vmul.f32 %v1378, %v657
    %v1472 = vmul.f32 %v1382, %v658
    %v1473 = vmul.f32 %v1386, %v659
    %v1474 = vmul.f32 %v1390, %v660
    %v1475 = vmul.f32 %v1394, %v661
    %v1476 = vmul.f32 %v1398, %v662
    %v1477 = vmul.f32 %v1402, %v663
    %v1478 = vmul.f32 %v1406, %v664
    %v1479 = vmul.f32 %v1410, %v665
    %v1480 = vmul.f32 %v1414, %v666
    %v1481 = vmul.f32 %v1418, %v667
    %v1482 = vmul.f32 %v1422, %v668
    %v1483 = vmul.f32 %v1426, %v669
    %v1484 = vmul.f32 %v1430, %v670
    %v1485 = vmul.f32 %v1434, %v671
    %v1486 = vmul.f32 %v1438, %v672
    %v1487 = vmul.f32 %v1442, %v673
    %v1488 = vmul.f32 %v1446, %v674
    %v1489 = vmul.f32 %v1450, %v675
    %v1490 = vmul.f32 %v1454, %v676
    %v1491 = vmul.f32 %v1458, %v677
    %1492 = vset.pattern.permute.xlu0 4
    %1493 = vperm.xlu0 %1492, %v788
    %v1494 = vpop.permute.xlu0 %1493
    %1496 = vset.pattern.permute.xlu0 4
    %1497 = vperm.xlu0 %1496, %v789
    %v1498 = vpop.permute.xlu0 %1497
    %1500 = vset.pattern.permute.xlu0 4
    %1501 = vperm.xlu0 %1500, %v790
    %v1502 = vpop.permute.xlu0 %1501
    %1504 = vset.pattern.permute.xlu0 4
    %1505 = vperm.xlu0 %1504, %v791
    %v1506 = vpop.permute.xlu0 %1505
    %1508 = vset.pattern.permute.xlu0 4
    %1509 = vperm.xlu0 %1508, %v792
    %v1510 = vpop.permute.xlu0 %1509
    %1512 = vset.pattern.permute.xlu0 4
    %1513 = vperm.xlu0 %1512, %v793
    %v1514 = vpop.permute.xlu0 %1513
    %1516 = vset.pattern.permute.xlu0 4
    %1517 = vperm.xlu0 %1516, %v794
    %v1518 = vpop.permute.xlu0 %1517
    %1520 = vset.pattern.permute.xlu0 4
    %1521 = vperm.xlu0 %1520, %v795
    %v1522 = vpop.permute.xlu0 %1521
    %1524 = vset.pattern.permute.xlu0 4
    %1525 = vperm.xlu0 %1524, %v796
    %v1526 = vpop.permute.xlu0 %1525
    %1528 = vset.pattern.permute.xlu0 4
    %1529 = vperm.xlu0 %1528, %v797
    %v1530 = vpop.permute.xlu0 %1529
    %1532 = vset.pattern.permute.xlu0 4
    %1533 = vperm.xlu0 %1532, %v798
    %v1534 = vpop.permute.xlu0 %1533
    %1536 = vset.pattern.permute.xlu0 4
    %1537 = vperm.xlu0 %1536, %v799
    %v1538 = vpop.permute.xlu0 %1537
    %1540 = vset.pattern.permute.xlu0 4
    %1541 = vperm.xlu0 %1540, %v800
    %v1542 = vpop.permute.xlu0 %1541
    %1544 = vset.pattern.permute.xlu0 4
    %1545 = vperm.xlu0 %1544, %v801
    %v1546 = vpop.permute.xlu0 %1545
    %1548 = vset.pattern.permute.xlu0 4
    %1549 = vperm.xlu0 %1548, %v802
    %v1550 = vpop.permute.xlu0 %1549
    %1552 = vset.pattern.permute.xlu0 4
    %1553 = vperm.xlu0 %1552, %v803
    %v1554 = vpop.permute.xlu0 %1553
    %1556 = vset.pattern.permute.xlu0 4
    %1557 = vperm.xlu0 %1556, %v804
    %v1558 = vpop.permute.xlu0 %1557
    %1560 = vset.pattern.permute.xlu0 4
    %1561 = vperm.xlu0 %1560, %v805
    %v1562 = vpop.permute.xlu0 %1561
    %1564 = vset.pattern.permute.xlu0 4
    %1565 = vperm.xlu0 %1564, %v806
    %v1566 = vpop.permute.xlu0 %1565
    %1568 = vset.pattern.permute.xlu0 4
    %1569 = vperm.xlu0 %1568, %v807
    %v1570 = vpop.permute.xlu0 %1569
    %1572 = vset.pattern.permute.xlu0 4
    %1573 = vperm.xlu0 %1572, %v808
    %v1574 = vpop.permute.xlu0 %1573
    %1576 = vset.pattern.permute.xlu0 4
    %1577 = vperm.xlu0 %1576, %v809
    %v1578 = vpop.permute.xlu0 %1577
    %1580 = vset.pattern.permute.xlu0 4
    %1581 = vperm.xlu0 %1580, %v810
    %v1582 = vpop.permute.xlu0 %1581
    %1584 = vset.pattern.permute.xlu0 4
    %1585 = vperm.xlu0 %1584, %v811
    %v1586 = vpop.permute.xlu0 %1585
    %1588 = vset.pattern.permute.xlu0 4
    %1589 = vperm.xlu0 %1588, %v812
    %v1590 = vpop.permute.xlu0 %1589
    %1592 = vset.pattern.permute.xlu0 4
    %1593 = vperm.xlu0 %1592, %v813
    %v1594 = vpop.permute.xlu0 %1593
    %1596 = vset.pattern.permute.xlu0 4
    %1597 = vperm.xlu0 %1596, %v814
    %v1598 = vpop.permute.xlu0 %1597
    %1600 = vset.pattern.permute.xlu0 4
    %1601 = vperm.xlu0 %1600, %v815
    %v1602 = vpop.permute.xlu0 %1601
    %1604 = vset.pattern.permute.xlu0 4
    %1605 = vperm.xlu0 %1604, %v816
    %v1606 = vpop.permute.xlu0 %1605
    %1608 = vset.pattern.permute.xlu0 4
    %1609 = vperm.xlu0 %1608, %v817
    %v1610 = vpop.permute.xlu0 %1609
    %1612 = vset.pattern.permute.xlu0 4
    %1613 = vperm.xlu0 %1612, %v818
    %v1614 = vpop.permute.xlu0 %1613
    %1616 = vset.pattern.permute.xlu0 4
    %1617 = vperm.xlu0 %1616, %v819
    %v1618 = vpop.permute.xlu0 %1617
    %v1620 = vmul.f32 %v1494, %v646
    %v1621 = vmul.f32 %v1498, %v647
    %v1622 = vmul.f32 %v1502, %v648
    %v1623 = vmul.f32 %v1506, %v649
    %v1624 = vmul.f32 %v1510, %v650
    %v1625 = vmul.f32 %v1514, %v651
    %v1626 = vmul.f32 %v1518, %v652
    %v1627 = vmul.f32 %v1522, %v653
    %v1628 = vmul.f32 %v1526, %v654
    %v1629 = vmul.f32 %v1530, %v655
    %v1630 = vmul.f32 %v1534, %v656
    %v1631 = vmul.f32 %v1538, %v657
    %v1632 = vmul.f32 %v1542, %v658
    %v1633 = vmul.f32 %v1546, %v659
    %v1634 = vmul.f32 %v1550, %v660
    %v1635 = vmul.f32 %v1554, %v661
    %v1636 = vmul.f32 %v1558, %v662
    %v1637 = vmul.f32 %v1562, %v663
    %v1638 = vmul.f32 %v1566, %v664
    %v1639 = vmul.f32 %v1570, %v665
    %v1640 = vmul.f32 %v1574, %v666
    %v1641 = vmul.f32 %v1578, %v667
    %v1642 = vmul.f32 %v1582, %v668
    %v1643 = vmul.f32 %v1586, %v669
    %v1644 = vmul.f32 %v1590, %v670
    %v1645 = vmul.f32 %v1594, %v671
    %v1646 = vmul.f32 %v1598, %v672
    %v1647 = vmul.f32 %v1602, %v673
    %v1648 = vmul.f32 %v1606, %v674
    %v1649 = vmul.f32 %v1610, %v675
    %v1650 = vmul.f32 %v1614, %v676
    %v1651 = vmul.f32 %v1618, %v677
    %1652 = vset.pattern.permute.xlu0 5
    %1653 = vperm.xlu0 %1652, %v788
    %v1654 = vpop.permute.xlu0 %1653
    %1656 = vset.pattern.permute.xlu0 5
    %1657 = vperm.xlu0 %1656, %v789
    %v1658 = vpop.permute.xlu0 %1657
    %1660 = vset.pattern.permute.xlu0 5
    %1661 = vperm.xlu0 %1660, %v790
    %v1662 = vpop.permute.xlu0 %1661
    %1664 = vset.pattern.permute.xlu0 5
    %1665 = vperm.xlu0 %1664, %v791
    %v1666 = vpop.permute.xlu0 %1665
    %1668 = vset.pattern.permute.xlu0 5
    %1669 = vperm.xlu0 %1668, %v792
    %v1670 = vpop.permute.xlu0 %1669
    %1672 = vset.pattern.permute.xlu0 5
    %1673 = vperm.xlu0 %1672, %v793
    %v1674 = vpop.permute.xlu0 %1673
    %1676 = vset.pattern.permute.xlu0 5
    %1677 = vperm.xlu0 %1676, %v794
    %v1678 = vpop.permute.xlu0 %1677
    %1680 = vset.pattern.permute.xlu0 5
    %1681 = vperm.xlu0 %1680, %v795
    %v1682 = vpop.permute.xlu0 %1681
    %1684 = vset.pattern.permute.xlu0 5
    %1685 = vperm.xlu0 %1684, %v796
    %v1686 = vpop.permute.xlu0 %1685
    %1688 = vset.pattern.permute.xlu0 5
    %1689 = vperm.xlu0 %1688, %v797
    %v1690 = vpop.permute.xlu0 %1689
    %1692 = vset.pattern.permute.xlu0 5
    %1693 = vperm.xlu0 %1692, %v798
    %v1694 = vpop.permute.xlu0 %1693
    %1696 = vset.pattern.permute.xlu0 5
    %1697 = vperm.xlu0 %1696, %v799
    %v1698 = vpop.permute.xlu0 %1697
    %1700 = vset.pattern.permute.xlu0 5
    %1701 = vperm.xlu0 %1700, %v800
    %v1702 = vpop.permute.xlu0 %1701
    %1704 = vset.pattern.permute.xlu0 5
    %1705 = vperm.xlu0 %1704, %v801
    %v1706 = vpop.permute.xlu0 %1705
    %1708 = vset.pattern.permute.xlu0 5
    %1709 = vperm.xlu0 %1708, %v802
    %v1710 = vpop.permute.xlu0 %1709
    %1712 = vset.pattern.permute.xlu0 5
    %1713 = vperm.xlu0 %1712, %v803
    %v1714 = vpop.permute.xlu0 %1713
    %1716 = vset.pattern.permute.xlu0 5
    %1717 = vperm.xlu0 %1716, %v804
    %v1718 = vpop.permute.xlu0 %1717
    %1720 = vset.pattern.permute.xlu0 5
    %1721 = vperm.xlu0 %1720, %v805
    %v1722 = vpop.permute.xlu0 %1721
    %1724 = vset.pattern.permute.xlu0 5
    %1725 = vperm.xlu0 %1724, %v806
    %v1726 = vpop.permute.xlu0 %1725
    %1728 = vset.pattern.permute.xlu0 5
    %1729 = vperm.xlu0 %1728, %v807
    %v1730 = vpop.permute.xlu0 %1729
    %1732 = vset.pattern.permute.xlu0 5
    %1733 = vperm.xlu0 %1732, %v808
    %v1734 = vpop.permute.xlu0 %1733
    %1736 = vset.pattern.permute.xlu0 5
    %1737 = vperm.xlu0 %1736, %v809
    %v1738 = vpop.permute.xlu0 %1737
    %1740 = vset.pattern.permute.xlu0 5
    %1741 = vperm.xlu0 %1740, %v810
    %v1742 = vpop.permute.xlu0 %1741
    %1744 = vset.pattern.permute.xlu0 5
    %1745 = vperm.xlu0 %1744, %v811
    %v1746 = vpop.permute.xlu0 %1745
    %1748 = vset.pattern.permute.xlu0 5
    %1749 = vperm.xlu0 %1748, %v812
    %v1750 = vpop.permute.xlu0 %1749
    %1752 = vset.pattern.permute.xlu0 5
    %1753 = vperm.xlu0 %1752, %v813
    %v1754 = vpop.permute.xlu0 %1753
    %1756 = vset.pattern.permute.xlu0 5
    %1757 = vperm.xlu0 %1756, %v814
    %v1758 = vpop.permute.xlu0 %1757
    %1760 = vset.pattern.permute.xlu0 5
    %1761 = vperm.xlu0 %1760, %v815
    %v1762 = vpop.permute.xlu0 %1761
    %1764 = vset.pattern.permute.xlu0 5
    %1765 = vperm.xlu0 %1764, %v816
    %v1766 = vpop.permute.xlu0 %1765
    %1768 = vset.pattern.permute.xlu0 5
    %1769 = vperm.xlu0 %1768, %v817
    %v1770 = vpop.permute.xlu0 %1769
    %1772 = vset.pattern.permute.xlu0 5
    %1773 = vperm.xlu0 %1772, %v818
    %v1774 = vpop.permute.xlu0 %1773
    %1776 = vset.pattern.permute.xlu0 5
    %1777 = vperm.xlu0 %1776, %v819
    %v1778 = vpop.permute.xlu0 %1777
    %v1780 = vmul.f32 %v1654, %v646
    %v1781 = vmul.f32 %v1658, %v647
    %v1782 = vmul.f32 %v1662, %v648
    %v1783 = vmul.f32 %v1666, %v649
    %v1784 = vmul.f32 %v1670, %v650
    %v1785 = vmul.f32 %v1674, %v651
    %v1786 = vmul.f32 %v1678, %v652
    %v1787 = vmul.f32 %v1682, %v653
    %v1788 = vmul.f32 %v1686, %v654
    %v1789 = vmul.f32 %v1690, %v655
    %v1790 = vmul.f32 %v1694, %v656
    %v1791 = vmul.f32 %v1698, %v657
    %v1792 = vmul.f32 %v1702, %v658
    %v1793 = vmul.f32 %v1706, %v659
    %v1794 = vmul.f32 %v1710, %v660
    %v1795 = vmul.f32 %v1714, %v661
    %v1796 = vmul.f32 %v1718, %v662
    %v1797 = vmul.f32 %v1722, %v663
    %v1798 = vmul.f32 %v1726, %v664
    %v1799 = vmul.f32 %v1730, %v665
    %v1800 = vmul.f32 %v1734, %v666
    %v1801 = vmul.f32 %v1738, %v667
    %v1802 = vmul.f32 %v1742, %v668
    %v1803 = vmul.f32 %v1746, %v669
    %v1804 = vmul.f32 %v1750, %v670
    %v1805 = vmul.f32 %v1754, %v671
    %v1806 = vmul.f32 %v1758, %v672
    %v1807 = vmul.f32 %v1762, %v673
    %v1808 = vmul.f32 %v1766, %v674
    %v1809 = vmul.f32 %v1770, %v675
    %v1810 = vmul.f32 %v1774, %v676
    %v1811 = vmul.f32 %v1778, %v677
    %1812 = vset.pattern.permute.xlu0 6
    %1813 = vperm.xlu0 %1812, %v788
    %v1814 = vpop.permute.xlu0 %1813
    %1816 = vset.pattern.permute.xlu0 6
    %1817 = vperm.xlu0 %1816, %v789
    %v1818 = vpop.permute.xlu0 %1817
    %1820 = vset.pattern.permute.xlu0 6
    %1821 = vperm.xlu0 %1820, %v790
    %v1822 = vpop.permute.xlu0 %1821
    %1824 = vset.pattern.permute.xlu0 6
    %1825 = vperm.xlu0 %1824, %v791
    %v1826 = vpop.permute.xlu0 %1825
    %1828 = vset.pattern.permute.xlu0 6
    %1829 = vperm.xlu0 %1828, %v792
    %v1830 = vpop.permute.xlu0 %1829
    %1832 = vset.pattern.permute.xlu0 6
    %1833 = vperm.xlu0 %1832, %v793
    %v1834 = vpop.permute.xlu0 %1833
    %1836 = vset.pattern.permute.xlu0 6
    %1837 = vperm.xlu0 %1836, %v794
    %v1838 = vpop.permute.xlu0 %1837
    %1840 = vset.pattern.permute.xlu0 6
    %1841 = vperm.xlu0 %1840, %v795
    %v1842 = vpop.permute.xlu0 %1841
    %1844 = vset.pattern.permute.xlu0 6
    %1845 = vperm.xlu0 %1844, %v796
    %v1846 = vpop.permute.xlu0 %1845
    %1848 = vset.pattern.permute.xlu0 6
    %1849 = vperm.xlu0 %1848, %v797
    %v1850 = vpop.permute.xlu0 %1849
    %1852 = vset.pattern.permute.xlu0 6
    %1853 = vperm.xlu0 %1852, %v798
    %v1854 = vpop.permute.xlu0 %1853
    %1856 = vset.pattern.permute.xlu0 6
    %1857 = vperm.xlu0 %1856, %v799
    %v1858 = vpop.permute.xlu0 %1857
    %1860 = vset.pattern.permute.xlu0 6
    %1861 = vperm.xlu0 %1860, %v800
    %v1862 = vpop.permute.xlu0 %1861
    %1864 = vset.pattern.permute.xlu0 6
    %1865 = vperm.xlu0 %1864, %v801
    %v1866 = vpop.permute.xlu0 %1865
    %1868 = vset.pattern.permute.xlu0 6
    %1869 = vperm.xlu0 %1868, %v802
    %v1870 = vpop.permute.xlu0 %1869
    %1872 = vset.pattern.permute.xlu0 6
    %1873 = vperm.xlu0 %1872, %v803
    %v1874 = vpop.permute.xlu0 %1873
    %1876 = vset.pattern.permute.xlu0 6
    %1877 = vperm.xlu0 %1876, %v804
    %v1878 = vpop.permute.xlu0 %1877
    %1880 = vset.pattern.permute.xlu0 6
    %1881 = vperm.xlu0 %1880, %v805
    %v1882 = vpop.permute.xlu0 %1881
    %1884 = vset.pattern.permute.xlu0 6
    %1885 = vperm.xlu0 %1884, %v806
    %v1886 = vpop.permute.xlu0 %1885
    %1888 = vset.pattern.permute.xlu0 6
    %1889 = vperm.xlu0 %1888, %v807
    %v1890 = vpop.permute.xlu0 %1889
    %1892 = vset.pattern.permute.xlu0 6
    %1893 = vperm.xlu0 %1892, %v808
    %v1894 = vpop.permute.xlu0 %1893
    %1896 = vset.pattern.permute.xlu0 6
    %1897 = vperm.xlu0 %1896, %v809
    %v1898 = vpop.permute.xlu0 %1897
    %1900 = vset.pattern.permute.xlu0 6
    %1901 = vperm.xlu0 %1900, %v810
    %v1902 = vpop.permute.xlu0 %1901
    %1904 = vset.pattern.permute.xlu0 6
    %1905 = vperm.xlu0 %1904, %v811
    %v1906 = vpop.permute.xlu0 %1905
    %1908 = vset.pattern.permute.xlu0 6
    %1909 = vperm.xlu0 %1908, %v812
    %v1910 = vpop.permute.xlu0 %1909
    %1912 = vset.pattern.permute.xlu0 6
    %1913 = vperm.xlu0 %1912, %v813
    %v1914 = vpop.permute.xlu0 %1913
    %1916 = vset.pattern.permute.xlu0 6
    %1917 = vperm.xlu0 %1916, %v814
    %v1918 = vpop.permute.xlu0 %1917
    %1920 = vset.pattern.permute.xlu0 6
    %1921 = vperm.xlu0 %1920, %v815
    %v1922 = vpop.permute.xlu0 %1921
    %1924 = vset.pattern.permute.xlu0 6
    %1925 = vperm.xlu0 %1924, %v816
    %v1926 = vpop.permute.xlu0 %1925
    %1928 = vset.pattern.permute.xlu0 6
    %1929 = vperm.xlu0 %1928, %v817
    %v1930 = vpop.permute.xlu0 %1929
    %1932 = vset.pattern.permute.xlu0 6
    %1933 = vperm.xlu0 %1932, %v818
    %v1934 = vpop.permute.xlu0 %1933
    %1936 = vset.pattern.permute.xlu0 6
    %1937 = vperm.xlu0 %1936, %v819
    %v1938 = vpop.permute.xlu0 %1937
    %v1940 = vmul.f32 %v1814, %v646
    %v1941 = vmul.f32 %v1818, %v647
    %v1942 = vmul.f32 %v1822, %v648
    %v1943 = vmul.f32 %v1826, %v649
    %v1944 = vmul.f32 %v1830, %v650
    %v1945 = vmul.f32 %v1834, %v651
    %v1946 = vmul.f32 %v1838, %v652
    %v1947 = vmul.f32 %v1842, %v653
    %v1948 = vmul.f32 %v1846, %v654
    %v1949 = vmul.f32 %v1850, %v655
    %v1950 = vmul.f32 %v1854, %v656
    %v1951 = vmul.f32 %v1858, %v657
    %v1952 = vmul.f32 %v1862, %v658
    %v1953 = vmul.f32 %v1866, %v659
    %v1954 = vmul.f32 %v1870, %v660
    %v1955 = vmul.f32 %v1874, %v661
    %v1956 = vmul.f32 %v1878, %v662
    %v1957 = vmul.f32 %v1882, %v663
    %v1958 = vmul.f32 %v1886, %v664
    %v1959 = vmul.f32 %v1890, %v665
    %v1960 = vmul.f32 %v1894, %v666
    %v1961 = vmul.f32 %v1898, %v667
    %v1962 = vmul.f32 %v1902, %v668
    %v1963 = vmul.f32 %v1906, %v669
    %v1964 = vmul.f32 %v1910, %v670
    %v1965 = vmul.f32 %v1914, %v671
    %v1966 = vmul.f32 %v1918, %v672
    %v1967 = vmul.f32 %v1922, %v673
    %v1968 = vmul.f32 %v1926, %v674
    %v1969 = vmul.f32 %v1930, %v675
    %v1970 = vmul.f32 %v1934, %v676
    %v1971 = vmul.f32 %v1938, %v677
    %1972 = vset.pattern.permute.xlu0 7
    %1973 = vperm.xlu0 %1972, %v788
    %v1974 = vpop.permute.xlu0 %1973
    %1976 = vset.pattern.permute.xlu0 7
    %1977 = vperm.xlu0 %1976, %v789
    %v1978 = vpop.permute.xlu0 %1977
    %1980 = vset.pattern.permute.xlu0 7
    %1981 = vperm.xlu0 %1980, %v790
    %v1982 = vpop.permute.xlu0 %1981
    %1984 = vset.pattern.permute.xlu0 7
    %1985 = vperm.xlu0 %1984, %v791
    %v1986 = vpop.permute.xlu0 %1985
    %1988 = vset.pattern.permute.xlu0 7
    %1989 = vperm.xlu0 %1988, %v792
    %v1990 = vpop.permute.xlu0 %1989
    %1992 = vset.pattern.permute.xlu0 7
    %1993 = vperm.xlu0 %1992, %v793
    %v1994 = vpop.permute.xlu0 %1993
    %1996 = vset.pattern.permute.xlu0 7
    %1997 = vperm.xlu0 %1996, %v794
    %v1998 = vpop.permute.xlu0 %1997
    %2000 = vset.pattern.permute.xlu0 7
    %2001 = vperm.xlu0 %2000, %v795
    %v2002 = vpop.permute.xlu0 %2001
    %2004 = vset.pattern.permute.xlu0 7
    %2005 = vperm.xlu0 %2004, %v796
    %v2006 = vpop.permute.xlu0 %2005
    %2008 = vset.pattern.permute.xlu0 7
    %2009 = vperm.xlu0 %2008, %v797
    %v2010 = vpop.permute.xlu0 %2009
    %2012 = vset.pattern.permute.xlu0 7
    %2013 = vperm.xlu0 %2012, %v798
    %v2014 = vpop.permute.xlu0 %2013
    %2016 = vset.pattern.permute.xlu0 7
    %2017 = vperm.xlu0 %2016, %v799
    %v2018 = vpop.permute.xlu0 %2017
    %2020 = vset.pattern.permute.xlu0 7
    %2021 = vperm.xlu0 %2020, %v800
    %v2022 = vpop.permute.xlu0 %2021
    %2024 = vset.pattern.permute.xlu0 7
    %2025 = vperm.xlu0 %2024, %v801
    %v2026 = vpop.permute.xlu0 %2025
    %2028 = vset.pattern.permute.xlu0 7
    %2029 = vperm.xlu0 %2028, %v802
    %v2030 = vpop.permute.xlu0 %2029
    %2032 = vset.pattern.permute.xlu0 7
    %2033 = vperm.xlu0 %2032, %v803
    %v2034 = vpop.permute.xlu0 %2033
    %2036 = vset.pattern.permute.xlu0 7
    %2037 = vperm.xlu0 %2036, %v804
    %v2038 = vpop.permute.xlu0 %2037
    %2040 = vset.pattern.permute.xlu0 7
    %2041 = vperm.xlu0 %2040, %v805
    %v2042 = vpop.permute.xlu0 %2041
    %2044 = vset.pattern.permute.xlu0 7
    %2045 = vperm.xlu0 %2044, %v806
    %v2046 = vpop.permute.xlu0 %2045
    %2048 = vset.pattern.permute.xlu0 7
    %2049 = vperm.xlu0 %2048, %v807
    %v2050 = vpop.permute.xlu0 %2049
    %2052 = vset.pattern.permute.xlu0 7
    %2053 = vperm.xlu0 %2052, %v808
    %v2054 = vpop.permute.xlu0 %2053
    %2056 = vset.pattern.permute.xlu0 7
    %2057 = vperm.xlu0 %2056, %v809
    %v2058 = vpop.permute.xlu0 %2057
    %2060 = vset.pattern.permute.xlu0 7
    %2061 = vperm.xlu0 %2060, %v810
    %v2062 = vpop.permute.xlu0 %2061
    %2064 = vset.pattern.permute.xlu0 7
    %2065 = vperm.xlu0 %2064, %v811
    %v2066 = vpop.permute.xlu0 %2065
    %2068 = vset.pattern.permute.xlu0 7
    %2069 = vperm.xlu0 %2068, %v812
    %v2070 = vpop.permute.xlu0 %2069
    %2072 = vset.pattern.permute.xlu0 7
    %2073 = vperm.xlu0 %2072, %v813
    %v2074 = vpop.permute.xlu0 %2073
    %2076 = vset.pattern.permute.xlu0 7
    %2077 = vperm.xlu0 %2076, %v814
    %v2078 = vpop.permute.xlu0 %2077
    %2080 = vset.pattern.permute.xlu0 7
    %2081 = vperm.xlu0 %2080, %v815
    %v2082 = vpop.permute.xlu0 %2081
    %2084 = vset.pattern.permute.xlu0 7
    %2085 = vperm.xlu0 %2084, %v816
    %v2086 = vpop.permute.xlu0 %2085
    %2088 = vset.pattern.permute.xlu0 7
    %2089 = vperm.xlu0 %2088, %v817
    %v2090 = vpop.permute.xlu0 %2089
    %2092 = vset.pattern.permute.xlu0 7
    %2093 = vperm.xlu0 %2092, %v818
    %v2094 = vpop.permute.xlu0 %2093
    %2096 = vset.pattern.permute.xlu0 7
    %2097 = vperm.xlu0 %2096, %v819
    %v2098 = vpop.permute.xlu0 %2097
    %v2100 = vmul.f32 %v1974, %v646
    %v2101 = vmul.f32 %v1978, %v647
    %v2102 = vmul.f32 %v1982, %v648
    %v2103 = vmul.f32 %v1986, %v649
    %v2104 = vmul.f32 %v1990, %v650
    %v2105 = vmul.f32 %v1994, %v651
    %v2106 = vmul.f32 %v1998, %v652
    %v2107 = vmul.f32 %v2002, %v653
    %v2108 = vmul.f32 %v2006, %v654
    %v2109 = vmul.f32 %v2010, %v655
    %v2110 = vmul.f32 %v2014, %v656
    %v2111 = vmul.f32 %v2018, %v657
    %v2112 = vmul.f32 %v2022, %v658
    %v2113 = vmul.f32 %v2026, %v659
    %v2114 = vmul.f32 %v2030, %v660
    %v2115 = vmul.f32 %v2034, %v661
    %v2116 = vmul.f32 %v2038, %v662
    %v2117 = vmul.f32 %v2042, %v663
    %v2118 = vmul.f32 %v2046, %v664
    %v2119 = vmul.f32 %v2050, %v665
    %v2120 = vmul.f32 %v2054, %v666
    %v2121 = vmul.f32 %v2058, %v667
    %v2122 = vmul.f32 %v2062, %v668
    %v2123 = vmul.f32 %v2066, %v669
    %v2124 = vmul.f32 %v2070, %v670
    %v2125 = vmul.f32 %v2074, %v671
    %v2126 = vmul.f32 %v2078, %v672
    %v2127 = vmul.f32 %v2082, %v673
    %v2128 = vmul.f32 %v2086, %v674
    %v2129 = vmul.f32 %v2090, %v675
    %v2130 = vmul.f32 %v2094, %v676
    %v2131 = vmul.f32 %v2098, %v677
    %2164 = vrot.lane.b32.xlu0 %v1140, 32
    %v2165 = vpop.permute.xlu0 %2164
    %2166 = vrot.lane.b32.xlu0 %v1141, 32
    %v2167 = vpop.permute.xlu0 %2166
    %2168 = vrot.lane.b32.xlu0 %v1142, 32
    %v2169 = vpop.permute.xlu0 %2168
    %2170 = vrot.lane.b32.xlu0 %v1143, 32
    %v2171 = vpop.permute.xlu0 %2170
    %2172 = vrot.lane.b32.xlu0 %v1144, 32
    %v2173 = vpop.permute.xlu0 %2172
    %2174 = vrot.lane.b32.xlu0 %v1145, 32
    %v2175 = vpop.permute.xlu0 %2174
    %2176 = vrot.lane.b32.xlu0 %v1146, 32
    %v2177 = vpop.permute.xlu0 %2176
    %2178 = vrot.lane.b32.xlu0 %v1147, 32
    %v2179 = vpop.permute.xlu0 %2178
    %2180 = vrot.lane.b32.xlu0 %v1148, 32
    %v2181 = vpop.permute.xlu0 %2180
    %2182 = vrot.lane.b32.xlu0 %v1149, 32
    %v2183 = vpop.permute.xlu0 %2182
    %2184 = vrot.lane.b32.xlu0 %v1150, 32
    %v2185 = vpop.permute.xlu0 %2184
    %2186 = vrot.lane.b32.xlu0 %v1151, 32
    %v2187 = vpop.permute.xlu0 %2186
    %2188 = vrot.lane.b32.xlu0 %v1152, 32
    %v2189 = vpop.permute.xlu0 %2188
    %2190 = vrot.lane.b32.xlu0 %v1153, 32
    %v2191 = vpop.permute.xlu0 %2190
    %2192 = vrot.lane.b32.xlu0 %v1154, 32
    %v2193 = vpop.permute.xlu0 %2192
    %2194 = vrot.lane.b32.xlu0 %v1155, 32
    %v2195 = vpop.permute.xlu0 %2194
    %2196 = vrot.lane.b32.xlu0 %v1156, 32
    %v2197 = vpop.permute.xlu0 %2196
    %2198 = vrot.lane.b32.xlu0 %v1157, 32
    %v2199 = vpop.permute.xlu0 %2198
    %2200 = vrot.lane.b32.xlu0 %v1158, 32
    %v2201 = vpop.permute.xlu0 %2200
    %2202 = vrot.lane.b32.xlu0 %v1159, 32
    %v2203 = vpop.permute.xlu0 %2202
    %2204 = vrot.lane.b32.xlu0 %v1160, 32
    %v2205 = vpop.permute.xlu0 %2204
    %2206 = vrot.lane.b32.xlu0 %v1161, 32
    %v2207 = vpop.permute.xlu0 %2206
    %2208 = vrot.lane.b32.xlu0 %v1162, 32
    %v2209 = vpop.permute.xlu0 %2208
    %2210 = vrot.lane.b32.xlu0 %v1163, 32
    %v2211 = vpop.permute.xlu0 %2210
    %2212 = vrot.lane.b32.xlu0 %v1164, 32
    %v2213 = vpop.permute.xlu0 %2212
    %2214 = vrot.lane.b32.xlu0 %v1165, 32
    %v2215 = vpop.permute.xlu0 %2214
    %2216 = vrot.lane.b32.xlu0 %v1166, 32
    %v2217 = vpop.permute.xlu0 %2216
    %2218 = vrot.lane.b32.xlu0 %v1167, 32
    %v2219 = vpop.permute.xlu0 %2218
    %2220 = vrot.lane.b32.xlu0 %v1168, 32
    %v2221 = vpop.permute.xlu0 %2220
    %2222 = vrot.lane.b32.xlu0 %v1169, 32
    %v2223 = vpop.permute.xlu0 %2222
    %2224 = vrot.lane.b32.xlu0 %v1170, 32
    %v2225 = vpop.permute.xlu0 %2224
    %2226 = vrot.lane.b32.xlu0 %v1171, 32
    %v2227 = vpop.permute.xlu0 %2226
    %2292 = vrot.lane.b32.xlu0 %v1300, 64
    %v2293 = vpop.permute.xlu0 %2292
    %2294 = vrot.lane.b32.xlu0 %v1301, 64
    %v2295 = vpop.permute.xlu0 %2294
    %2296 = vrot.lane.b32.xlu0 %v1302, 64
    %v2297 = vpop.permute.xlu0 %2296
    %2298 = vrot.lane.b32.xlu0 %v1303, 64
    %v2299 = vpop.permute.xlu0 %2298
    %2300 = vrot.lane.b32.xlu0 %v1304, 64
    %v2301 = vpop.permute.xlu0 %2300
    %2302 = vrot.lane.b32.xlu0 %v1305, 64
    %v2303 = vpop.permute.xlu0 %2302
    %2304 = vrot.lane.b32.xlu0 %v1306, 64
    %v2305 = vpop.permute.xlu0 %2304
    %2306 = vrot.lane.b32.xlu0 %v1307, 64
    %v2307 = vpop.permute.xlu0 %2306
    %2308 = vrot.lane.b32.xlu0 %v1308, 64
    %v2309 = vpop.permute.xlu0 %2308
    %2310 = vrot.lane.b32.xlu0 %v1309, 64
    %v2311 = vpop.permute.xlu0 %2310
    %2312 = vrot.lane.b32.xlu0 %v1310, 64
    %v2313 = vpop.permute.xlu0 %2312
    %2314 = vrot.lane.b32.xlu0 %v1311, 64
    %v2315 = vpop.permute.xlu0 %2314
    %2316 = vrot.lane.b32.xlu0 %v1312, 64
    %v2317 = vpop.permute.xlu0 %2316
    %2318 = vrot.lane.b32.xlu0 %v1313, 64
    %v2319 = vpop.permute.xlu0 %2318
    %2320 = vrot.lane.b32.xlu0 %v1314, 64
    %v2321 = vpop.permute.xlu0 %2320
    %2322 = vrot.lane.b32.xlu0 %v1315, 64
    %v2323 = vpop.permute.xlu0 %2322
    %2324 = vrot.lane.b32.xlu0 %v1316, 64
    %v2325 = vpop.permute.xlu0 %2324
    %2326 = vrot.lane.b32.xlu0 %v1317, 64
    %v2327 = vpop.permute.xlu0 %2326
    %2328 = vrot.lane.b32.xlu0 %v1318, 64
    %v2329 = vpop.permute.xlu0 %2328
    %2330 = vrot.lane.b32.xlu0 %v1319, 64
    %v2331 = vpop.permute.xlu0 %2330
    %2332 = vrot.lane.b32.xlu0 %v1320, 64
    %v2333 = vpop.permute.xlu0 %2332
    %2334 = vrot.lane.b32.xlu0 %v1321, 64
    %v2335 = vpop.permute.xlu0 %2334
    %2336 = vrot.lane.b32.xlu0 %v1322, 64
    %v2337 = vpop.permute.xlu0 %2336
    %2338 = vrot.lane.b32.xlu0 %v1323, 64
    %v2339 = vpop.permute.xlu0 %2338
    %2340 = vrot.lane.b32.xlu0 %v1324, 64
    %v2341 = vpop.permute.xlu0 %2340
    %2342 = vrot.lane.b32.xlu0 %v1325, 64
    %v2343 = vpop.permute.xlu0 %2342
    %2344 = vrot.lane.b32.xlu0 %v1326, 64
    %v2345 = vpop.permute.xlu0 %2344
    %2346 = vrot.lane.b32.xlu0 %v1327, 64
    %v2347 = vpop.permute.xlu0 %2346
    %2348 = vrot.lane.b32.xlu0 %v1328, 64
    %v2349 = vpop.permute.xlu0 %2348
    %2350 = vrot.lane.b32.xlu0 %v1329, 64
    %v2351 = vpop.permute.xlu0 %2350
    %2352 = vrot.lane.b32.xlu0 %v1330, 64
    %v2353 = vpop.permute.xlu0 %2352
    %2354 = vrot.lane.b32.xlu0 %v1331, 64
    %v2355 = vpop.permute.xlu0 %2354
    %2420 = vrot.lane.b32.xlu0 %v1460, 96
    %v2421 = vpop.permute.xlu0 %2420
    %2422 = vrot.lane.b32.xlu0 %v1461, 96
    %v2423 = vpop.permute.xlu0 %2422
    %2424 = vrot.lane.b32.xlu0 %v1462, 96
    %v2425 = vpop.permute.xlu0 %2424
    %2426 = vrot.lane.b32.xlu0 %v1463, 96
    %v2427 = vpop.permute.xlu0 %2426
    %2428 = vrot.lane.b32.xlu0 %v1464, 96
    %v2429 = vpop.permute.xlu0 %2428
    %2430 = vrot.lane.b32.xlu0 %v1465, 96
    %v2431 = vpop.permute.xlu0 %2430
    %2432 = vrot.lane.b32.xlu0 %v1466, 96
    %v2433 = vpop.permute.xlu0 %2432
    %2434 = vrot.lane.b32.xlu0 %v1467, 96
    %v2435 = vpop.permute.xlu0 %2434
    %2436 = vrot.lane.b32.xlu0 %v1468, 96
    %v2437 = vpop.permute.xlu0 %2436
    %2438 = vrot.lane.b32.xlu0 %v1469, 96
    %v2439 = vpop.permute.xlu0 %2438
    %2440 = vrot.lane.b32.xlu0 %v1470, 96
    %v2441 = vpop.permute.xlu0 %2440
    %2442 = vrot.lane.b32.xlu0 %v1471, 96
    %v2443 = vpop.permute.xlu0 %2442
    %2444 = vrot.lane.b32.xlu0 %v1472, 96
    %v2445 = vpop.permute.xlu0 %2444
    %2446 = vrot.lane.b32.xlu0 %v1473, 96
    %v2447 = vpop.permute.xlu0 %2446
    %2448 = vrot.lane.b32.xlu0 %v1474, 96
    %v2449 = vpop.permute.xlu0 %2448
    %2450 = vrot.lane.b32.xlu0 %v1475, 96
    %v2451 = vpop.permute.xlu0 %2450
    %2452 = vrot.lane.b32.xlu0 %v1476, 96
    %v2453 = vpop.permute.xlu0 %2452
    %2454 = vrot.lane.b32.xlu0 %v1477, 96
    %v2455 = vpop.permute.xlu0 %2454
    %2456 = vrot.lane.b32.xlu0 %v1478, 96
    %v2457 = vpop.permute.xlu0 %2456
    %2458 = vrot.lane.b32.xlu0 %v1479, 96
    %v2459 = vpop.permute.xlu0 %2458
    %2460 = vrot.lane.b32.xlu0 %v1480, 96
    %v2461 = vpop.permute.xlu0 %2460
    %2462 = vrot.lane.b32.xlu0 %v1481, 96
    %v2463 = vpop.permute.xlu0 %2462
    %2464 = vrot.lane.b32.xlu0 %v1482, 96
    %v2465 = vpop.permute.xlu0 %2464
    %2466 = vrot.lane.b32.xlu0 %v1483, 96
    %v2467 = vpop.permute.xlu0 %2466
    %2468 = vrot.lane.b32.xlu0 %v1484, 96
    %v2469 = vpop.permute.xlu0 %2468
    %2470 = vrot.lane.b32.xlu0 %v1485, 96
    %v2471 = vpop.permute.xlu0 %2470
    %2472 = vrot.lane.b32.xlu0 %v1486, 96
    %v2473 = vpop.permute.xlu0 %2472
    %2474 = vrot.lane.b32.xlu0 %v1487, 96
    %v2475 = vpop.permute.xlu0 %2474
    %2476 = vrot.lane.b32.xlu0 %v1488, 96
    %v2477 = vpop.permute.xlu0 %2476
    %2478 = vrot.lane.b32.xlu0 %v1489, 96
    %v2479 = vpop.permute.xlu0 %2478
    %2480 = vrot.lane.b32.xlu0 %v1490, 96
    %v2481 = vpop.permute.xlu0 %2480
    %2482 = vrot.lane.b32.xlu0 %v1491, 96
    %v2483 = vpop.permute.xlu0 %2482
    %2548 = vrot.lane.b32.xlu0 %v1780, 32
    %v2549 = vpop.permute.xlu0 %2548
    %2550 = vrot.lane.b32.xlu0 %v1781, 32
    %v2551 = vpop.permute.xlu0 %2550
    %2552 = vrot.lane.b32.xlu0 %v1782, 32
    %v2553 = vpop.permute.xlu0 %2552
    %2554 = vrot.lane.b32.xlu0 %v1783, 32
    %v2555 = vpop.permute.xlu0 %2554
    %2556 = vrot.lane.b32.xlu0 %v1784, 32
    %v2557 = vpop.permute.xlu0 %2556
    %2558 = vrot.lane.b32.xlu0 %v1785, 32
    %v2559 = vpop.permute.xlu0 %2558
    %2560 = vrot.lane.b32.xlu0 %v1786, 32
    %v2561 = vpop.permute.xlu0 %2560
    %2562 = vrot.lane.b32.xlu0 %v1787, 32
    %v2563 = vpop.permute.xlu0 %2562
    %2564 = vrot.lane.b32.xlu0 %v1788, 32
    %v2565 = vpop.permute.xlu0 %2564
    %2566 = vrot.lane.b32.xlu0 %v1789, 32
    %v2567 = vpop.permute.xlu0 %2566
    %2568 = vrot.lane.b32.xlu0 %v1790, 32
    %v2569 = vpop.permute.xlu0 %2568
    %2570 = vrot.lane.b32.xlu0 %v1791, 32
    %v2571 = vpop.permute.xlu0 %2570
    %2572 = vrot.lane.b32.xlu0 %v1792, 32
    %v2573 = vpop.permute.xlu0 %2572
    %2574 = vrot.lane.b32.xlu0 %v1793, 32
    %v2575 = vpop.permute.xlu0 %2574
    %2576 = vrot.lane.b32.xlu0 %v1794, 32
    %v2577 = vpop.permute.xlu0 %2576
    %2578 = vrot.lane.b32.xlu0 %v1795, 32
    %v2579 = vpop.permute.xlu0 %2578
    %2580 = vrot.lane.b32.xlu0 %v1796, 32
    %v2581 = vpop.permute.xlu0 %2580
    %2582 = vrot.lane.b32.xlu0 %v1797, 32
    %v2583 = vpop.permute.xlu0 %2582
    %2584 = vrot.lane.b32.xlu0 %v1798, 32
    %v2585 = vpop.permute.xlu0 %2584
    %2586 = vrot.lane.b32.xlu0 %v1799, 32
    %v2587 = vpop.permute.xlu0 %2586
    %2588 = vrot.lane.b32.xlu0 %v1800, 32
    %v2589 = vpop.permute.xlu0 %2588
    %2590 = vrot.lane.b32.xlu0 %v1801, 32
    %v2591 = vpop.permute.xlu0 %2590
    %2592 = vrot.lane.b32.xlu0 %v1802, 32
    %v2593 = vpop.permute.xlu0 %2592
    %2594 = vrot.lane.b32.xlu0 %v1803, 32
    %v2595 = vpop.permute.xlu0 %2594
    %2596 = vrot.lane.b32.xlu0 %v1804, 32
    %v2597 = vpop.permute.xlu0 %2596
    %2598 = vrot.lane.b32.xlu0 %v1805, 32
    %v2599 = vpop.permute.xlu0 %2598
    %2600 = vrot.lane.b32.xlu0 %v1806, 32
    %v2601 = vpop.permute.xlu0 %2600
    %2602 = vrot.lane.b32.xlu0 %v1807, 32
    %v2603 = vpop.permute.xlu0 %2602
    %2604 = vrot.lane.b32.xlu0 %v1808, 32
    %v2605 = vpop.permute.xlu0 %2604
    %2606 = vrot.lane.b32.xlu0 %v1809, 32
    %v2607 = vpop.permute.xlu0 %2606
    %2608 = vrot.lane.b32.xlu0 %v1810, 32
    %v2609 = vpop.permute.xlu0 %2608
    %2610 = vrot.lane.b32.xlu0 %v1811, 32
    %v2611 = vpop.permute.xlu0 %2610
    %2676 = vrot.lane.b32.xlu0 %v1940, 64
    %v2677 = vpop.permute.xlu0 %2676
    %2678 = vrot.lane.b32.xlu0 %v1941, 64
    %v2679 = vpop.permute.xlu0 %2678
    %2680 = vrot.lane.b32.xlu0 %v1942, 64
    %v2681 = vpop.permute.xlu0 %2680
    %2682 = vrot.lane.b32.xlu0 %v1943, 64
    %v2683 = vpop.permute.xlu0 %2682
    %2684 = vrot.lane.b32.xlu0 %v1944, 64
    %v2685 = vpop.permute.xlu0 %2684
    %2686 = vrot.lane.b32.xlu0 %v1945, 64
    %v2687 = vpop.permute.xlu0 %2686
    %2688 = vrot.lane.b32.xlu0 %v1946, 64
    %v2689 = vpop.permute.xlu0 %2688
    %2690 = vrot.lane.b32.xlu0 %v1947, 64
    %v2691 = vpop.permute.xlu0 %2690
    %2692 = vrot.lane.b32.xlu0 %v1948, 64
    %v2693 = vpop.permute.xlu0 %2692
    %2694 = vrot.lane.b32.xlu0 %v1949, 64
    %v2695 = vpop.permute.xlu0 %2694
    %2696 = vrot.lane.b32.xlu0 %v1950, 64
    %v2697 = vpop.permute.xlu0 %2696
    %2698 = vrot.lane.b32.xlu0 %v1951, 64
    %v2699 = vpop.permute.xlu0 %2698
    %2700 = vrot.lane.b32.xlu0 %v1952, 64
    %v2701 = vpop.permute.xlu0 %2700
    %2702 = vrot.lane.b32.xlu0 %v1953, 64
    %v2703 = vpop.permute.xlu0 %2702
    %2704 = vrot.lane.b32.xlu0 %v1954, 64
    %v2705 = vpop.permute.xlu0 %2704
    %2706 = vrot.lane.b32.xlu0 %v1955, 64
    %v2707 = vpop.permute.xlu0 %2706
    %2708 = vrot.lane.b32.xlu0 %v1956, 64
    %v2709 = vpop.permute.xlu0 %2708
    %2710 = vrot.lane.b32.xlu0 %v1957, 64
    %v2711 = vpop.permute.xlu0 %2710
    %2712 = vrot.lane.b32.xlu0 %v1958, 64
    %v2713 = vpop.permute.xlu0 %2712
    %2714 = vrot.lane.b32.xlu0 %v1959, 64
    %v2715 = vpop.permute.xlu0 %2714
    %2716 = vrot.lane.b32.xlu0 %v1960, 64
    %v2717 = vpop.permute.xlu0 %2716
    %2718 = vrot.lane.b32.xlu0 %v1961, 64
    %v2719 = vpop.permute.xlu0 %2718
    %2720 = vrot.lane.b32.xlu0 %v1962, 64
    %v2721 = vpop.permute.xlu0 %2720
    %2722 = vrot.lane.b32.xlu0 %v1963, 64
    %v2723 = vpop.permute.xlu0 %2722
    %2724 = vrot.lane.b32.xlu0 %v1964, 64
    %v2725 = vpop.permute.xlu0 %2724
    %2726 = vrot.lane.b32.xlu0 %v1965, 64
    %v2727 = vpop.permute.xlu0 %2726
    %2728 = vrot.lane.b32.xlu0 %v1966, 64
    %v2729 = vpop.permute.xlu0 %2728
    %2730 = vrot.lane.b32.xlu0 %v1967, 64
    %v2731 = vpop.permute.xlu0 %2730
    %2732 = vrot.lane.b32.xlu0 %v1968, 64
    %v2733 = vpop.permute.xlu0 %2732
    %2734 = vrot.lane.b32.xlu0 %v1969, 64
    %v2735 = vpop.permute.xlu0 %2734
    %2736 = vrot.lane.b32.xlu0 %v1970, 64
    %v2737 = vpop.permute.xlu0 %2736
    %2738 = vrot.lane.b32.xlu0 %v1971, 64
    %v2739 = vpop.permute.xlu0 %2738
    %2804 = vrot.lane.b32.xlu0 %v2100, 96
    %v2805 = vpop.permute.xlu0 %2804
    %2806 = vrot.lane.b32.xlu0 %v2101, 96
    %v2807 = vpop.permute.xlu0 %2806
    %2808 = vrot.lane.b32.xlu0 %v2102, 96
    %v2809 = vpop.permute.xlu0 %2808
    %2810 = vrot.lane.b32.xlu0 %v2103, 96
    %v2811 = vpop.permute.xlu0 %2810
    %2812 = vrot.lane.b32.xlu0 %v2104, 96
    %v2813 = vpop.permute.xlu0 %2812
    %2814 = vrot.lane.b32.xlu0 %v2105, 96
    %v2815 = vpop.permute.xlu0 %2814
    %2816 = vrot.lane.b32.xlu0 %v2106, 96
    %v2817 = vpop.permute.xlu0 %2816
    %2818 = vrot.lane.b32.xlu0 %v2107, 96
    %v2819 = vpop.permute.xlu0 %2818
    %2820 = vrot.lane.b32.xlu0 %v2108, 96
    %v2821 = vpop.permute.xlu0 %2820
    %2822 = vrot.lane.b32.xlu0 %v2109, 96
    %v2823 = vpop.permute.xlu0 %2822
    %2824 = vrot.lane.b32.xlu0 %v2110, 96
    %v2825 = vpop.permute.xlu0 %2824
    %2826 = vrot.lane.b32.xlu0 %v2111, 96
    %v2827 = vpop.permute.xlu0 %2826
    %2828 = vrot.lane.b32.xlu0 %v2112, 96
    %v2829 = vpop.permute.xlu0 %2828
    %2830 = vrot.lane.b32.xlu0 %v2113, 96
    %v2831 = vpop.permute.xlu0 %2830
    %2832 = vrot.lane.b32.xlu0 %v2114, 96
    %v2833 = vpop.permute.xlu0 %2832
    %2834 = vrot.lane.b32.xlu0 %v2115, 96
    %v2835 = vpop.permute.xlu0 %2834
    %2836 = vrot.lane.b32.xlu0 %v2116, 96
    %v2837 = vpop.permute.xlu0 %2836
    %2838 = vrot.lane.b32.xlu0 %v2117, 96
    %v2839 = vpop.permute.xlu0 %2838
    %2840 = vrot.lane.b32.xlu0 %v2118, 96
    %v2841 = vpop.permute.xlu0 %2840
    %2842 = vrot.lane.b32.xlu0 %v2119, 96
    %v2843 = vpop.permute.xlu0 %2842
    %2844 = vrot.lane.b32.xlu0 %v2120, 96
    %v2845 = vpop.permute.xlu0 %2844
    %2846 = vrot.lane.b32.xlu0 %v2121, 96
    %v2847 = vpop.permute.xlu0 %2846
    %2848 = vrot.lane.b32.xlu0 %v2122, 96
    %v2849 = vpop.permute.xlu0 %2848
    %2850 = vrot.lane.b32.xlu0 %v2123, 96
    %v2851 = vpop.permute.xlu0 %2850
    %2852 = vrot.lane.b32.xlu0 %v2124, 96
    %v2853 = vpop.permute.xlu0 %2852
    %2854 = vrot.lane.b32.xlu0 %v2125, 96
    %v2855 = vpop.permute.xlu0 %2854
    %2856 = vrot.lane.b32.xlu0 %v2126, 96
    %v2857 = vpop.permute.xlu0 %2856
    %2858 = vrot.lane.b32.xlu0 %v2127, 96
    %v2859 = vpop.permute.xlu0 %2858
    %2860 = vrot.lane.b32.xlu0 %v2128, 96
    %v2861 = vpop.permute.xlu0 %2860
    %2862 = vrot.lane.b32.xlu0 %v2129, 96
    %v2863 = vpop.permute.xlu0 %2862
    %2864 = vrot.lane.b32.xlu0 %v2130, 96
    %v2865 = vpop.permute.xlu0 %2864
    %2866 = vrot.lane.b32.xlu0 %v2131, 96
    %v2867 = vpop.permute.xlu0 %2866
    %vm2900 = vcmask 261120
    %v2901 = vsel %vm2900, %v980, %v2165
    %v2902 = vsel %vm2900, %v981, %v2167
    %v2903 = vsel %vm2900, %v982, %v2169
    %v2904 = vsel %vm2900, %v983, %v2171
    %v2905 = vsel %vm2900, %v984, %v2173
    %v2906 = vsel %vm2900, %v985, %v2175
    %v2907 = vsel %vm2900, %v986, %v2177
    %v2908 = vsel %vm2900, %v987, %v2179
    %v2909 = vsel %vm2900, %v988, %v2181
    %v2910 = vsel %vm2900, %v989, %v2183
    %v2911 = vsel %vm2900, %v990, %v2185
    %v2912 = vsel %vm2900, %v991, %v2187
    %v2913 = vsel %vm2900, %v992, %v2189
    %v2914 = vsel %vm2900, %v993, %v2191
    %v2915 = vsel %vm2900, %v994, %v2193
    %v2916 = vsel %vm2900, %v995, %v2195
    %v2917 = vsel %vm2900, %v996, %v2197
    %v2918 = vsel %vm2900, %v997, %v2199
    %v2919 = vsel %vm2900, %v998, %v2201
    %v2920 = vsel %vm2900, %v999, %v2203
    %v2921 = vsel %vm2900, %v1000, %v2205
    %v2922 = vsel %vm2900, %v1001, %v2207
    %v2923 = vsel %vm2900, %v1002, %v2209
    %v2924 = vsel %vm2900, %v1003, %v2211
    %v2925 = vsel %vm2900, %v1004, %v2213
    %v2926 = vsel %vm2900, %v1005, %v2215
    %v2927 = vsel %vm2900, %v1006, %v2217
    %v2928 = vsel %vm2900, %v1007, %v2219
    %v2929 = vsel %vm2900, %v1008, %v2221
    %v2930 = vsel %vm2900, %v1009, %v2223
    %v2931 = vsel %vm2900, %v1010, %v2225
    %v2932 = vsel %vm2900, %v1011, %v2227
    %vm2933 = vcmask 523264
    %v2934 = vsel %vm2933, %v2901, %v2293
    %v2935 = vsel %vm2933, %v2902, %v2295
    %v2936 = vsel %vm2933, %v2903, %v2297
    %v2937 = vsel %vm2933, %v2904, %v2299
    %v2938 = vsel %vm2933, %v2905, %v2301
    %v2939 = vsel %vm2933, %v2906, %v2303
    %v2940 = vsel %vm2933, %v2907, %v2305
    %v2941 = vsel %vm2933, %v2908, %v2307
    %v2942 = vsel %vm2933, %v2909, %v2309
    %v2943 = vsel %vm2933, %v2910, %v2311
    %v2944 = vsel %vm2933, %v2911, %v2313
    %v2945 = vsel %vm2933, %v2912, %v2315
    %v2946 = vsel %vm2933, %v2913, %v2317
    %v2947 = vsel %vm2933, %v2914, %v2319
    %v2948 = vsel %vm2933, %v2915, %v2321
    %v2949 = vsel %vm2933, %v2916, %v2323
    %v2950 = vsel %vm2933, %v2917, %v2325
    %v2951 = vsel %vm2933, %v2918, %v2327
    %v2952 = vsel %vm2933, %v2919, %v2329
    %v2953 = vsel %vm2933, %v2920, %v2331
    %v2954 = vsel %vm2933, %v2921, %v2333
    %v2955 = vsel %vm2933, %v2922, %v2335
    %v2956 = vsel %vm2933, %v2923, %v2337
    %v2957 = vsel %vm2933, %v2924, %v2339
    %v2958 = vsel %vm2933, %v2925, %v2341
    %v2959 = vsel %vm2933, %v2926, %v2343
    %v2960 = vsel %vm2933, %v2927, %v2345
    %v2961 = vsel %vm2933, %v2928, %v2347
    %v2962 = vsel %vm2933, %v2929, %v2349
    %v2963 = vsel %vm2933, %v2930, %v2351
    %v2964 = vsel %vm2933, %v2931, %v2353
    %v2965 = vsel %vm2933, %v2932, %v2355
    %vm2966 = vcmask 785408
    %v2967 = vsel %vm2966, %v2934, %v2421
    %v2968 = vsel %vm2966, %v2935, %v2423
    %v2969 = vsel %vm2966, %v2936, %v2425
    %v2970 = vsel %vm2966, %v2937, %v2427
    %v2971 = vsel %vm2966, %v2938, %v2429
    %v2972 = vsel %vm2966, %v2939, %v2431
    %v2973 = vsel %vm2966, %v2940, %v2433
    %v2974 = vsel %vm2966, %v2941, %v2435
    %v2975 = vsel %vm2966, %v2942, %v2437
    %v2976 = vsel %vm2966, %v2943, %v2439
    %v2977 = vsel %vm2966, %v2944, %v2441
    %v2978 = vsel %vm2966, %v2945, %v2443
    %v2979 = vsel %vm2966, %v2946, %v2445
    %v2980 = vsel %vm2966, %v2947, %v2447
    %v2981 = vsel %vm2966, %v2948, %v2449
    %v2982 = vsel %vm2966, %v2949, %v2451
    %v2983 = vsel %vm2966, %v2950, %v2453
    %v2984 = vsel %vm2966, %v2951, %v2455
    %v2985 = vsel %vm2966, %v2952, %v2457
    %v2986 = vsel %vm2966, %v2953, %v2459
    %v2987 = vsel %vm2966, %v2954, %v2461
    %v2988 = vsel %vm2966, %v2955, %v2463
    %v2989 = vsel %vm2966, %v2956, %v2465
    %v2990 = vsel %vm2966, %v2957, %v2467
    %v2991 = vsel %vm2966, %v2958, %v2469
    %v2992 = vsel %vm2966, %v2959, %v2471
    %v2993 = vsel %vm2966, %v2960, %v2473
    %v2994 = vsel %vm2966, %v2961, %v2475
    %v2995 = vsel %vm2966, %v2962, %v2477
    %v2996 = vsel %vm2966, %v2963, %v2479
    %v2997 = vsel %vm2966, %v2964, %v2481
    %v2998 = vsel %vm2966, %v2965, %v2483
    %v2999 = vsel %vm2900, %v1620, %v2549
    %v3000 = vsel %vm2900, %v1621, %v2551
    %v3001 = vsel %vm2900, %v1622, %v2553
    %v3002 = vsel %vm2900, %v1623, %v2555
    %v3003 = vsel %vm2900, %v1624, %v2557
    %v3004 = vsel %vm2900, %v1625, %v2559
    %v3005 = vsel %vm2900, %v1626, %v2561
    %v3006 = vsel %vm2900, %v1627, %v2563
    %v3007 = vsel %vm2900, %v1628, %v2565
    %v3008 = vsel %vm2900, %v1629, %v2567
    %v3009 = vsel %vm2900, %v1630, %v2569
    %v3010 = vsel %vm2900, %v1631, %v2571
    %v3011 = vsel %vm2900, %v1632, %v2573
    %v3012 = vsel %vm2900, %v1633, %v2575
    %v3013 = vsel %vm2900, %v1634, %v2577
    %v3014 = vsel %vm2900, %v1635, %v2579
    %v3015 = vsel %vm2900, %v1636, %v2581
    %v3016 = vsel %vm2900, %v1637, %v2583
    %v3017 = vsel %vm2900, %v1638, %v2585
    %v3018 = vsel %vm2900, %v1639, %v2587
    %v3019 = vsel %vm2900, %v1640, %v2589
    %v3020 = vsel %vm2900, %v1641, %v2591
    %v3021 = vsel %vm2900, %v1642, %v2593
    %v3022 = vsel %vm2900, %v1643, %v2595
    %v3023 = vsel %vm2900, %v1644, %v2597
    %v3024 = vsel %vm2900, %v1645, %v2599
    %v3025 = vsel %vm2900, %v1646, %v2601
    %v3026 = vsel %vm2900, %v1647, %v2603
    %v3027 = vsel %vm2900, %v1648, %v2605
    %v3028 = vsel %vm2900, %v1649, %v2607
    %v3029 = vsel %vm2900, %v1650, %v2609
    %v3030 = vsel %vm2900, %v1651, %v2611
    %v3031 = vsel %vm2933, %v2999, %v2677
    %v3032 = vsel %vm2933, %v3000, %v2679
    %v3033 = vsel %vm2933, %v3001, %v2681
    %v3034 = vsel %vm2933, %v3002, %v2683
    %v3035 = vsel %vm2933, %v3003, %v2685
    %v3036 = vsel %vm2933, %v3004, %v2687
    %v3037 = vsel %vm2933, %v3005, %v2689
    %v3038 = vsel %vm2933, %v3006, %v2691
    %v3039 = vsel %vm2933, %v3007, %v2693
    %v3040 = vsel %vm2933, %v3008, %v2695
    %v3041 = vsel %vm2933, %v3009, %v2697
    %v3042 = vsel %vm2933, %v3010, %v2699
    %v3043 = vsel %vm2933, %v3011, %v2701
    %v3044 = vsel %vm2933, %v3012, %v2703
    %v3045 = vsel %vm2933, %v3013, %v2705
    %v3046 = vsel %vm2933, %v3014, %v2707
    %v3047 = vsel %vm2933, %v3015, %v2709
    %v3048 = vsel %vm2933, %v3016, %v2711
    %v3049 = vsel %vm2933, %v3017, %v2713
    %v3050 = vsel %vm2933, %v3018, %v2715
    %v3051 = vsel %vm2933, %v3019, %v2717
    %v3052 = vsel %vm2933, %v3020, %v2719
    %v3053 = vsel %vm2933, %v3021, %v2721
    %v3054 = vsel %vm2933, %v3022, %v2723
    %v3055 = vsel %vm2933, %v3023, %v2725
    %v3056 = vsel %vm2933, %v3024, %v2727
    %v3057 = vsel %vm2933, %v3025, %v2729
    %v3058 = vsel %vm2933, %v3026, %v2731
    %v3059 = vsel %vm2933, %v3027, %v2733
    %v3060 = vsel %vm2933, %v3028, %v2735
    %v3061 = vsel %vm2933, %v3029, %v2737
    %v3062 = vsel %vm2933, %v3030, %v2739
    %v3063 = vsel %vm2966, %v3031, %v2805
    %v3064 = vsel %vm2966, %v3032, %v2807
    %v3065 = vsel %vm2966, %v3033, %v2809
    %v3066 = vsel %vm2966, %v3034, %v2811
    %v3067 = vsel %vm2966, %v3035, %v2813
    %v3068 = vsel %vm2966, %v3036, %v2815
    %v3069 = vsel %vm2966, %v3037, %v2817
    %v3070 = vsel %vm2966, %v3038, %v2819
    %v3071 = vsel %vm2966, %v3039, %v2821
    %v3072 = vsel %vm2966, %v3040, %v2823
    %v3073 = vsel %vm2966, %v3041, %v2825
    %v3074 = vsel %vm2966, %v3042, %v2827
    %v3075 = vsel %vm2966, %v3043, %v2829
    %v3076 = vsel %vm2966, %v3044, %v2831
    %v3077 = vsel %vm2966, %v3045, %v2833
    %v3078 = vsel %vm2966, %v3046, %v2835
    %v3079 = vsel %vm2966, %v3047, %v2837
    %v3080 = vsel %vm2966, %v3048, %v2839
    %v3081 = vsel %vm2966, %v3049, %v2841
    %v3082 = vsel %vm2966, %v3050, %v2843
    %v3083 = vsel %vm2966, %v3051, %v2845
    %v3084 = vsel %vm2966, %v3052, %v2847
    %v3085 = vsel %vm2966, %v3053, %v2849
    %v3086 = vsel %vm2966, %v3054, %v2851
    %v3087 = vsel %vm2966, %v3055, %v2853
    %v3088 = vsel %vm2966, %v3056, %v2855
    %v3089 = vsel %vm2966, %v3057, %v2857
    %v3090 = vsel %vm2966, %v3058, %v2859
    %v3091 = vsel %vm2966, %v3059, %v2861
    %v3092 = vsel %vm2966, %v3060, %v2863
    %v3093 = vsel %vm2966, %v3061, %v2865
    %v3094 = vsel %vm2966, %v3062, %v2867
    %v3095 = vpack.c.bf16 %v2968, %v2967
    %v3096 = vpack.c.bf16 %v3064, %v3063
    %v3097 = vpack.c.bf16 %v789, %v788
    %v3098 = vpack.c.bf16 %v2970, %v2969
    %v3099 = vpack.c.bf16 %v3066, %v3065
    %v3100 = vpack.c.bf16 %v791, %v790
    %v3101 = vpack.c.bf16 %v2972, %v2971
    %v3102 = vpack.c.bf16 %v3068, %v3067
    %v3103 = vpack.c.bf16 %v793, %v792
    %v3104 = vpack.c.bf16 %v2974, %v2973
    %v3105 = vpack.c.bf16 %v3070, %v3069
    %v3106 = vpack.c.bf16 %v795, %v794
    %v3107 = vpack.c.bf16 %v2976, %v2975
    %v3108 = vpack.c.bf16 %v3072, %v3071
    %v3109 = vpack.c.bf16 %v797, %v796
    %v3110 = vpack.c.bf16 %v2978, %v2977
    %v3111 = vpack.c.bf16 %v3074, %v3073
    %v3112 = vpack.c.bf16 %v799, %v798
    %v3113 = vpack.c.bf16 %v2980, %v2979
    %v3114 = vpack.c.bf16 %v3076, %v3075
    %v3115 = vpack.c.bf16 %v801, %v800
    %v3116 = vpack.c.bf16 %v2982, %v2981
    %v3117 = vpack.c.bf16 %v3078, %v3077
    %v3118 = vpack.c.bf16 %v803, %v802
    %v3119 = vpack.c.bf16 %v2984, %v2983
    %v3120 = vpack.c.bf16 %v3080, %v3079
    %v3121 = vpack.c.bf16 %v805, %v804
    %v3122 = vpack.c.bf16 %v2986, %v2985
    %v3123 = vpack.c.bf16 %v3082, %v3081
    %v3124 = vpack.c.bf16 %v807, %v806
    %v3125 = vpack.c.bf16 %v2988, %v2987
    %v3126 = vpack.c.bf16 %v3084, %v3083
    %v3127 = vpack.c.bf16 %v809, %v808
    %v3128 = vpack.c.bf16 %v2990, %v2989
    %v3129 = vpack.c.bf16 %v3086, %v3085
    %v3130 = vpack.c.bf16 %v811, %v810
    %v3131 = vpack.c.bf16 %v2992, %v2991
    %v3132 = vpack.c.bf16 %v3088, %v3087
    %v3133 = vpack.c.bf16 %v813, %v812
    %v3134 = vpack.c.bf16 %v2994, %v2993
    %v3135 = vpack.c.bf16 %v3090, %v3089
    %v3136 = vpack.c.bf16 %v815, %v814
    %v3137 = vpack.c.bf16 %v2996, %v2995
    %v3138 = vpack.c.bf16 %v3092, %v3091
    %v3139 = vpack.c.bf16 %v817, %v816
    %v3140 = vpack.c.bf16 %v2998, %v2997
    %v3141 = vpack.c.bf16 %v3094, %v3093
    %v3142 = vpack.c.bf16 %v819, %v818
    %v3143 = vld [vmem:[%s9] sm:$0xf]
    %v3144 = vld [vmem:[%s9 + $0x4] sm:$0xf]
    %v3145 = vld [vmem:[%s9 + $0x8] sm:$0xf]
    %v3146 = vld [vmem:[%s9 + $0xc] sm:$0xf]
    %v3147 = vld [vmem:[%s9 + $0x10] sm:$0xf]
    %v3148 = vld [vmem:[%s9 + $0x14] sm:$0xf]
    %v3149 = vld [vmem:[%s9 + $0x18] sm:$0xf]
    %v3150 = vld [vmem:[%s9 + $0x1c] sm:$0xf]
    %v3151 = vld [vmem:[%s9 + $0x20] sm:$0xf]
    %v3152 = vld [vmem:[%s9 + $0x24] sm:$0xf]
    %v3153 = vld [vmem:[%s9 + $0x28] sm:$0xf]
    %v3154 = vld [vmem:[%s9 + $0x2c] sm:$0xf]
    %v3155 = vld [vmem:[%s9 + $0x30] sm:$0xf]
    %v3156 = vld [vmem:[%s9 + $0x34] sm:$0xf]
    %v3157 = vld [vmem:[%s9 + $0x38] sm:$0xf]
    %v3158 = vld [vmem:[%s9 + $0x3c] sm:$0xf]
    %v3159 = vld [vmem:[%s9 + $0x40] sm:$0xf]
    %v3160 = vld [vmem:[%s9 + $0x44] sm:$0xf]
    %v3161 = vld [vmem:[%s9 + $0x48] sm:$0xf]
    %v3162 = vld [vmem:[%s9 + $0x4c] sm:$0xf]
    %v3163 = vld [vmem:[%s9 + $0x50] sm:$0xf]
    %v3164 = vld [vmem:[%s9 + $0x54] sm:$0xf]
    %v3165 = vld [vmem:[%s9 + $0x58] sm:$0xf]
    %v3166 = vld [vmem:[%s9 + $0x5c] sm:$0xf]
    %v3167 = vld [vmem:[%s9 + $0x60] sm:$0xf]
    %v3168 = vld [vmem:[%s9 + $0x64] sm:$0xf]
    %v3169 = vld [vmem:[%s9 + $0x68] sm:$0xf]
    %v3170 = vld [vmem:[%s9 + $0x6c] sm:$0xf]
    %v3171 = vld [vmem:[%s9 + $0x70] sm:$0xf]
    %v3172 = vld [vmem:[%s9 + $0x74] sm:$0xf]
    %v3173 = vld [vmem:[%s9 + $0x78] sm:$0xf]
    %v3174 = vld [vmem:[%s9 + $0x7c] sm:$0xf]
    %v3175 = vld [vmem:[%s9 + $0x80] sm:$0xf]
    %v3209 = vunpack.c.l.b16 %v3143
    %v3210 = vunpack.c.l.b16 %v3144
    %v3211 = vunpack.c.l.b16 %v3145
    %v3212 = vunpack.c.l.b16 %v3146
    %v3213 = vunpack.c.l.b16 %v3147
    %v3214 = vunpack.c.l.b16 %v3148
    %v3215 = vunpack.c.l.b16 %v3149
    %v3216 = vunpack.c.l.b16 %v3150
    %v3217 = vunpack.c.l.b16 %v3151
    %v3218 = vunpack.c.l.b16 %v3152
    %v3219 = vunpack.c.l.b16 %v3153
    %v3220 = vunpack.c.l.b16 %v3154
    %v3221 = vunpack.c.l.b16 %v3155
    %v3222 = vunpack.c.l.b16 %v3156
    %v3223 = vunpack.c.l.b16 %v3157
    %v3224 = vunpack.c.l.b16 %v3158
    %v3225 = vunpack.c.l.b16 %v3159
    %v3226 = vunpack.c.l.b16 %v3160
    %v3227 = vunpack.c.l.b16 %v3161
    %v3228 = vunpack.c.l.b16 %v3162
    %v3229 = vunpack.c.l.b16 %v3163
    %v3230 = vunpack.c.l.b16 %v3164
    %v3231 = vunpack.c.l.b16 %v3165
    %v3232 = vunpack.c.l.b16 %v3166
    %v3233 = vunpack.c.l.b16 %v3167
    %v3234 = vunpack.c.l.b16 %v3168
    %v3235 = vunpack.c.l.b16 %v3169
    %v3236 = vunpack.c.l.b16 %v3170
    %v3237 = vunpack.c.l.b16 %v3171
    %v3238 = vunpack.c.l.b16 %v3172
    %v3239 = vunpack.c.l.b16 %v3173
    %v3240 = vunpack.c.l.b16 %v3174
    %v3241 = vunpack.c.l.b16 %v3175
    %v3242 = vpack.c.b16 %v3210, %v3209
    %v3243 = vpack.c.b16 %v3212, %v3211
    %v3244 = vpack.c.b16 %v3214, %v3213
    %v3245 = vpack.c.b16 %v3216, %v3215
    %v3246 = vpack.c.b16 %v3218, %v3217
    %v3247 = vpack.c.b16 %v3220, %v3219
    %v3248 = vpack.c.b16 %v3222, %v3221
    %v3249 = vpack.c.b16 %v3224, %v3223
    %v3250 = vpack.c.b16 %v3226, %v3225
    %v3251 = vpack.c.b16 %v3228, %v3227
    %v3252 = vpack.c.b16 %v3230, %v3229
    %v3253 = vpack.c.b16 %v3232, %v3231
    %v3254 = vpack.c.b16 %v3234, %v3233
    %v3255 = vpack.c.b16 %v3236, %v3235
    %v3256 = vpack.c.b16 %v3238, %v3237
    %v3257 = vpack.c.b16 %v3240, %v3239
    %v3258 = vpack.c.b16 %v3241, %v3241
    %vm3275 = vcmask 64512
    %v3277 = vsel %vm3275, %v3097, 0
    %v3280 = vsel %vm3275, %v3100, 0
    %v3283 = vsel %vm3275, %v3103, 0
    %v3286 = vsel %vm3275, %v3106, 0
    %v3289 = vsel %vm3275, %v3109, 0
    %v3292 = vsel %vm3275, %v3112, 0
    %v3295 = vsel %vm3275, %v3115, 0
    %v3298 = vsel %vm3275, %v3118, 0
    %v3301 = vsel %vm3275, %v3121, 0
    %v3304 = vsel %vm3275, %v3124, 0
    %v3307 = vsel %vm3275, %v3127, 0
    %v3310 = vsel %vm3275, %v3130, 0
    %v3313 = vsel %vm3275, %v3133, 0
    %v3316 = vsel %vm3275, %v3136, 0
    %v3319 = vsel %vm3275, %v3139, 0
    %v3322 = vsel %vm3275, %v3142, 0
    %vm3324 = vcmask 1043456
    %v3326 = vsel %vm3324, %v3258, 0
    %3328 = vmatprep.subr.bf16.mxu0 0
    %3329 = vmatpush1.bf16.msra.mxu0 %v3242
    %3330 = vmatprep.subr.bf16.mxu0 0
    %3331 = vmatpush1.bf16.msra.mxu0 %v3243
    %3332 = vmatprep.subr.bf16.mxu0 0
    %3333 = vmatpush1.bf16.msra.mxu0 %v3244
    %3334 = vmatprep.subr.bf16.mxu0 0
    %3335 = vmatpush1.bf16.msra.mxu0 %v3245
    %3336 = vmatprep.subr.bf16.mxu0 0
    %3337 = vmatpush1.bf16.msra.mxu0 %v3246
    %3338 = vmatprep.subr.bf16.mxu0 0
    %3339 = vmatpush1.bf16.msra.mxu0 %v3247
    %3340 = vmatprep.subr.bf16.mxu0 0
    %3341 = vmatpush1.bf16.msra.mxu0 %v3248
    %3342 = vmatprep.subr.bf16.mxu0 0
    %3343 = vmatpush1.bf16.msra.mxu0 %v3249
    %3344 = vmatprep.subr.bf16.mxu0 0
    %3345 = vmatpush1.bf16.msra.mxu0 %v3250
    %3346 = vmatprep.subr.bf16.mxu0 0
    %3347 = vmatpush1.bf16.msra.mxu0 %v3251
    %3348 = vmatprep.subr.bf16.mxu0 0
    %3349 = vmatpush1.bf16.msra.mxu0 %v3252
    %3350 = vmatprep.subr.bf16.mxu0 0
    %3351 = vmatpush1.bf16.msra.mxu0 %v3253
    %3352 = vmatprep.subr.bf16.mxu0 0
    %3353 = vmatpush1.bf16.msra.mxu0 %v3254
    %3354 = vmatprep.subr.bf16.mxu0 0
    %3355 = vmatpush1.bf16.msra.mxu0 %v3255
    %3356 = vmatprep.subr.bf16.mxu0 0
    %3357 = vmatpush1.bf16.msra.mxu0 %v3256
    %3358 = vmatprep.subr.bf16.mxu0 0
    %3359 = vmatpush1.bf16.msra.mxu0 %v3257
    %3360 = vmatprep.mubr.bf16.mxu0 %v3096
    %3361 = vmatmul.mubr.bf16.gmra.mrb[0].mxu0 %v3095
    %v3362 = vpop.f32.mrb[0].mxu0
    %v3363 = vadd.f32 0.0, %v3362
    %v3364 = vpop.f32.mrb[0].mxu0
    %v3365 = vpop.f32.mrb[0].mxu0
    %v3366 = vadd.f32 0.0, %v3365
    %v3367 = vpop.f32.mrb[0].mxu0
    %3368 = vmatprep.mubr.bf16.mxu0 %v3099
    %3369 = vmatmul.mubr.bf16.gmra.mrb[0].mxu0 %v3098
    %v3370 = vpop.f32.mrb[0].mxu0
    %v3371 = vadd.f32 0.0, %v3370
    %v3372 = vpop.f32.mrb[0].mxu0
    %v3373 = vpop.f32.mrb[0].mxu0
    %v3374 = vadd.f32 0.0, %v3373
    %v3375 = vpop.f32.mrb[0].mxu0
    %3376 = vmatprep.mubr.bf16.mxu0 %v3102
    %3377 = vmatmul.mubr.bf16.gmra.mrb[0].mxu0 %v3101
    %v3378 = vpop.f32.mrb[0].mxu0
    %v3379 = vadd.f32 0.0, %v3378
    %v3380 = vpop.f32.mrb[0].mxu0
    %v3381 = vpop.f32.mrb[0].mxu0
    %v3382 = vadd.f32 0.0, %v3381
    %v3383 = vpop.f32.mrb[0].mxu0
    %3384 = vmatprep.mubr.bf16.mxu0 %v3105
    %3385 = vmatmul.mubr.bf16.gmra.mrb[0].mxu0 %v3104
    %v3386 = vpop.f32.mrb[0].mxu0
    %v3387 = vadd.f32 0.0, %v3386
    %v3388 = vpop.f32.mrb[0].mxu0
    %v3389 = vpop.f32.mrb[0].mxu0
    %v3390 = vadd.f32 0.0, %v3389
    %v3391 = vpop.f32.mrb[0].mxu0
    %3392 = vmatprep.mubr.bf16.mxu0 %v3108
    %3393 = vmatmul.mubr.bf16.gmra.mrb[0].mxu0 %v3107
    %v3394 = vpop.f32.mrb[0].mxu0
    %v3395 = vadd.f32 0.0, %v3394
    %v3396 = vpop.f32.mrb[0].mxu0
    %v3397 = vpop.f32.mrb[0].mxu0
    %v3398 = vadd.f32 0.0, %v3397
    %v3399 = vpop.f32.mrb[0].mxu0
    %3400 = vmatprep.mubr.bf16.mxu0 %v3111
    %3401 = vmatmul.mubr.bf16.gmra.mrb[0].mxu0 %v3110
    %v3402 = vpop.f32.mrb[0].mxu0
    %v3403 = vadd.f32 0.0, %v3402
    %v3404 = vpop.f32.mrb[0].mxu0
    %v3405 = vpop.f32.mrb[0].mxu0
    %v3406 = vadd.f32 0.0, %v3405
    %v3407 = vpop.f32.mrb[0].mxu0
    %3408 = vmatprep.mubr.bf16.mxu0 %v3114
    %3409 = vmatmul.mubr.bf16.gmra.mrb[0].mxu0 %v3113
    %v3410 = vpop.f32.mrb[0].mxu0
    %v3411 = vadd.f32 0.0, %v3410
    %v3412 = vpop.f32.mrb[0].mxu0
    %v3413 = vpop.f32.mrb[0].mxu0
    %v3414 = vadd.f32 0.0, %v3413
    %v3415 = vpop.f32.mrb[0].mxu0
    %3416 = vmatprep.mubr.bf16.mxu0 %v3117
    %3417 = vmatmul.mubr.bf16.gmra.mrb[0].mxu0 %v3116
    %v3418 = vpop.f32.mrb[0].mxu0
    %v3419 = vadd.f32 0.0, %v3418
    %v3420 = vpop.f32.mrb[0].mxu0
    %v3421 = vpop.f32.mrb[0].mxu0
    %v3422 = vadd.f32 0.0, %v3421
    %v3423 = vpop.f32.mrb[0].mxu0
    %3424 = vmatprep.mubr.bf16.mxu0 %v3120
    %3425 = vmatmul.mubr.bf16.gmra.mrb[0].mxu0 %v3119
    %v3426 = vpop.f32.mrb[0].mxu0
    %v3427 = vadd.f32 0.0, %v3426
    %v3428 = vpop.f32.mrb[0].mxu0
    %v3429 = vpop.f32.mrb[0].mxu0
    %v3430 = vadd.f32 0.0, %v3429
    %v3431 = vpop.f32.mrb[0].mxu0
    %3432 = vmatprep.mubr.bf16.mxu0 %v3123
    %3433 = vmatmul.mubr.bf16.gmra.mrb[0].mxu0 %v3122
    %v3434 = vpop.f32.mrb[0].mxu0
    %v3435 = vadd.f32 0.0, %v3434
    %v3436 = vpop.f32.mrb[0].mxu0
    %v3437 = vpop.f32.mrb[0].mxu0
    %v3438 = vadd.f32 0.0, %v3437
    %v3439 = vpop.f32.mrb[0].mxu0
    %3440 = vmatprep.mubr.bf16.mxu0 %v3126
    %3441 = vmatmul.mubr.bf16.gmra.mrb[0].mxu0 %v3125
    %v3442 = vpop.f32.mrb[0].mxu0
    %v3443 = vadd.f32 0.0, %v3442
    %v3444 = vpop.f32.mrb[0].mxu0
    %v3445 = vpop.f32.mrb[0].mxu0
    %v3446 = vadd.f32 0.0, %v3445
    %v3447 = vpop.f32.mrb[0].mxu0
    %3448 = vmatprep.mubr.bf16.mxu0 %v3129
    %3449 = vmatmul.mubr.bf16.gmra.mrb[0].mxu0 %v3128
    %v3450 = vpop.f32.mrb[0].mxu0
    %v3451 = vadd.f32 0.0, %v3450
    %v3452 = vpop.f32.mrb[0].mxu0
    %v3453 = vpop.f32.mrb[0].mxu0
    %v3454 = vadd.f32 0.0, %v3453
    %v3455 = vpop.f32.mrb[0].mxu0
    %3456 = vmatprep.mubr.bf16.mxu0 %v3132
    %3457 = vmatmul.mubr.bf16.gmra.mrb[0].mxu0 %v3131
    %v3458 = vpop.f32.mrb[0].mxu0
    %v3459 = vadd.f32 0.0, %v3458
    %v3460 = vpop.f32.mrb[0].mxu0
    %v3461 = vpop.f32.mrb[0].mxu0
    %v3462 = vadd.f32 0.0, %v3461
    %v3463 = vpop.f32.mrb[0].mxu0
    %3464 = vmatprep.mubr.bf16.mxu0 %v3135
    %3465 = vmatmul.mubr.bf16.gmra.mrb[0].mxu0 %v3134
    %v3466 = vpop.f32.mrb[0].mxu0
    %v3467 = vadd.f32 0.0, %v3466
    %v3468 = vpop.f32.mrb[0].mxu0
    %v3469 = vpop.f32.mrb[0].mxu0
    %v3470 = vadd.f32 0.0, %v3469
    %v3471 = vpop.f32.mrb[0].mxu0
    %3472 = vmatprep.mubr.bf16.mxu0 %v3138
    %3473 = vmatmul.mubr.bf16.gmra.mrb[0].mxu0 %v3137
    %v3474 = vpop.f32.mrb[0].mxu0
    %v3475 = vadd.f32 0.0, %v3474
    %v3476 = vpop.f32.mrb[0].mxu0
    %v3477 = vpop.f32.mrb[0].mxu0
    %v3478 = vadd.f32 0.0, %v3477
    %v3479 = vpop.f32.mrb[0].mxu0
    %3480 = vmatprep.mubr.bf16.mxu0 %v3141
    %3481 = vmatmul.mubr.bf16.gmra.mrb[0].mxu0 %v3140
    %v3482 = vpop.f32.mrb[0].mxu0
    %v3483 = vadd.f32 0.0, %v3482
    %v3484 = vpop.f32.mrb[0].mxu0
    %v3485 = vpop.f32.mrb[0].mxu0
    %v3486 = vadd.f32 0.0, %v3485
    %v3487 = vpop.f32.mrb[0].mxu0
    %3488 = vdwg.mxu0
    %3489 = vmatprep.subr.bf16.mxu0 0
    %3490 = vmatpush1.bf16.msra.mxu0 %v3326
    %3491 = vmatprep.subr.bf16.mxu0 0
    %3492 = vmatpush1.bf16.msra.mxu0 0
    %3493 = vmatprep.subr.bf16.mxu0 0
    %3494 = vmatpush1.bf16.msra.mxu0 0
    %3495 = vmatprep.subr.bf16.mxu0 0
    %3496 = vmatpush1.bf16.msra.mxu0 0
    %3497 = vmatprep.subr.bf16.mxu0 0
    %3498 = vmatpush1.bf16.msra.mxu0 0
    %3499 = vmatprep.subr.bf16.mxu0 0
    %3500 = vmatpush1.bf16.msra.mxu0 0
    %3501 = vmatprep.subr.bf16.mxu0 0
    %3502 = vmatpush1.bf16.msra.mxu0 0
    %3503 = vmatprep.subr.bf16.mxu0 0
    %3504 = vmatpush1.bf16.msra.mxu0 0
    %3505 = vmatprep.subr.bf16.mxu0 0
    %3506 = vmatpush1.bf16.msra.mxu0 0
    %3507 = vmatprep.subr.bf16.mxu0 0
    %3508 = vmatpush1.bf16.msra.mxu0 0
    %3509 = vmatprep.subr.bf16.mxu0 0
    %3510 = vmatpush1.bf16.msra.mxu0 0
    %3511 = vmatprep.subr.bf16.mxu0 0
    %3512 = vmatpush1.bf16.msra.mxu0 0
    %3513 = vmatprep.subr.bf16.mxu0 0
    %3514 = vmatpush1.bf16.msra.mxu0 0
    %3515 = vmatprep.subr.bf16.mxu0 0
    %3516 = vmatpush1.bf16.msra.mxu0 0
    %3517 = vmatprep.subr.bf16.mxu0 0
    %3518 = vmatpush1.bf16.msra.mxu0 0
    %3519 = vmatprep.subr.bf16.mxu0 0
    %3520 = vmatpush1.bf16.msra.mxu0 0
    %3521 = vmatprep.mubr.bf16.mxu0 0
    %3522 = vmatmul.mubr.bf16.gmra.mrb[0].mxu0 %v3277
    %v3523 = vpop.f32.mrb[0].mxu0
    %v3524 = vadd.f32 %v3363, %v3523
    %v3525 = vpop.f32.mrb[0].mxu0
    %v3526 = vpop.f32.mrb[0].mxu0
    %v3527 = vadd.f32 %v3366, %v3526
    %v3528 = vpop.f32.mrb[0].mxu0
    %3529 = vmatprep.mubr.bf16.mxu0 0
    %3530 = vmatmul.mubr.bf16.gmra.mrb[0].mxu0 %v3280
    %v3531 = vpop.f32.mrb[0].mxu0
    %v3532 = vadd.f32 %v3371, %v3531
    %v3533 = vpop.f32.mrb[0].mxu0
    %v3534 = vpop.f32.mrb[0].mxu0
    %v3535 = vadd.f32 %v3374, %v3534
    %v3536 = vpop.f32.mrb[0].mxu0
    %3537 = vmatprep.mubr.bf16.mxu0 0
    %3538 = vmatmul.mubr.bf16.gmra.mrb[0].mxu0 %v3283
    %v3539 = vpop.f32.mrb[0].mxu0
    %v3540 = vadd.f32 %v3379, %v3539
    %v3541 = vpop.f32.mrb[0].mxu0
    %v3542 = vpop.f32.mrb[0].mxu0
    %v3543 = vadd.f32 %v3382, %v3542
    %v3544 = vpop.f32.mrb[0].mxu0
    %3545 = vmatprep.mubr.bf16.mxu0 0
    %3546 = vmatmul.mubr.bf16.gmra.mrb[0].mxu0 %v3286
    %v3547 = vpop.f32.mrb[0].mxu0
    %v3548 = vadd.f32 %v3387, %v3547
    %v3549 = vpop.f32.mrb[0].mxu0
    %v3550 = vpop.f32.mrb[0].mxu0
    %v3551 = vadd.f32 %v3390, %v3550
    %v3552 = vpop.f32.mrb[0].mxu0
    %3553 = vmatprep.mubr.bf16.mxu0 0
    %3554 = vmatmul.mubr.bf16.gmra.mrb[0].mxu0 %v3289
    %v3555 = vpop.f32.mrb[0].mxu0
    %v3556 = vadd.f32 %v3395, %v3555
    %v3557 = vpop.f32.mrb[0].mxu0
    %v3558 = vpop.f32.mrb[0].mxu0
    %v3559 = vadd.f32 %v3398, %v3558
    %v3560 = vpop.f32.mrb[0].mxu0
    %3561 = vmatprep.mubr.bf16.mxu0 0
    %3562 = vmatmul.mubr.bf16.gmra.mrb[0].mxu0 %v3292
    %v3563 = vpop.f32.mrb[0].mxu0
    %v3564 = vadd.f32 %v3403, %v3563
    %v3565 = vpop.f32.mrb[0].mxu0
    %v3566 = vpop.f32.mrb[0].mxu0
    %v3567 = vadd.f32 %v3406, %v3566
    %v3568 = vpop.f32.mrb[0].mxu0
    %3569 = vmatprep.mubr.bf16.mxu0 0
    %3570 = vmatmul.mubr.bf16.gmra.mrb[0].mxu0 %v3295
    %v3571 = vpop.f32.mrb[0].mxu0
    %v3572 = vadd.f32 %v3411, %v3571
    %v3573 = vpop.f32.mrb[0].mxu0
    %v3574 = vpop.f32.mrb[0].mxu0
    %v3575 = vadd.f32 %v3414, %v3574
    %v3576 = vpop.f32.mrb[0].mxu0
    %3577 = vmatprep.mubr.bf16.mxu0 0
    %3578 = vmatmul.mubr.bf16.gmra.mrb[0].mxu0 %v3298
    %v3579 = vpop.f32.mrb[0].mxu0
    %v3580 = vadd.f32 %v3419, %v3579
    %v3581 = vpop.f32.mrb[0].mxu0
    %v3582 = vpop.f32.mrb[0].mxu0
    %v3583 = vadd.f32 %v3422, %v3582
    %v3584 = vpop.f32.mrb[0].mxu0
    %3585 = vmatprep.mubr.bf16.mxu0 0
    %3586 = vmatmul.mubr.bf16.gmra.mrb[0].mxu0 %v3301
    %v3587 = vpop.f32.mrb[0].mxu0
    %v3588 = vadd.f32 %v3427, %v3587
    %v3589 = vpop.f32.mrb[0].mxu0
    %v3590 = vpop.f32.mrb[0].mxu0
    %v3591 = vadd.f32 %v3430, %v3590
    %v3592 = vpop.f32.mrb[0].mxu0
    %3593 = vmatprep.mubr.bf16.mxu0 0
    %3594 = vmatmul.mubr.bf16.gmra.mrb[0].mxu0 %v3304
    %v3595 = vpop.f32.mrb[0].mxu0
    %v3596 = vadd.f32 %v3435, %v3595
    %v3597 = vpop.f32.mrb[0].mxu0
    %v3598 = vpop.f32.mrb[0].mxu0
    %v3599 = vadd.f32 %v3438, %v3598
    %v3600 = vpop.f32.mrb[0].mxu0
    %3601 = vmatprep.mubr.bf16.mxu0 0
    %3602 = vmatmul.mubr.bf16.gmra.mrb[0].mxu0 %v3307
    %v3603 = vpop.f32.mrb[0].mxu0
    %v3604 = vadd.f32 %v3443, %v3603
    %v3605 = vpop.f32.mrb[0].mxu0
    %v3606 = vpop.f32.mrb[0].mxu0
    %v3607 = vadd.f32 %v3446, %v3606
    %v3608 = vpop.f32.mrb[0].mxu0
    %3609 = vmatprep.mubr.bf16.mxu0 0
    %3610 = vmatmul.mubr.bf16.gmra.mrb[0].mxu0 %v3310
    %v3611 = vpop.f32.mrb[0].mxu0
    %v3612 = vadd.f32 %v3451, %v3611
    %v3613 = vpop.f32.mrb[0].mxu0
    %v3614 = vpop.f32.mrb[0].mxu0
    %v3615 = vadd.f32 %v3454, %v3614
    %v3616 = vpop.f32.mrb[0].mxu0
    %3617 = vmatprep.mubr.bf16.mxu0 0
    %3618 = vmatmul.mubr.bf16.gmra.mrb[0].mxu0 %v3313
    %v3619 = vpop.f32.mrb[0].mxu0
    %v3620 = vadd.f32 %v3459, %v3619
    %v3621 = vpop.f32.mrb[0].mxu0
    %v3622 = vpop.f32.mrb[0].mxu0
    %v3623 = vadd.f32 %v3462, %v3622
    %v3624 = vpop.f32.mrb[0].mxu0
    %3625 = vmatprep.mubr.bf16.mxu0 0
    %3626 = vmatmul.mubr.bf16.gmra.mrb[0].mxu0 %v3316
    %v3627 = vpop.f32.mrb[0].mxu0
    %v3628 = vadd.f32 %v3467, %v3627
    %v3629 = vpop.f32.mrb[0].mxu0
    %v3630 = vpop.f32.mrb[0].mxu0
    %v3631 = vadd.f32 %v3470, %v3630
    %v3632 = vpop.f32.mrb[0].mxu0
    %3633 = vmatprep.mubr.bf16.mxu0 0
    %3634 = vmatmul.mubr.bf16.gmra.mrb[0].mxu0 %v3319
    %v3635 = vpop.f32.mrb[0].mxu0
    %v3636 = vadd.f32 %v3475, %v3635
    %v3637 = vpop.f32.mrb[0].mxu0
    %v3638 = vpop.f32.mrb[0].mxu0
    %v3639 = vadd.f32 %v3478, %v3638
    %v3640 = vpop.f32.mrb[0].mxu0
    %3641 = vmatprep.mubr.bf16.mxu0 0
    %3642 = vmatmul.mubr.bf16.gmra.mrb[0].mxu0 %v3322
    %v3643 = vpop.f32.mrb[0].mxu0
    %v3644 = vadd.f32 %v3483, %v3643
    %v3645 = vpop.f32.mrb[0].mxu0
    %v3646 = vpop.f32.mrb[0].mxu0
    %v3647 = vadd.f32 %v3486, %v3646
    %v3648 = vpop.f32.mrb[0].mxu0
    %3649 = vdwg.mxu0
    %v3650 = vld [vmem:[%s2] sm:$0xff]
    %v3651 = vld [vmem:[%s2 + $0x8] sm:$0xff]
    %v3652 = vld [vmem:[%s2 + $0x10] sm:$0xff]
    %v3653 = vld [vmem:[%s2 + $0x18] sm:$0xff]
    %v3654 = vld [vmem:[%s2 + $0x20] sm:$0xff]
    %v3655 = vld [vmem:[%s2 + $0x28] sm:$0xff]
    %v3656 = vld [vmem:[%s2 + $0x30] sm:$0xff]
    %v3657 = vld [vmem:[%s2 + $0x38] sm:$0xff]
    %v3658 = vpack.c.bf16 %v3527, %v3524
    %v3659 = vpack.c.bf16 %v3535, %v3532
    %v3660 = vpack.c.bf16 %v3543, %v3540
    %v3661 = vpack.c.bf16 %v3551, %v3548
    %v3662 = vpack.c.bf16 %v3559, %v3556
    %v3663 = vpack.c.bf16 %v3567, %v3564
    %v3664 = vpack.c.bf16 %v3575, %v3572
    %v3665 = vpack.c.bf16 %v3583, %v3580
    %v3666 = vpack.c.bf16 %v3591, %v3588
    %v3667 = vpack.c.bf16 %v3599, %v3596
    %v3668 = vpack.c.bf16 %v3607, %v3604
    %v3669 = vpack.c.bf16 %v3615, %v3612
    %v3670 = vpack.c.bf16 %v3623, %v3620
    %v3671 = vpack.c.bf16 %v3631, %v3628
    %v3672 = vpack.c.bf16 %v3639, %v3636
    %v3673 = vpack.c.bf16 %v3647, %v3644
    %v3682 = vunpack.c.l.b16 %v3650
    %v3683 = vunpack.c.h.b16 %v3650
    %v3684 = vunpack.c.l.b16 %v3651
    %v3685 = vunpack.c.h.b16 %v3651
    %v3686 = vunpack.c.l.b16 %v3652
    %v3687 = vunpack.c.h.b16 %v3652
    %v3688 = vunpack.c.l.b16 %v3653
    %v3689 = vunpack.c.h.b16 %v3653
    %v3690 = vunpack.c.l.b16 %v3654
    %v3691 = vunpack.c.h.b16 %v3654
    %v3692 = vunpack.c.l.b16 %v3655
    %v3693 = vunpack.c.h.b16 %v3655
    %v3694 = vunpack.c.l.b16 %v3656
    %v3695 = vunpack.c.h.b16 %v3656
    %v3696 = vunpack.c.l.b16 %v3657
    %v3697 = vunpack.c.h.b16 %v3657
    %v3698 = vpack.c.b16 %v3684, %v3682
    %v3699 = vpack.c.b16 %v3685, %v3683
    %v3700 = vpack.c.b16 %v3688, %v3686
    %v3701 = vpack.c.b16 %v3689, %v3687
    %v3702 = vpack.c.b16 %v3692, %v3690
    %v3703 = vpack.c.b16 %v3693, %v3691
    %v3704 = vpack.c.b16 %v3696, %v3694
    %v3705 = vpack.c.b16 %v3697, %v3695
    %3714 = vmatprep.subr.bf16.mxu0 0
    %3715 = vmatpush1.bf16.msra.mxu0 %v3658
    %3716 = vmatprep.subr.bf16.mxu0 0
    %3717 = vmatpush1.bf16.msra.mxu0 %v3659
    %3718 = vmatprep.subr.bf16.mxu0 0
    %3719 = vmatpush1.bf16.msra.mxu0 %v3660
    %3720 = vmatprep.subr.bf16.mxu0 0
    %3721 = vmatpush1.bf16.msra.mxu0 %v3661
    %3722 = vmatprep.subr.bf16.mxu0 0
    %3723 = vmatpush1.bf16.msra.mxu0 %v3662
    %3724 = vmatprep.subr.bf16.mxu0 0
    %3725 = vmatpush1.bf16.msra.mxu0 %v3663
    %3726 = vmatprep.subr.bf16.mxu0 0
    %3727 = vmatpush1.bf16.msra.mxu0 %v3664
    %3728 = vmatprep.subr.bf16.mxu0 0
    %3729 = vmatpush1.bf16.msra.mxu0 %v3665
    %3730 = vmatprep.subr.bf16.mxu0 0
    %3731 = vmatpush1.bf16.msra.mxu0 %v3666
    %3732 = vmatprep.subr.bf16.mxu0 0
    %3733 = vmatpush1.bf16.msra.mxu0 %v3667
    %3734 = vmatprep.subr.bf16.mxu0 0
    %3735 = vmatpush1.bf16.msra.mxu0 %v3668
    %3736 = vmatprep.subr.bf16.mxu0 0
    %3737 = vmatpush1.bf16.msra.mxu0 %v3669
    %3738 = vmatprep.subr.bf16.mxu0 0
    %3739 = vmatpush1.bf16.msra.mxu0 %v3670
    %3740 = vmatprep.subr.bf16.mxu0 0
    %3741 = vmatpush1.bf16.msra.mxu0 %v3671
    %3742 = vmatprep.subr.bf16.mxu0 0
    %3743 = vmatpush1.bf16.msra.mxu0 %v3672
    %3744 = vmatprep.subr.bf16.mxu0 0
    %3745 = vmatpush1.bf16.msra.mxu0 %v3673
    %3746 = vmatprep.mubr.bf16.mxu0 %v3699
    %3747 = vmatmul.mubr.bf16.gmra.mrb[0].mxu0 %v3698
    %v3748 = vpop.f32.mrb[0].mxu0
    %v3749 = vadd.f32 0.0, %v3748
    %v3750 = vpop.f32.mrb[0].mxu0
    %v3751 = vpop.f32.mrb[0].mxu0
    %v3752 = vadd.f32 0.0, %v3751
    %v3753 = vpop.f32.mrb[0].mxu0
    %3754 = vmatprep.mubr.bf16.mxu0 %v3701
    %3755 = vmatmul.mubr.bf16.gmra.mrb[0].mxu0 %v3700
    %v3756 = vpop.f32.mrb[0].mxu0
    %v3757 = vadd.f32 0.0, %v3756
    %v3758 = vpop.f32.mrb[0].mxu0
    %v3759 = vpop.f32.mrb[0].mxu0
    %v3760 = vadd.f32 0.0, %v3759
    %v3761 = vpop.f32.mrb[0].mxu0
    %3762 = vmatprep.mubr.bf16.mxu0 %v3703
    %3763 = vmatmul.mubr.bf16.gmra.mrb[0].mxu0 %v3702
    %v3764 = vpop.f32.mrb[0].mxu0
    %v3765 = vadd.f32 0.0, %v3764
    %v3766 = vpop.f32.mrb[0].mxu0
    %v3767 = vpop.f32.mrb[0].mxu0
    %v3768 = vadd.f32 0.0, %v3767
    %v3769 = vpop.f32.mrb[0].mxu0
    %3770 = vmatprep.mubr.bf16.mxu0 %v3705
    %3771 = vmatmul.mubr.bf16.gmra.mrb[0].mxu0 %v3704
    %v3772 = vpop.f32.mrb[0].mxu0
    %v3773 = vadd.f32 0.0, %v3772
    %v3774 = vpop.f32.mrb[0].mxu0
    %v3775 = vpop.f32.mrb[0].mxu0
    %v3776 = vadd.f32 0.0, %v3775
    %v3777 = vpop.f32.mrb[0].mxu0
    %3778 = vdwg.mxu0
    %3779 = vst.msk [vmem:[%s10] sm:$0xff] %vm436, %v3749
    %3780 = vst.msk [vmem:[%s10 + $0x8] sm:$0xff] %vm436, %v3752
    %3781 = vst.msk [vmem:[%s10 + $0x10] sm:$0xff] %vm436, %v3757
    %3782 = vst.msk [vmem:[%s10 + $0x18] sm:$0xff] %vm436, %v3760
    %3783 = vst.msk [vmem:[%s10 + $0x20] sm:$0xff] %vm436, %v3765
    %3784 = vst.msk [vmem:[%s10 + $0x28] sm:$0xff] %vm436, %v3768
    %3785 = vst.msk [vmem:[%s10 + $0x30] sm:$0xff] %vm436, %v3773
    %3786 = vst.msk [vmem:[%s10 + $0x38] sm:$0xff] %vm436, %v3776
    %s3787 = smul.u32 0, 64
    %v3788 = vlaneseq
    %v3789 = vshrl.u32 %v3788, 7
    %v3790 = vadd.s32 %v3789, 8
    %v3791 = vadd.s32 %v3789, 16
    %v3792 = vadd.s32 %v3789, 24
    %v3793 = vadd.s32 %v3789, 32
    %v3794 = vadd.s32 %v3789, 40
    %v3795 = vadd.s32 %v3789, 48
    %v3796 = vadd.s32 %v3789, 56
    %v3797 = vstv %s3787
    %v3798 = vadd.s32 %v3789, %v3797
    %v3799 = vadd.s32 %v3790, %v3797
    %v3800 = vadd.s32 %v3791, %v3797
    %v3801 = vadd.s32 %v3792, %v3797
    %v3802 = vadd.s32 %v3793, %v3797
    %v3803 = vadd.s32 %v3794, %v3797
    %v3804 = vadd.s32 %v3795, %v3797
    %v3805 = vadd.s32 %v3796, %v3797
    %vm3806 = vcmp.lt.s32.totalorder %v3798, 64
    %vm3807 = vcmp.lt.s32.totalorder %v3799, 64
    %vm3808 = vcmp.lt.s32.totalorder %v3800, 64
    %vm3809 = vcmp.lt.s32.totalorder %v3801, 64
    %vm3810 = vcmp.lt.s32.totalorder %v3802, 64
    %vm3811 = vcmp.lt.s32.totalorder %v3803, 64
    %vm3812 = vcmp.lt.s32.totalorder %v3804, 64
    %vm3813 = vcmp.lt.s32.totalorder %v3805, 64
    %v3814 = vsel %vm3806, 1, 0
    %v3815 = vsel %vm3807, 1, 0
    %v3816 = vsel %vm3808, 1, 0
    %v3817 = vsel %vm3809, 1, 0
    %v3818 = vsel %vm3810, 1, 0
    %v3819 = vsel %vm3811, 1, 0
    %v3820 = vsel %vm3812, 1, 0
    %v3821 = vsel %vm3813, 1, 0
    %vm3822 = vcmp.eq.s32.totalorder %v3814, 1
    %vm3823 = vcmp.eq.s32.totalorder %v3815, 1
    %vm3824 = vcmp.eq.s32.totalorder %v3816, 1
    %vm3825 = vcmp.eq.s32.totalorder %v3817, 1
    %vm3826 = vcmp.eq.s32.totalorder %v3818, 1
    %vm3827 = vcmp.eq.s32.totalorder %v3819, 1
    %vm3828 = vcmp.eq.s32.totalorder %v3820, 1
    %vm3829 = vcmp.eq.s32.totalorder %v3821, 1
    %v3830 = vsel %vm3822, %v3749, 0.0
    %v3831 = vsel %vm3823, %v3752, 0.0
    %v3832 = vsel %vm3824, %v3757, 0.0
    %v3833 = vsel %vm3825, %v3760, 0.0
    %v3834 = vsel %vm3826, %v3765, 0.0
    %v3835 = vsel %vm3827, %v3768, 0.0
    %v3836 = vsel %vm3828, %v3773, 0.0
    %v3837 = vsel %vm3829, %v3776, 0.0
    %v3838 = vsel %vm436, %v3830, 0.0
    %v3839 = vsel %vm436, %v3831, 0.0
    %v3840 = vadd.f32 %v3838, %v3839
    %v3841 = vsel %vm436, %v3832, 0.0
    %v3842 = vadd.f32 %v3840, %v3841
    %v3843 = vsel %vm436, %v3833, 0.0
    %v3844 = vadd.f32 %v3842, %v3843
    %v3845 = vsel %vm436, %v3834, 0.0
    %v3846 = vadd.f32 %v3844, %v3845
    %v3847 = vsel %vm436, %v3835, 0.0
    %v3848 = vadd.f32 %v3846, %v3847
    %v3849 = vsel %vm436, %v3836, 0.0
    %v3850 = vadd.f32 %v3848, %v3849
    %v3851 = vsel %vm436, %v3837, 0.0
    %v3852 = vadd.f32 %v3850, %v3851
    %v3853 = vrot.slane %v3852, 4
    %v3854 = vadd.f32 %v3852, %v3853
    %v3855 = vrot.slane %v3854, 2
    %v3856 = vadd.f32 %v3854, %v3855
    %v3857 = vrot.slane %v3856, 1
    %v3858 = vadd.f32 %v3856, %v3857
    %v3859 = vmul.f32 %v3830, %v3830
    %v3860 = vmul.f32 %v3831, %v3831
    %v3861 = vmul.f32 %v3832, %v3832
    %v3862 = vmul.f32 %v3833, %v3833
    %v3863 = vmul.f32 %v3834, %v3834
    %v3864 = vmul.f32 %v3835, %v3835
    %v3865 = vmul.f32 %v3836, %v3836
    %v3866 = vmul.f32 %v3837, %v3837
    %v3867 = vsel %vm436, %v3859, 0.0
    %v3868 = vsel %vm436, %v3860, 0.0
    %v3869 = vadd.f32 %v3867, %v3868
    %v3870 = vsel %vm436, %v3861, 0.0
    %v3871 = vadd.f32 %v3869, %v3870
    %v3872 = vsel %vm436, %v3862, 0.0
    %v3873 = vadd.f32 %v3871, %v3872
    %v3874 = vsel %vm436, %v3863, 0.0
    %v3875 = vadd.f32 %v3873, %v3874
    %v3876 = vsel %vm436, %v3864, 0.0
    %v3877 = vadd.f32 %v3875, %v3876
    %v3878 = vsel %vm436, %v3865, 0.0
    %v3879 = vadd.f32 %v3877, %v3878
    %v3880 = vsel %vm436, %v3866, 0.0
    %v3881 = vadd.f32 %v3879, %v3880
    %v3882 = vrot.slane %v3881, 4
    %v3883 = vadd.f32 %v3881, %v3882
    %v3884 = vrot.slane %v3883, 2
    %v3885 = vadd.f32 %v3883, %v3884
    %v3886 = vrot.slane %v3885, 1
    %v3887 = vadd.f32 %v3885, %v3886
    %vm3888 = vcmask 1040384
    %v3889 = vsel %vm3888, %v3858, %v3887
    %vm3890 = vcmask 1041408
    %v3891 = vsel %vm3890, %v3889, 0.0
    %3892 = vst.msk [vmem:[#allocation2] sm:$0xff] %vm436, %v3891
    // Predicated region
    $region42: #{tpu_custom_call.1} parent=1 // pred_check
      _
    $region43: #{tpu_custom_call.1} parent=1 // pred_check_branch
      %3894 = sbr.rel (0) target = $region45
    $region44: #{tpu_custom_call.1} parent=1 // pred_region
      _
    $region45: #{tpu_custom_call.1} parent=1 // pred_fallthru
      _
    // Predicated region
    $region46: #{tpu_custom_call.1} parent=1 // pred_check
      _
    $region47: #{tpu_custom_call.1} parent=1 // pred_check_branch
      %3896 = sbr.rel (0) target = $region49
    $region48: #{tpu_custom_call.1} parent=1 // pred_region
      %s3898 = ssub.s32 128, 128
      %3899 = vsyncadd [#allocation3], %s3898
      %s3901 = sshll.u32 [#allocation2], 4
      %s3902 = int_to_ptr.vmem [resolvable:$true] %s3901
      %3904 = dma.vmem_to_hbm [thread:$0]  %s3902, 128, %s11, [#allocation3]
    $region49: #{tpu_custom_call.1} parent=1 // pred_fallthru
      _
    // Predicated region
    $region50: #{tpu_custom_call.1} parent=1 // pred_check
      _
    $region51: #{tpu_custom_call.1} parent=1 // pred_check_branch
      %3906 = sbr.rel (0) target = $region53
    $region52: #{tpu_custom_call.1} parent=1 // pred_region
      _
    $region53: #{tpu_custom_call.1} parent=1 // pred_fallthru
      _
    // Predicated region
    $region54: #{tpu_custom_call.1} parent=1 // pred_check
      _
    $region55: #{tpu_custom_call.1} parent=1 // pred_check_branch
      %3908 = sbr.rel (0) target = $region57
    $region56: #{tpu_custom_call.1} parent=1 // pred_region
      %3909 = dma.done [#allocation3], 128
    $region57: #{tpu_custom_call.1} parent=1 // pred_fallthru
      _
    %3910 = vsyncpa [#allocation3], 1

</llo_original>
